<compile_context>
chip_gen: v7x
topology: tpu7x:2x2x1
jax: 0.10.0
libtpu: 0.0.40
codegen_flags: <defaults>
</compile_context>

<pallas_src>
import functools
import math

import jax
import jax.numpy as jnp
from jax.experimental import pallas as pl
from jax.experimental.pallas import tpu as pltpu

EMBED_DIM = 256
NUM_HEADS = 8
FF_DIM = EMBED_DIM * 4
LN_EPS = 1e-5


# ---------------------------------------------------------------------------
# Shared math helper (used inside the kernel and by the pure-JAX reference)
# ---------------------------------------------------------------------------
def _layernorm(x, gamma, beta):
    mean = jnp.mean(x, axis=-1, keepdims=True)
    c = x - mean
    var = jnp.mean(c * c, axis=-1, keepdims=True)
    return c * jax.lax.rsqrt(var + LN_EPS) * gamma + beta


# ---------------------------------------------------------------------------
# Fully fused transformer-block kernel (one batch per grid step)
# ---------------------------------------------------------------------------
def _block_kernel(x_ref, wqkv_ref, bqkv_ref, wo_ref, bo_ref, g1_ref, be1_ref,
                  w1_ref, b1_ref, w2_ref, b2_ref, g2_ref, be2_ref, out_ref,
                  *, num_heads):
    x = x_ref[0]                                   # (S, E) f32
    s_len, e = x.shape
    dh = e // num_heads
    scale = 1.0 / math.sqrt(dh)

    # ---- fused QKV projection: (S,E) x (E,3E) on the MXU ----
    qkv = jnp.dot(x.astype(jnp.bfloat16), wqkv_ref[...],
                  preferred_element_type=jnp.float32) + bqkv_ref[...]   # (S, 3E) f32
    q = qkv[:, :e]            # 128-lane-aligned slices
    k = qkv[:, e:2 * e]
    v = qkv[:, 2 * e:]

    # ---- multi-head attention: all heads of this batch, statically unrolled ----
    head_outs = []
    for h in range(num_heads):
        sl = slice(h * dh, (h + 1) * dh)
        qh = q[:, sl].astype(jnp.bfloat16)         # (S, Dh)
        kh = k[:, sl].astype(jnp.bfloat16)
        vh = v[:, sl].astype(jnp.bfloat16)
        sc = jnp.einsum("qd,kd->qk", qh, kh,
                        preferred_element_type=jnp.float32) * scale     # (S, S)
        m = jnp.max(sc, axis=-1, keepdims=True)
        p = jnp.exp(sc - m)
        p = p / jnp.sum(p, axis=-1, keepdims=True)                      # exact softmax
        head_outs.append(jnp.dot(p.astype(jnp.bfloat16), vh,
                                 preferred_element_type=jnp.float32))   # (S, Dh)
    attn = jnp.concatenate(head_outs, axis=-1)                          # (S, E) lane-dense

    # ---- out projection + residual + LayerNorm1 (fused epilogue) ----
    y = jnp.dot(attn.astype(jnp.bfloat16), wo_ref[...],
                preferred_element_type=jnp.float32) + bo_ref[...]
    x1 = _layernorm(x + y, g1_ref[...], be1_ref[...])                   # (S, E) f32

    # ---- FFN (Linear 256->1024, ReLU, Linear 1024->256) + residual + LayerNorm2 ----
    h1 = jnp.dot(x1.astype(jnp.bfloat16), w1_ref[...],
                 preferred_element_type=jnp.float32) + b1_ref[...]      # (S, 4E)
    h1 = jnp.maximum(h1, 0.0)
    y2 = jnp.dot(h1.astype(jnp.bfloat16), w2_ref[...],
                 preferred_element_type=jnp.float32) + b2_ref[...]
    out_ref[0] = _layernorm(x1 + y2, g2_ref[...], be2_ref[...]).astype(out_ref.dtype)


def _cost_estimate(b, s, e, f, h):
    dh = e // h
    flops = b * (2 * s * e * 3 * e            # qkv
                 + h * 4 * s * s * dh          # scores + PV
                 + 2 * s * e * e               # out proj
                 + 4 * s * e * f)              # ffn
    trans = b * (h * s * s + 2 * s)            # exp + rsqrt
    bytes_accessed = (2 * b * s * e * 4                       # x in + out
                      + (3 * e * e + e * e + 2 * e * f) * 2   # bf16 weights
                      + (3 * e + f + 6 * e) * 4)              # biases + LN params
    return pl.CostEstimate(flops=int(flops), transcendentals=int(trans),
                           bytes_accessed=int(bytes_accessed))


def transformer_block(x, params, num_heads=NUM_HEADS):
    b, s, e = x.shape
    p = prepare_weights(params)
    f = p["w1"].shape[1]

    def pinned(shape):
        return pl.BlockSpec(shape, lambda i: (0, 0))

    kernel = functools.partial(_block_kernel, num_heads=num_heads)
    out = pl.pallas_call(
        kernel,
        out_shape=jax.ShapeDtypeStruct((b, s, e), jnp.float32),
        grid=(b,),
        in_specs=[
            pl.BlockSpec((1, s, e), lambda i: (i, 0, 0)),   # x (per-batch tile)
            pinned((e, 3 * e)), pinned((1, 3 * e)),          # w_qkv, b_qkv
            pinned((e, e)), pinned((1, e)),                  # w_o, b_o
            pinned((1, e)), pinned((1, e)),                  # ln1 gamma, beta
            pinned((e, f)), pinned((1, f)),                  # w1, b1
            pinned((f, e)), pinned((1, e)),                  # w2, b2
            pinned((1, e)), pinned((1, e)),                  # ln2 gamma, beta
        ],
        out_specs=pl.BlockSpec((1, s, e), lambda i: (i, 0, 0)),
        compiler_params=pltpu.CompilerParams(
            dimension_semantics=("parallel",),
            vmem_limit_bytes=24 * 1024 * 1024,
        ),
        cost_estimate=_cost_estimate(b, s, e, f, num_heads),
    )(x.astype(jnp.float32), p["w_qkv"], p["b_qkv"], p["w_o"], p["b_o"],
      p["ln1_g"], p["ln1_b"], p["w1"], p["b1"], p["w2"], p["b2"],
      p["ln2_g"], p["ln2_b"])
    return out


# ---------------------------------------------------------------------------
# Parameter init (PyTorch-layout weights) + layout preparation
# ---------------------------------------------------------------------------
def init_params(key, embed_dim=EMBED_DIM, ff_dim=FF_DIM):
    keys = jax.random.split(key, 6)
    sd = 1.0 / math.sqrt(embed_dim)
    return {
        "in_proj_w": sd * jax.random.normal(keys[0], (3 * embed_dim, embed_dim), jnp.float32),
        "in_proj_b": jnp.zeros((3 * embed_dim,), jnp.float32),
        "out_proj_w": sd * jax.random.normal(keys[1], (embed_dim, embed_dim), jnp.float32),
        "out_proj_b": jnp.zeros((embed_dim,), jnp.float32),
        "ln1_g": jnp.ones((embed_dim,), jnp.float32),
        "ln1_b": jnp.zeros((embed_dim,), jnp.float32),
        "ffn_w1": sd * jax.random.normal(keys[2], (ff_dim, embed_dim), jnp.float32),
        "ffn_b1": 0.01 * jax.random.normal(keys[3], (ff_dim,), jnp.float32),
        "ffn_w2": (1.0 / math.sqrt(ff_dim)) * jax.random.normal(keys[4], (embed_dim, ff_dim), jnp.float32),
        "ffn_b2": 0.01 * jax.random.normal(keys[5], (embed_dim,), jnp.float32),
        "ln2_g": jnp.ones((embed_dim,), jnp.float32),
        "ln2_b": jnp.zeros((embed_dim,), jnp.float32),
    }


def prepare_weights(params):
    # PyTorch Linear stores (out, in); transpose once and cast MXU operands to bf16.
    return {
        "w_qkv": params["in_proj_w"].T.astype(jnp.bfloat16),
        "b_qkv": params["in_proj_b"].reshape(1, -1).astype(jnp.float32),
        "w_o": params["out_proj_w"].T.astype(jnp.bfloat16),
        "b_o": params["out_proj_b"].reshape(1, -1).astype(jnp.float32),
        "ln1_g": params["ln1_g"].reshape(1, -1).astype(jnp.float32),
        "ln1_b": params["ln1_b"].reshape(1, -1).astype(jnp.float32),
        "w1": params["ffn_w1"].T.astype(jnp.bfloat16),
        "b1": params["ffn_b1"].reshape(1, -1).astype(jnp.float32),
        "w2": params["ffn_w2"].T.astype(jnp.bfloat16),
        "b2": params["ffn_b2"].reshape(1, -1).astype(jnp.float32),
        "ln2_g": params["ln2_g"].reshape(1, -1).astype(jnp.float32),
        "ln2_b": params["ln2_b"].reshape(1, -1).astype(jnp.float32),
    }


# ---------------------------------------------------------------------------
# Pure-JAX reference (same bf16 MXU-operand casts as the kernel)
# ---------------------------------------------------------------------------
def reference_block(x, params, num_heads=NUM_HEADS):
    b, s, e = x.shape
    dh = e // num_heads
    p = prepare_weights(params)
    x3 = x.astype(jnp.float32)

    qkv = jnp.einsum("bse,ef->bsf", x3.astype(jnp.bfloat16), p["w_qkv"],
                     preferred_element_type=jnp.float32) + p["b_qkv"]
    q, k, v = jnp.split(qkv, 3, axis=-1)

    def heads(t):
        return t.reshape(b, s, num_heads, dh).transpose(0, 2, 1, 3).astype(jnp.bfloat16)

    qh, kh, vh = heads(q), heads(k), heads(v)
    sc = jnp.einsum("bhqd,bhkd->bhqk", qh, kh,
                    preferred_element_type=jnp.float32) * (1.0 / math.sqrt(dh))
    pr = jax.nn.softmax(sc, axis=-1)
    ao = jnp.einsum("bhqk,bhkd->bhqd", pr.astype(jnp.bfloat16), vh,
                    preferred_element_type=jnp.float32)
    attn = ao.transpose(0, 2, 1, 3).reshape(b, s, e)

    y = jnp.einsum("bse,ef->bsf", attn.astype(jnp.bfloat16), p["w_o"],
                   preferred_element_type=jnp.float32) + p["b_o"]
    x1 = _layernorm(x3 + y, p["ln1_g"], p["ln1_b"])

    h1 = jnp.maximum(jnp.einsum("bse,ef->bsf", x1.astype(jnp.bfloat16), p["w1"],
                                preferred_element_type=jnp.float32) + p["b1"], 0.0)
    y2 = jnp.einsum("bsf,fe->bse", h1.astype(jnp.bfloat16), p["w2"],
                    preferred_element_type=jnp.float32) + p["b2"]
    return _layernorm(x1 + y2, p["ln2_g"], p["ln2_b"])


if __name__ == "__main__":
    B, S = 2, 16
    key = jax.random.PRNGKey(0)
    kx, kp = jax.random.split(key)
    x = jax.random.normal(kx, (B, S, EMBED_DIM), jnp.float32)
    params = init_params(kp)

    fwd = jax.jit(transformer_block)
    out = jax.block_until_ready(fwd(x, params))
    assert out.shape == (B, S, EMBED_DIM), out.shape

    ref = jax.block_until_ready(jax.jit(reference_block)(x, params))
    max_err = float(jnp.max(jnp.abs(out - ref)))
    if max_err > 2e-2:
        raise RuntimeError(f"mismatch vs reference: max_err={max_err}")

    print("KERNEL_OK")
</pallas_src>

<mosaic_0001>
module attributes {stable_mosaic.version = 11 : i64} {
  func.func @_block_kernel(%arg0: i32, %arg1: memref<1x16x256xf32, #tpu.memory_space<vmem>>, %arg2: memref<256x768xbf16, #tpu.memory_space<vmem>>, %arg3: memref<1x768xf32, #tpu.memory_space<vmem>>, %arg4: memref<256x256xbf16, #tpu.memory_space<vmem>>, %arg5: memref<1x256xf32, #tpu.memory_space<vmem>>, %arg6: memref<1x256xf32, #tpu.memory_space<vmem>>, %arg7: memref<1x256xf32, #tpu.memory_space<vmem>>, %arg8: memref<256x1024xbf16, #tpu.memory_space<vmem>>, %arg9: memref<1x1024xf32, #tpu.memory_space<vmem>>, %arg10: memref<1024x256xbf16, #tpu.memory_space<vmem>>, %arg11: memref<1x256xf32, #tpu.memory_space<vmem>>, %arg12: memref<1x256xf32, #tpu.memory_space<vmem>>, %arg13: memref<1x256xf32, #tpu.memory_space<vmem>>, %arg14: memref<1x16x256xf32, #tpu.memory_space<vmem>>) attributes {dimension_semantics = [#tpu.dimension_semantics<parallel>], iteration_bounds = array<i64: 2>, scalar_prefetch = 0 : i64, scratch_operands = 0 : i64, tpu.core_type = #tpu.core_type<tc>, window_params = [{transform_indices = @transform_0, window_bounds = array<i64: 1, 16, 256>}, {pipeline_mode = #tpu.pipeline_mode<synchronous>, transform_indices = @transform_1, window_bounds = array<i64: 256, 768>}, {pipeline_mode = #tpu.pipeline_mode<synchronous>, transform_indices = @transform_2, window_bounds = array<i64: 1, 768>}, {pipeline_mode = #tpu.pipeline_mode<synchronous>, transform_indices = @transform_3, window_bounds = array<i64: 256, 256>}, {pipeline_mode = #tpu.pipeline_mode<synchronous>, transform_indices = @transform_4, window_bounds = array<i64: 1, 256>}, {pipeline_mode = #tpu.pipeline_mode<synchronous>, transform_indices = @transform_5, window_bounds = array<i64: 1, 256>}, {pipeline_mode = #tpu.pipeline_mode<synchronous>, transform_indices = @transform_6, window_bounds = array<i64: 1, 256>}, {pipeline_mode = #tpu.pipeline_mode<synchronous>, transform_indices = @transform_7, window_bounds = array<i64: 256, 1024>}, {pipeline_mode = #tpu.pipeline_mode<synchronous>, transform_indices = @transform_8, window_bounds = array<i64: 1, 1024>}, {pipeline_mode = #tpu.pipeline_mode<synchronous>, transform_indices = @transform_9, window_bounds = array<i64: 1024, 256>}, {pipeline_mode = #tpu.pipeline_mode<synchronous>, transform_indices = @transform_10, window_bounds = array<i64: 1, 256>}, {pipeline_mode = #tpu.pipeline_mode<synchronous>, transform_indices = @transform_11, window_bounds = array<i64: 1, 256>}, {pipeline_mode = #tpu.pipeline_mode<synchronous>, transform_indices = @transform_12, window_bounds = array<i64: 1, 256>}, {transform_indices = @transform_13, window_bounds = array<i64: 1, 16, 256>}]} {
    %c0 = arith.constant 0 : index
    %c0_0 = arith.constant 0 : index
    %c0_1 = arith.constant 0 : index
    %0 = vector.load %arg1[%c0, %c0_0, %c0_1] : memref<1x16x256xf32, #tpu.memory_space<vmem>>, vector<1x16x256xf32>
    %1 = vector.shape_cast %0 : vector<1x16x256xf32> to vector<16x256xf32>
    %2 = arith.truncf %1 : vector<16x256xf32> to vector<16x256xbf16>
    %c0_2 = arith.constant 0 : index
    %c0_3 = arith.constant 0 : index
    %3 = vector.load %arg2[%c0_2, %c0_3] : memref<256x768xbf16, #tpu.memory_space<vmem>>, vector<256x768xbf16>
    %cst = arith.constant dense<0.000000e+00> : vector<16x768xf32>
    %4 = tpu.matmul %2, %3, %cst {dimension_numbers = #tpu.dot_dimension_numbers<[1], [0], [0], [1], [0, 0, 1, 1], [], []>} : vector<16x256xbf16>, vector<256x768xbf16>, vector<16x768xf32> -> vector<16x768xf32>
    %c0_4 = arith.constant 0 : index
    %c0_5 = arith.constant 0 : index
    %5 = vector.load %arg3[%c0_4, %c0_5] : memref<1x768xf32, #tpu.memory_space<vmem>>, vector<1x768xf32>
    %6 = vector.broadcast %5 : vector<1x768xf32> to vector<16x768xf32>
    %7 = arith.addf %4, %6 : vector<16x768xf32>
    %8 = vector.extract_strided_slice %7 {offsets = [0, 0], sizes = [16, 256], strides = [1, 1]} : vector<16x768xf32> to vector<16x256xf32>
    %9 = vector.extract_strided_slice %7 {offsets = [0, 256], sizes = [16, 256], strides = [1, 1]} : vector<16x768xf32> to vector<16x256xf32>
    %10 = vector.extract_strided_slice %7 {offsets = [0, 512], sizes = [16, 256], strides = [1, 1]} : vector<16x768xf32> to vector<16x256xf32>
    %11 = vector.extract_strided_slice %8 {offsets = [0, 0], sizes = [16, 32], strides = [1, 1]} : vector<16x256xf32> to vector<16x32xf32>
    %12 = arith.truncf %11 : vector<16x32xf32> to vector<16x32xbf16>
    %13 = vector.extract_strided_slice %9 {offsets = [0, 0], sizes = [16, 32], strides = [1, 1]} : vector<16x256xf32> to vector<16x32xf32>
    %14 = arith.truncf %13 : vector<16x32xf32> to vector<16x32xbf16>
    %15 = vector.extract_strided_slice %10 {offsets = [0, 0], sizes = [16, 32], strides = [1, 1]} : vector<16x256xf32> to vector<16x32xf32>
    %16 = arith.truncf %15 : vector<16x32xf32> to vector<16x32xbf16>
    "tpu.trace_start"() <{level = 10 : i32, message = "qd,kd->qk"}> : () -> ()
    %cst_6 = arith.constant dense<0.000000e+00> : vector<16x16xf32>
    %17 = tpu.matmul %12, %14, %cst_6 {dimension_numbers = #tpu.dot_dimension_numbers<[1], [1], [0], [0], [0, 0, 1, 0], [], []>} : vector<16x32xbf16>, vector<16x32xbf16>, vector<16x16xf32> -> vector<16x16xf32>
    "tpu.trace_stop"() : () -> ()
    %cst_7 = arith.constant 0.176776692 : f32
    %18 = vector.broadcast %cst_7 : f32 to vector<16x16xf32>
    %19 = arith.mulf %17, %18 : vector<16x16xf32>
    %cst_8 = arith.constant dense<0xFF800000> : vector<16xf32>
    %20 = vector.multi_reduction <maximumf>, %19, %cst_8 [1] : vector<16x16xf32> to vector<16xf32>
    %21 = vector.shape_cast %20 : vector<16xf32> to vector<16x1xf32>
    %22 = vector.broadcast %21 : vector<16x1xf32> to vector<16x16xf32>
    %23 = arith.subf %19, %22 : vector<16x16xf32>
    %24 = math.exp %23 : vector<16x16xf32>
    %cst_9 = arith.constant dense<0.000000e+00> : vector<16xf32>
    %25 = vector.multi_reduction <add>, %24, %cst_9 [1] : vector<16x16xf32> to vector<16xf32>
    %26 = vector.shape_cast %25 : vector<16xf32> to vector<16x1xf32>
    %27 = vector.broadcast %26 : vector<16x1xf32> to vector<16x16xf32>
    %28 = arith.divf %24, %27 : vector<16x16xf32>
    %29 = arith.truncf %28 : vector<16x16xf32> to vector<16x16xbf16>
    %cst_10 = arith.constant dense<0.000000e+00> : vector<16x32xf32>
    %30 = tpu.matmul %29, %16, %cst_10 {dimension_numbers = #tpu.dot_dimension_numbers<[1], [0], [0], [1], [0, 0, 1, 1], [], []>} : vector<16x16xbf16>, vector<16x32xbf16>, vector<16x32xf32> -> vector<16x32xf32>
    %31 = vector.extract_strided_slice %8 {offsets = [0, 32], sizes = [16, 32], strides = [1, 1]} : vector<16x256xf32> to vector<16x32xf32>
    %32 = arith.truncf %31 : vector<16x32xf32> to vector<16x32xbf16>
    %33 = vector.extract_strided_slice %9 {offsets = [0, 32], sizes = [16, 32], strides = [1, 1]} : vector<16x256xf32> to vector<16x32xf32>
    %34 = arith.truncf %33 : vector<16x32xf32> to vector<16x32xbf16>
    %35 = vector.extract_strided_slice %10 {offsets = [0, 32], sizes = [16, 32], strides = [1, 1]} : vector<16x256xf32> to vector<16x32xf32>
    %36 = arith.truncf %35 : vector<16x32xf32> to vector<16x32xbf16>
    "tpu.trace_start"() <{level = 10 : i32, message = "qd,kd->qk"}> : () -> ()
    %cst_11 = arith.constant dense<0.000000e+00> : vector<16x16xf32>
    %37 = tpu.matmul %32, %34, %cst_11 {dimension_numbers = #tpu.dot_dimension_numbers<[1], [1], [0], [0], [0, 0, 1, 0], [], []>} : vector<16x32xbf16>, vector<16x32xbf16>, vector<16x16xf32> -> vector<16x16xf32>
    "tpu.trace_stop"() : () -> ()
    %cst_12 = arith.constant 0.176776692 : f32
    %38 = vector.broadcast %cst_12 : f32 to vector<16x16xf32>
    %39 = arith.mulf %37, %38 : vector<16x16xf32>
    %cst_13 = arith.constant dense<0xFF800000> : vector<16xf32>
    %40 = vector.multi_reduction <maximumf>, %39, %cst_13 [1] : vector<16x16xf32> to vector<16xf32>
    %41 = vector.shape_cast %40 : vector<16xf32> to vector<16x1xf32>
    %42 = vector.broadcast %41 : vector<16x1xf32> to vector<16x16xf32>
    %43 = arith.subf %39, %42 : vector<16x16xf32>
    %44 = math.exp %43 : vector<16x16xf32>
    %cst_14 = arith.constant dense<0.000000e+00> : vector<16xf32>
    %45 = vector.multi_reduction <add>, %44, %cst_14 [1] : vector<16x16xf32> to vector<16xf32>
    %46 = vector.shape_cast %45 : vector<16xf32> to vector<16x1xf32>
    %47 = vector.broadcast %46 : vector<16x1xf32> to vector<16x16xf32>
    %48 = arith.divf %44, %47 : vector<16x16xf32>
    %49 = arith.truncf %48 : vector<16x16xf32> to vector<16x16xbf16>
    %cst_15 = arith.constant dense<0.000000e+00> : vector<16x32xf32>
    %50 = tpu.matmul %49, %36, %cst_15 {dimension_numbers = #tpu.dot_dimension_numbers<[1], [0], [0], [1], [0, 0, 1, 1], [], []>} : vector<16x16xbf16>, vector<16x32xbf16>, vector<16x32xf32> -> vector<16x32xf32>
    %51 = vector.extract_strided_slice %8 {offsets = [0, 64], sizes = [16, 32], strides = [1, 1]} : vector<16x256xf32> to vector<16x32xf32>
    %52 = arith.truncf %51 : vector<16x32xf32> to vector<16x32xbf16>
    %53 = vector.extract_strided_slice %9 {offsets = [0, 64], sizes = [16, 32], strides = [1, 1]} : vector<16x256xf32> to vector<16x32xf32>
    %54 = arith.truncf %53 : vector<16x32xf32> to vector<16x32xbf16>
    %55 = vector.extract_strided_slice %10 {offsets = [0, 64], sizes = [16, 32], strides = [1, 1]} : vector<16x256xf32> to vector<16x32xf32>
    %56 = arith.truncf %55 : vector<16x32xf32> to vector<16x32xbf16>
    "tpu.trace_start"() <{level = 10 : i32, message = "qd,kd->qk"}> : () -> ()
    %cst_16 = arith.constant dense<0.000000e+00> : vector<16x16xf32>
    %57 = tpu.matmul %52, %54, %cst_16 {dimension_numbers = #tpu.dot_dimension_numbers<[1], [1], [0], [0], [0, 0, 1, 0], [], []>} : vector<16x32xbf16>, vector<16x32xbf16>, vector<16x16xf32> -> vector<16x16xf32>
    "tpu.trace_stop"() : () -> ()
    %cst_17 = arith.constant 0.176776692 : f32
    %58 = vector.broadcast %cst_17 : f32 to vector<16x16xf32>
    %59 = arith.mulf %57, %58 : vector<16x16xf32>
    %cst_18 = arith.constant dense<0xFF800000> : vector<16xf32>
    %60 = vector.multi_reduction <maximumf>, %59, %cst_18 [1] : vector<16x16xf32> to vector<16xf32>
    %61 = vector.shape_cast %60 : vector<16xf32> to vector<16x1xf32>
    %62 = vector.broadcast %61 : vector<16x1xf32> to vector<16x16xf32>
    %63 = arith.subf %59, %62 : vector<16x16xf32>
    %64 = math.exp %63 : vector<16x16xf32>
    %cst_19 = arith.constant dense<0.000000e+00> : vector<16xf32>
    %65 = vector.multi_reduction <add>, %64, %cst_19 [1] : vector<16x16xf32> to vector<16xf32>
    %66 = vector.shape_cast %65 : vector<16xf32> to vector<16x1xf32>
    %67 = vector.broadcast %66 : vector<16x1xf32> to vector<16x16xf32>
    %68 = arith.divf %64, %67 : vector<16x16xf32>
    %69 = arith.truncf %68 : vector<16x16xf32> to vector<16x16xbf16>
    %cst_20 = arith.constant dense<0.000000e+00> : vector<16x32xf32>
    %70 = tpu.matmul %69, %56, %cst_20 {dimension_numbers = #tpu.dot_dimension_numbers<[1], [0], [0], [1], [0, 0, 1, 1], [], []>} : vector<16x16xbf16>, vector<16x32xbf16>, vector<16x32xf32> -> vector<16x32xf32>
    %71 = vector.extract_strided_slice %8 {offsets = [0, 96], sizes = [16, 32], strides = [1, 1]} : vector<16x256xf32> to vector<16x32xf32>
    %72 = arith.truncf %71 : vector<16x32xf32> to vector<16x32xbf16>
    %73 = vector.extract_strided_slice %9 {offsets = [0, 96], sizes = [16, 32], strides = [1, 1]} : vector<16x256xf32> to vector<16x32xf32>
    %74 = arith.truncf %73 : vector<16x32xf32> to vector<16x32xbf16>
    %75 = vector.extract_strided_slice %10 {offsets = [0, 96], sizes = [16, 32], strides = [1, 1]} : vector<16x256xf32> to vector<16x32xf32>
    %76 = arith.truncf %75 : vector<16x32xf32> to vector<16x32xbf16>
    "tpu.trace_start"() <{level = 10 : i32, message = "qd,kd->qk"}> : () -> ()
    %cst_21 = arith.constant dense<0.000000e+00> : vector<16x16xf32>
    %77 = tpu.matmul %72, %74, %cst_21 {dimension_numbers = #tpu.dot_dimension_numbers<[1], [1], [0], [0], [0, 0, 1, 0], [], []>} : vector<16x32xbf16>, vector<16x32xbf16>, vector<16x16xf32> -> vector<16x16xf32>
    "tpu.trace_stop"() : () -> ()
    %cst_22 = arith.constant 0.176776692 : f32
    %78 = vector.broadcast %cst_22 : f32 to vector<16x16xf32>
    %79 = arith.mulf %77, %78 : vector<16x16xf32>
    %cst_23 = arith.constant dense<0xFF800000> : vector<16xf32>
    %80 = vector.multi_reduction <maximumf>, %79, %cst_23 [1] : vector<16x16xf32> to vector<16xf32>
    %81 = vector.shape_cast %80 : vector<16xf32> to vector<16x1xf32>
    %82 = vector.broadcast %81 : vector<16x1xf32> to vector<16x16xf32>
    %83 = arith.subf %79, %82 : vector<16x16xf32>
    %84 = math.exp %83 : vector<16x16xf32>
    %cst_24 = arith.constant dense<0.000000e+00> : vector<16xf32>
    %85 = vector.multi_reduction <add>, %84, %cst_24 [1] : vector<16x16xf32> to vector<16xf32>
    %86 = vector.shape_cast %85 : vector<16xf32> to vector<16x1xf32>
    %87 = vector.broadcast %86 : vector<16x1xf32> to vector<16x16xf32>
    %88 = arith.divf %84, %87 : vector<16x16xf32>
    %89 = arith.truncf %88 : vector<16x16xf32> to vector<16x16xbf16>
    %cst_25 = arith.constant dense<0.000000e+00> : vector<16x32xf32>
    %90 = tpu.matmul %89, %76, %cst_25 {dimension_numbers = #tpu.dot_dimension_numbers<[1], [0], [0], [1], [0, 0, 1, 1], [], []>} : vector<16x16xbf16>, vector<16x32xbf16>, vector<16x32xf32> -> vector<16x32xf32>
    %91 = vector.extract_strided_slice %8 {offsets = [0, 128], sizes = [16, 32], strides = [1, 1]} : vector<16x256xf32> to vector<16x32xf32>
    %92 = arith.truncf %91 : vector<16x32xf32> to vector<16x32xbf16>
    %93 = vector.extract_strided_slice %9 {offsets = [0, 128], sizes = [16, 32], strides = [1, 1]} : vector<16x256xf32> to vector<16x32xf32>
    %94 = arith.truncf %93 : vector<16x32xf32> to vector<16x32xbf16>
    %95 = vector.extract_strided_slice %10 {offsets = [0, 128], sizes = [16, 32], strides = [1, 1]} : vector<16x256xf32> to vector<16x32xf32>
    %96 = arith.truncf %95 : vector<16x32xf32> to vector<16x32xbf16>
    "tpu.trace_start"() <{level = 10 : i32, message = "qd,kd->qk"}> : () -> ()
    %cst_26 = arith.constant dense<0.000000e+00> : vector<16x16xf32>
    %97 = tpu.matmul %92, %94, %cst_26 {dimension_numbers = #tpu.dot_dimension_numbers<[1], [1], [0], [0], [0, 0, 1, 0], [], []>} : vector<16x32xbf16>, vector<16x32xbf16>, vector<16x16xf32> -> vector<16x16xf32>
    "tpu.trace_stop"() : () -> ()
    %cst_27 = arith.constant 0.176776692 : f32
    %98 = vector.broadcast %cst_27 : f32 to vector<16x16xf32>
    %99 = arith.mulf %97, %98 : vector<16x16xf32>
    %cst_28 = arith.constant dense<0xFF800000> : vector<16xf32>
    %100 = vector.multi_reduction <maximumf>, %99, %cst_28 [1] : vector<16x16xf32> to vector<16xf32>
    %101 = vector.shape_cast %100 : vector<16xf32> to vector<16x1xf32>
    %102 = vector.broadcast %101 : vector<16x1xf32> to vector<16x16xf32>
    %103 = arith.subf %99, %102 : vector<16x16xf32>
    %104 = math.exp %103 : vector<16x16xf32>
    %cst_29 = arith.constant dense<0.000000e+00> : vector<16xf32>
    %105 = vector.multi_reduction <add>, %104, %cst_29 [1] : vector<16x16xf32> to vector<16xf32>
    %106 = vector.shape_cast %105 : vector<16xf32> to vector<16x1xf32>
    %107 = vector.broadcast %106 : vector<16x1xf32> to vector<16x16xf32>
    %108 = arith.divf %104, %107 : vector<16x16xf32>
    %109 = arith.truncf %108 : vector<16x16xf32> to vector<16x16xbf16>
    %cst_30 = arith.constant dense<0.000000e+00> : vector<16x32xf32>
    %110 = tpu.matmul %109, %96, %cst_30 {dimension_numbers = #tpu.dot_dimension_numbers<[1], [0], [0], [1], [0, 0, 1, 1], [], []>} : vector<16x16xbf16>, vector<16x32xbf16>, vector<16x32xf32> -> vector<16x32xf32>
    %111 = vector.extract_strided_slice %8 {offsets = [0, 160], sizes = [16, 32], strides = [1, 1]} : vector<16x256xf32> to vector<16x32xf32>
    %112 = arith.truncf %111 : vector<16x32xf32> to vector<16x32xbf16>
    %113 = vector.extract_strided_slice %9 {offsets = [0, 160], sizes = [16, 32], strides = [1, 1]} : vector<16x256xf32> to vector<16x32xf32>
    %114 = arith.truncf %113 : vector<16x32xf32> to vector<16x32xbf16>
    %115 = vector.extract_strided_slice %10 {offsets = [0, 160], sizes = [16, 32], strides = [1, 1]} : vector<16x256xf32> to vector<16x32xf32>
    %116 = arith.truncf %115 : vector<16x32xf32> to vector<16x32xbf16>
    "tpu.trace_start"() <{level = 10 : i32, message = "qd,kd->qk"}> : () -> ()
    %cst_31 = arith.constant dense<0.000000e+00> : vector<16x16xf32>
    %117 = tpu.matmul %112, %114, %cst_31 {dimension_numbers = #tpu.dot_dimension_numbers<[1], [1], [0], [0], [0, 0, 1, 0], [], []>} : vector<16x32xbf16>, vector<16x32xbf16>, vector<16x16xf32> -> vector<16x16xf32>
    "tpu.trace_stop"() : () -> ()
    %cst_32 = arith.constant 0.176776692 : f32
    %118 = vector.broadcast %cst_32 : f32 to vector<16x16xf32>
    %119 = arith.mulf %117, %118 : vector<16x16xf32>
    %cst_33 = arith.constant dense<0xFF800000> : vector<16xf32>
    %120 = vector.multi_reduction <maximumf>, %119, %cst_33 [1] : vector<16x16xf32> to vector<16xf32>
    %121 = vector.shape_cast %120 : vector<16xf32> to vector<16x1xf32>
    %122 = vector.broadcast %121 : vector<16x1xf32> to vector<16x16xf32>
    %123 = arith.subf %119, %122 : vector<16x16xf32>
    %124 = math.exp %123 : vector<16x16xf32>
    %cst_34 = arith.constant dense<0.000000e+00> : vector<16xf32>
    %125 = vector.multi_reduction <add>, %124, %cst_34 [1] : vector<16x16xf32> to vector<16xf32>
    %126 = vector.shape_cast %125 : vector<16xf32> to vector<16x1xf32>
    %127 = vector.broadcast %126 : vector<16x1xf32> to vector<16x16xf32>
    %128 = arith.divf %124, %127 : vector<16x16xf32>
    %129 = arith.truncf %128 : vector<16x16xf32> to vector<16x16xbf16>
    %cst_35 = arith.constant dense<0.000000e+00> : vector<16x32xf32>
    %130 = tpu.matmul %129, %116, %cst_35 {dimension_numbers = #tpu.dot_dimension_numbers<[1], [0], [0], [1], [0, 0, 1, 1], [], []>} : vector<16x16xbf16>, vector<16x32xbf16>, vector<16x32xf32> -> vector<16x32xf32>
    %131 = vector.extract_strided_slice %8 {offsets = [0, 192], sizes = [16, 32], strides = [1, 1]} : vector<16x256xf32> to vector<16x32xf32>
    %132 = arith.truncf %131 : vector<16x32xf32> to vector<16x32xbf16>
    %133 = vector.extract_strided_slice %9 {offsets = [0, 192], sizes = [16, 32], strides = [1, 1]} : vector<16x256xf32> to vector<16x32xf32>
    %134 = arith.truncf %133 : vector<16x32xf32> to vector<16x32xbf16>
    %135 = vector.extract_strided_slice %10 {offsets = [0, 192], sizes = [16, 32], strides = [1, 1]} : vector<16x256xf32> to vector<16x32xf32>
    %136 = arith.truncf %135 : vector<16x32xf32> to vector<16x32xbf16>
    "tpu.trace_start"() <{level = 10 : i32, message = "qd,kd->qk"}> : () -> ()
    %cst_36 = arith.constant dense<0.000000e+00> : vector<16x16xf32>
    %137 = tpu.matmul %132, %134, %cst_36 {dimension_numbers = #tpu.dot_dimension_numbers<[1], [1], [0], [0], [0, 0, 1, 0], [], []>} : vector<16x32xbf16>, vector<16x32xbf16>, vector<16x16xf32> -> vector<16x16xf32>
    "tpu.trace_stop"() : () -> ()
    %cst_37 = arith.constant 0.176776692 : f32
    %138 = vector.broadcast %cst_37 : f32 to vector<16x16xf32>
    %139 = arith.mulf %137, %138 : vector<16x16xf32>
    %cst_38 = arith.constant dense<0xFF800000> : vector<16xf32>
    %140 = vector.multi_reduction <maximumf>, %139, %cst_38 [1] : vector<16x16xf32> to vector<16xf32>
    %141 = vector.shape_cast %140 : vector<16xf32> to vector<16x1xf32>
    %142 = vector.broadcast %141 : vector<16x1xf32> to vector<16x16xf32>
    %143 = arith.subf %139, %142 : vector<16x16xf32>
    %144 = math.exp %143 : vector<16x16xf32>
    %cst_39 = arith.constant dense<0.000000e+00> : vector<16xf32>
    %145 = vector.multi_reduction <add>, %144, %cst_39 [1] : vector<16x16xf32> to vector<16xf32>
    %146 = vector.shape_cast %145 : vector<16xf32> to vector<16x1xf32>
    %147 = vector.broadcast %146 : vector<16x1xf32> to vector<16x16xf32>
    %148 = arith.divf %144, %147 : vector<16x16xf32>
    %149 = arith.truncf %148 : vector<16x16xf32> to vector<16x16xbf16>
    %cst_40 = arith.constant dense<0.000000e+00> : vector<16x32xf32>
    %150 = tpu.matmul %149, %136, %cst_40 {dimension_numbers = #tpu.dot_dimension_numbers<[1], [0], [0], [1], [0, 0, 1, 1], [], []>} : vector<16x16xbf16>, vector<16x32xbf16>, vector<16x32xf32> -> vector<16x32xf32>
    %151 = vector.extract_strided_slice %8 {offsets = [0, 224], sizes = [16, 32], strides = [1, 1]} : vector<16x256xf32> to vector<16x32xf32>
    %152 = arith.truncf %151 : vector<16x32xf32> to vector<16x32xbf16>
    %153 = vector.extract_strided_slice %9 {offsets = [0, 224], sizes = [16, 32], strides = [1, 1]} : vector<16x256xf32> to vector<16x32xf32>
    %154 = arith.truncf %153 : vector<16x32xf32> to vector<16x32xbf16>
    %155 = vector.extract_strided_slice %10 {offsets = [0, 224], sizes = [16, 32], strides = [1, 1]} : vector<16x256xf32> to vector<16x32xf32>
    %156 = arith.truncf %155 : vector<16x32xf32> to vector<16x32xbf16>
    "tpu.trace_start"() <{level = 10 : i32, message = "qd,kd->qk"}> : () -> ()
    %cst_41 = arith.constant dense<0.000000e+00> : vector<16x16xf32>
    %157 = tpu.matmul %152, %154, %cst_41 {dimension_numbers = #tpu.dot_dimension_numbers<[1], [1], [0], [0], [0, 0, 1, 0], [], []>} : vector<16x32xbf16>, vector<16x32xbf16>, vector<16x16xf32> -> vector<16x16xf32>
    "tpu.trace_stop"() : () -> ()
    %cst_42 = arith.constant 0.176776692 : f32
    %158 = vector.broadcast %cst_42 : f32 to vector<16x16xf32>
    %159 = arith.mulf %157, %158 : vector<16x16xf32>
    %cst_43 = arith.constant dense<0xFF800000> : vector<16xf32>
    %160 = vector.multi_reduction <maximumf>, %159, %cst_43 [1] : vector<16x16xf32> to vector<16xf32>
    %161 = vector.shape_cast %160 : vector<16xf32> to vector<16x1xf32>
    %162 = vector.broadcast %161 : vector<16x1xf32> to vector<16x16xf32>
    %163 = arith.subf %159, %162 : vector<16x16xf32>
    %164 = math.exp %163 : vector<16x16xf32>
    %cst_44 = arith.constant dense<0.000000e+00> : vector<16xf32>
    %165 = vector.multi_reduction <add>, %164, %cst_44 [1] : vector<16x16xf32> to vector<16xf32>
    %166 = vector.shape_cast %165 : vector<16xf32> to vector<16x1xf32>
    %167 = vector.broadcast %166 : vector<16x1xf32> to vector<16x16xf32>
    %168 = arith.divf %164, %167 : vector<16x16xf32>
    %169 = arith.truncf %168 : vector<16x16xf32> to vector<16x16xbf16>
    %cst_45 = arith.constant dense<0.000000e+00> : vector<16x32xf32>
    %170 = tpu.matmul %169, %156, %cst_45 {dimension_numbers = #tpu.dot_dimension_numbers<[1], [0], [0], [1], [0, 0, 1, 1], [], []>} : vector<16x16xbf16>, vector<16x32xbf16>, vector<16x32xf32> -> vector<16x32xf32>
    %171 = tpu.concatenate %30, %50, %70, %90, %110, %130, %150, %170 in 1 : vector<16x32xf32>, vector<16x32xf32>, vector<16x32xf32>, vector<16x32xf32>, vector<16x32xf32>, vector<16x32xf32>, vector<16x32xf32>, vector<16x32xf32> -> vector<16x256xf32>
    %172 = arith.truncf %171 : vector<16x256xf32> to vector<16x256xbf16>
    %c0_46 = arith.constant 0 : index
    %c0_47 = arith.constant 0 : index
    %173 = vector.load %arg4[%c0_46, %c0_47] : memref<256x256xbf16, #tpu.memory_space<vmem>>, vector<256x256xbf16>
    %cst_48 = arith.constant dense<0.000000e+00> : vector<16x256xf32>
    %174 = tpu.matmul %172, %173, %cst_48 {dimension_numbers = #tpu.dot_dimension_numbers<[1], [0], [0], [1], [0, 0, 1, 1], [], []>} : vector<16x256xbf16>, vector<256x256xbf16>, vector<16x256xf32> -> vector<16x256xf32>
    %c0_49 = arith.constant 0 : index
    %c0_50 = arith.constant 0 : index
    %175 = vector.load %arg5[%c0_49, %c0_50] : memref<1x256xf32, #tpu.memory_space<vmem>>, vector<1x256xf32>
    %176 = vector.broadcast %175 : vector<1x256xf32> to vector<16x256xf32>
    %177 = arith.addf %174, %176 : vector<16x256xf32>
    %178 = arith.addf %1, %177 : vector<16x256xf32>
    %c0_51 = arith.constant 0 : index
    %c0_52 = arith.constant 0 : index
    %179 = vector.load %arg6[%c0_51, %c0_52] : memref<1x256xf32, #tpu.memory_space<vmem>>, vector<1x256xf32>
    %c0_53 = arith.constant 0 : index
    %c0_54 = arith.constant 0 : index
    %180 = vector.load %arg7[%c0_53, %c0_54] : memref<1x256xf32, #tpu.memory_space<vmem>>, vector<1x256xf32>
    %cst_55 = arith.constant dense<0.000000e+00> : vector<16xf32>
    %181 = vector.multi_reduction <add>, %178, %cst_55 [1] : vector<16x256xf32> to vector<16xf32>
    %182 = vector.shape_cast %181 : vector<16xf32> to vector<16x1xf32>
    %cst_56 = arith.constant 2.560000e+02 : f32
    %183 = vector.broadcast %cst_56 : f32 to vector<16x1xf32>
    %184 = arith.divf %182, %183 : vector<16x1xf32>
    %185 = vector.broadcast %184 : vector<16x1xf32> to vector<16x256xf32>
    %186 = arith.subf %178, %185 : vector<16x256xf32>
    %187 = arith.mulf %186, %186 : vector<16x256xf32>
    %cst_57 = arith.constant dense<0.000000e+00> : vector<16xf32>
    %188 = vector.multi_reduction <add>, %187, %cst_57 [1] : vector<16x256xf32> to vector<16xf32>
    %189 = vector.shape_cast %188 : vector<16xf32> to vector<16x1xf32>
    %cst_58 = arith.constant 2.560000e+02 : f32
    %190 = vector.broadcast %cst_58 : f32 to vector<16x1xf32>
    %191 = arith.divf %189, %190 : vector<16x1xf32>
    %cst_59 = arith.constant 9.99999974E-6 : f32
    %192 = vector.broadcast %cst_59 : f32 to vector<16x1xf32>
    %193 = arith.addf %191, %192 : vector<16x1xf32>
    %194 = math.rsqrt %193 : vector<16x1xf32>
    %195 = vector.broadcast %194 : vector<16x1xf32> to vector<16x256xf32>
    %196 = arith.mulf %186, %195 : vector<16x256xf32>
    %197 = vector.broadcast %179 : vector<1x256xf32> to vector<16x256xf32>
    %198 = arith.mulf %196, %197 : vector<16x256xf32>
    %199 = vector.broadcast %180 : vector<1x256xf32> to vector<16x256xf32>
    %200 = arith.addf %198, %199 : vector<16x256xf32>
    %201 = arith.truncf %200 : vector<16x256xf32> to vector<16x256xbf16>
    %c0_60 = arith.constant 0 : index
    %c0_61 = arith.constant 0 : index
    %202 = vector.load %arg8[%c0_60, %c0_61] : memref<256x1024xbf16, #tpu.memory_space<vmem>>, vector<256x1024xbf16>
    %cst_62 = arith.constant dense<0.000000e+00> : vector<16x1024xf32>
    %203 = tpu.matmul %201, %202, %cst_62 {dimension_numbers = #tpu.dot_dimension_numbers<[1], [0], [0], [1], [0, 0, 1, 1], [], []>} : vector<16x256xbf16>, vector<256x1024xbf16>, vector<16x1024xf32> -> vector<16x1024xf32>
    %c0_63 = arith.constant 0 : index
    %c0_64 = arith.constant 0 : index
    %204 = vector.load %arg9[%c0_63, %c0_64] : memref<1x1024xf32, #tpu.memory_space<vmem>>, vector<1x1024xf32>
    %205 = vector.broadcast %204 : vector<1x1024xf32> to vector<16x1024xf32>
    %206 = arith.addf %203, %205 : vector<16x1024xf32>
    %cst_65 = arith.constant 0.000000e+00 : f32
    %207 = vector.broadcast %cst_65 : f32 to vector<16x1024xf32>
    %208 = arith.maximumf %206, %207 : vector<16x1024xf32>
    %209 = arith.truncf %208 : vector<16x1024xf32> to vector<16x1024xbf16>
    %c0_66 = arith.constant 0 : index
    %c0_67 = arith.constant 0 : index
    %210 = vector.load %arg10[%c0_66, %c0_67] : memref<1024x256xbf16, #tpu.memory_space<vmem>>, vector<1024x256xbf16>
    %cst_68 = arith.constant dense<0.000000e+00> : vector<16x256xf32>
    %211 = tpu.matmul %209, %210, %cst_68 {dimension_numbers = #tpu.dot_dimension_numbers<[1], [0], [0], [1], [0, 0, 1, 1], [], []>} : vector<16x1024xbf16>, vector<1024x256xbf16>, vector<16x256xf32> -> vector<16x256xf32>
    %c0_69 = arith.constant 0 : index
    %c0_70 = arith.constant 0 : index
    %212 = vector.load %arg11[%c0_69, %c0_70] : memref<1x256xf32, #tpu.memory_space<vmem>>, vector<1x256xf32>
    %213 = vector.broadcast %212 : vector<1x256xf32> to vector<16x256xf32>
    %214 = arith.addf %211, %213 : vector<16x256xf32>
    %215 = arith.addf %200, %214 : vector<16x256xf32>
    %c0_71 = arith.constant 0 : index
    %c0_72 = arith.constant 0 : index
    %216 = vector.load %arg12[%c0_71, %c0_72] : memref<1x256xf32, #tpu.memory_space<vmem>>, vector<1x256xf32>
    %c0_73 = arith.constant 0 : index
    %c0_74 = arith.constant 0 : index
    %217 = vector.load %arg13[%c0_73, %c0_74] : memref<1x256xf32, #tpu.memory_space<vmem>>, vector<1x256xf32>
    %cst_75 = arith.constant dense<0.000000e+00> : vector<16xf32>
    %218 = vector.multi_reduction <add>, %215, %cst_75 [1] : vector<16x256xf32> to vector<16xf32>
    %219 = vector.shape_cast %218 : vector<16xf32> to vector<16x1xf32>
    %cst_76 = arith.constant 2.560000e+02 : f32
    %220 = vector.broadcast %cst_76 : f32 to vector<16x1xf32>
    %221 = arith.divf %219, %220 : vector<16x1xf32>
    %222 = vector.broadcast %221 : vector<16x1xf32> to vector<16x256xf32>
    %223 = arith.subf %215, %222 : vector<16x256xf32>
    %224 = arith.mulf %223, %223 : vector<16x256xf32>
    %cst_77 = arith.constant dense<0.000000e+00> : vector<16xf32>
    %225 = vector.multi_reduction <add>, %224, %cst_77 [1] : vector<16x256xf32> to vector<16xf32>
    %226 = vector.shape_cast %225 : vector<16xf32> to vector<16x1xf32>
    %cst_78 = arith.constant 2.560000e+02 : f32
    %227 = vector.broadcast %cst_78 : f32 to vector<16x1xf32>
    %228 = arith.divf %226, %227 : vector<16x1xf32>
    %cst_79 = arith.constant 9.99999974E-6 : f32
    %229 = vector.broadcast %cst_79 : f32 to vector<16x1xf32>
    %230 = arith.addf %228, %229 : vector<16x1xf32>
    %231 = math.rsqrt %230 : vector<16x1xf32>
    %232 = vector.broadcast %231 : vector<16x1xf32> to vector<16x256xf32>
    %233 = arith.mulf %223, %232 : vector<16x256xf32>
    %234 = vector.broadcast %216 : vector<1x256xf32> to vector<16x256xf32>
    %235 = arith.mulf %233, %234 : vector<16x256xf32>
    %236 = vector.broadcast %217 : vector<1x256xf32> to vector<16x256xf32>
    %237 = arith.addf %235, %236 : vector<16x256xf32>
    %c0_80 = arith.constant 0 : index
    %c0_81 = arith.constant 0 : index
    %c0_82 = arith.constant 0 : index
    %238 = vector.load %arg14[%c0_80, %c0_81, %c0_82] : memref<1x16x256xf32, #tpu.memory_space<vmem>>, vector<1x16x256xf32>
    %239 = vector.shape_cast %238 : vector<1x16x256xf32> to vector<16x256xf32>
    %240 = vector.shape_cast %237 : vector<16x256xf32> to vector<1x16x256xf32>
    tpu.vector_store %arg14[%c0_80, %c0_81, %c0_82], %240 {strides = array<i32>} : memref<1x16x256xf32, #tpu.memory_space<vmem>>, vector<1x16x256xf32>,
    return
  }
  func.func @transform_0(%arg0: i32) -> (i32, i32, i32) {
    %c0_i32 = arith.constant 0 : i32
    %c0_i32_0 = arith.constant 0 : i32
    %c0_i32_1 = arith.constant 0 : i32
    return %arg0, %c0_i32, %c0_i32_0 : i32, i32, i32
  }
  func.func @transform_1(%arg0: i32) -> (i32, i32) {
    %c0_i32 = arith.constant 0 : i32
    %c0_i32_0 = arith.constant 0 : i32
    %c0_i32_1 = arith.constant 0 : i32
    return %c0_i32, %c0_i32_0 : i32, i32
  }
  func.func @transform_2(%arg0: i32) -> (i32, i32) {
    %c0_i32 = arith.constant 0 : i32
    %c0_i32_0 = arith.constant 0 : i32
    %c0_i32_1 = arith.constant 0 : i32
    return %c0_i32, %c0_i32_0 : i32, i32
  }
  func.func @transform_3(%arg0: i32) -> (i32, i32) {
    %c0_i32 = arith.constant 0 : i32
    %c0_i32_0 = arith.constant 0 : i32
    %c0_i32_1 = arith.constant 0 : i32
    return %c0_i32, %c0_i32_0 : i32, i32
  }
  func.func @transform_4(%arg0: i32) -> (i32, i32) {
    %c0_i32 = arith.constant 0 : i32
    %c0_i32_0 = arith.constant 0 : i32
    %c0_i32_1 = arith.constant 0 : i32
    return %c0_i32, %c0_i32_0 : i32, i32
  }
  func.func @transform_5(%arg0: i32) -> (i32, i32) {
    %c0_i32 = arith.constant 0 : i32
    %c0_i32_0 = arith.constant 0 : i32
    %c0_i32_1 = arith.constant 0 : i32
    return %c0_i32, %c0_i32_0 : i32, i32
  }
  func.func @transform_6(%arg0: i32) -> (i32, i32) {
    %c0_i32 = arith.constant 0 : i32
    %c0_i32_0 = arith.constant 0 : i32
    %c0_i32_1 = arith.constant 0 : i32
    return %c0_i32, %c0_i32_0 : i32, i32
  }
  func.func @transform_7(%arg0: i32) -> (i32, i32) {
    %c0_i32 = arith.constant 0 : i32
    %c0_i32_0 = arith.constant 0 : i32
    %c0_i32_1 = arith.constant 0 : i32
    return %c0_i32, %c0_i32_0 : i32, i32
  }
  func.func @transform_8(%arg0: i32) -> (i32, i32) {
    %c0_i32 = arith.constant 0 : i32
    %c0_i32_0 = arith.constant 0 : i32
    %c0_i32_1 = arith.constant 0 : i32
    return %c0_i32, %c0_i32_0 : i32, i32
  }
  func.func @transform_9(%arg0: i32) -> (i32, i32) {
    %c0_i32 = arith.constant 0 : i32
    %c0_i32_0 = arith.constant 0 : i32
    %c0_i32_1 = arith.constant 0 : i32
    return %c0_i32, %c0_i32_0 : i32, i32
  }
  func.func @transform_10(%arg0: i32) -> (i32, i32) {
    %c0_i32 = arith.constant 0 : i32
    %c0_i32_0 = arith.constant 0 : i32
    %c0_i32_1 = arith.constant 0 : i32
    return %c0_i32, %c0_i32_0 : i32, i32
  }
  func.func @transform_11(%arg0: i32) -> (i32, i32) {
    %c0_i32 = arith.constant 0 : i32
    %c0_i32_0 = arith.constant 0 : i32
    %c0_i32_1 = arith.constant 0 : i32
    return %c0_i32, %c0_i32_0 : i32, i32
  }
  func.func @transform_12(%arg0: i32) -> (i32, i32) {
    %c0_i32 = arith.constant 0 : i32
    %c0_i32_0 = arith.constant 0 : i32
    %c0_i32_1 = arith.constant 0 : i32
    return %c0_i32, %c0_i32_0 : i32, i32
  }
  func.func @transform_13(%arg0: i32) -> (i32, i32, i32) {
    %c0_i32 = arith.constant 0 : i32
    %c0_i32_0 = arith.constant 0 : i32
    %c0_i32_1 = arith.constant 0 : i32
    return %arg0, %c0_i32, %c0_i32_0 : i32, i32, i32
  }
}

</mosaic_0001>

<llo_original>
// kernel: transformer_block.1
$region0: #{transformer_block.1}
  #allocation0 [shape = 'u32[]', space=smem, size = 0x4, offset = 0x4, fixed_abs, tag = 'smem constant byte address 0x4 - core index']
  #allocation1 [shape = 'u32[144,128]{1,0:T(1,128)}', space=vmem, size = 0x12000, scoped, tag = 'internal scratch']
  %s0 = inlined_call_operand.vmem [shape: f32[2,16,256], index: 0, kind: input, shape index: {}]
  %s1 = inlined_call_operand.vmem [shape: bf16[256,768], index: 1, kind: input, shape index: {}]
  %s2 = inlined_call_operand.vmem [shape: f32[1,768], index: 2, kind: input, shape index: {}]
  %s3 = inlined_call_operand.vmem [shape: bf16[256,256], index: 3, kind: input, shape index: {}]
  %s4 = inlined_call_operand.vmem [shape: f32[1,256], index: 4, kind: input, shape index: {}]
  %s5 = inlined_call_operand.vmem [shape: f32[1,256], index: 5, kind: input, shape index: {}]
  %s6 = inlined_call_operand.vmem [shape: f32[1,256], index: 6, kind: input, shape index: {}]
  %s7 = inlined_call_operand.vmem [shape: bf16[256,1024], index: 7, kind: input, shape index: {}]
  %s8 = inlined_call_operand.vmem [shape: f32[1,1024], index: 8, kind: input, shape index: {}]
  %s9 = inlined_call_operand.vmem [shape: bf16[1024,256], index: 9, kind: input, shape index: {}]
  %s10 = inlined_call_operand.vmem [shape: f32[1,256], index: 10, kind: input, shape index: {}]
  %s11 = inlined_call_operand.vmem [shape: f32[1,256], index: 11, kind: input, shape index: {}]
  %s12 = inlined_call_operand.vmem [shape: f32[1,256], index: 12, kind: input, shape index: {}]
  %s13 = inlined_call_operand.hbm [shape: f32[2,16,256], index: 13, kind: output, shape index: {}]
  %s14 = sld [smem:[#allocation0]]
  $region85: #{transformer_block.1} parent=0
    _
  %s16 = ssub.s32 1, %s14
  %s17 = scalar_select 0, %s16, %s14
  $region1: #{transformer_block.1} parent=0
    #allocation2 [shape = 'u8[32768]{0}', space=vmem, size = 0x8000, scoped, tag = 'output window, operand 0']
    #allocation3 [shape = 's32[2]{0}', space=sflag, size = 0x8, scoped, tag = 'scoped memory for transformer_block.1']
    %18 = vsyncpa [#allocation3], 0
    %s19 = scalar_lea.sflag [#allocation3], 1
    %20 = vsyncpa %s19, 0
    loop: start=0, step=1, limit=4
    $region2: #{transformer_block.1} parent=1 // loop_pre_header
      _
    $region3: #{transformer_block.1} parent=1 // loop_header
      %s22 = sphi 0, %s26
      %p23 = scmp.ge.s32.totalorder %s22, 4
      %s32 = sphi 0, %s34
      %s35 = sphi 0, %s32
      %s36 = sphi 0, %s35
      %s52 = sphi 0, %s36
      %s56 = sphi 0, %s56
      %s58 = sphi 0, %s56
      %s59 = sphi 0, %s58
      %s73 = sphi 0, %s59
      %s77 = sphi 0, %s77
      %s79 = sphi 0, %s77
      %s80 = sphi 0, %s79
      %s94 = sphi 0, %s80
      %s98 = sphi 0, %s98
      %s100 = sphi 0, %s98
      %s101 = sphi 0, %s100
      %s115 = sphi 0, %s101
      %s119 = sphi 0, %s119
      %s121 = sphi 0, %s119
      %s122 = sphi 0, %s121
      %s136 = sphi 0, %s122
      %s140 = sphi 0, %s140
      %s142 = sphi 0, %s140
      %s143 = sphi 0, %s142
      %s157 = sphi 0, %s143
      %s161 = sphi 0, %s161
      %s163 = sphi 0, %s161
      %s164 = sphi 0, %s163
      %s178 = sphi 0, %s164
      %s182 = sphi 0, %s182
      %s184 = sphi 0, %s182
      %s185 = sphi 0, %s184
      %s199 = sphi 0, %s185
      %s203 = sphi 0, %s203
      %s205 = sphi 0, %s203
      %s206 = sphi 0, %s205
      %s220 = sphi 0, %s206
      %s224 = sphi 0, %s224
      %s226 = sphi 0, %s224
      %s227 = sphi 0, %s226
      %s241 = sphi 0, %s227
      %s245 = sphi 0, %s245
      %s247 = sphi 0, %s245
      %s248 = sphi 0, %s247
      %s262 = sphi 0, %s248
      %s266 = sphi 0, %s266
      %s268 = sphi 0, %s266
      %s269 = sphi 0, %s268
      %s283 = sphi 0, %s269
      %s287 = sphi 0, %s287
      %s289 = sphi 0, %s287
      %s290 = sphi 0, %s289
      %s304 = sphi 0, %s290
      %s310 = sphi 0, %s312
      %s313 = sphi 0, %s310
      %s314 = sphi 0, %s313
      %s330 = sphi 0, %s314
    $region4: #{transformer_block.1} parent=1 // loop_header_branch
      %25 = sbr.rel (%p23) target = $region8
    $region5: #{transformer_block.1} parent=1 // loop_body
      %s27 = ssub.s32 %s22, 1
      %s28 = ssub.s32 %s22, 2
      %s29 = sadd.s32 %s22, 1
      %s30 = ssub.s32 %s22, %s29
      %p31 = scmp.eq.s32.totalorder %s30, 0
      %s33 = sadd.s32 %s32, 1
      %s34 = scalar_select %p31, %s32, %s33
      %p37 = pneg %p31
      %p38 = scmp.eq.s32.totalorder %s22, 1
      %p39 = por %p37, %p38
      %p40 = scmp.ne.s32.totalorder %s32, %s35
      %p41 = scmp.eq.s32.totalorder %s22, 0
      %p42 = por %p40, %p41
      %p43 = scmp.ne.s32.totalorder %s32, %s35
      %p44 = scmp.eq.s32.totalorder %s27, 1
      %p45 = por %p43, %p44
      %p46 = scmp.ne.s32.totalorder %s35, %s36
      %p47 = scmp.eq.s32.totalorder %s27, 0
      %p48 = por %p46, %p47
      %p49 = scmp.ne.s32.totalorder %s35, %s36
      %p50 = scmp.eq.s32.totalorder %s28, 1
      %p51 = por %p49, %p50
      %p53 = scmp.ne.s32.totalorder %s36, %s52
      %p54 = scmp.eq.s32.totalorder %s28, 0
      %p55 = por %p53, %p54
      %s57 = sadd.s32 %s56, 1
      %p60 = scmp.eq.s32.totalorder %s22, 1
      %p61 = scmp.ne.s32.totalorder %s56, %s58
      %p62 = scmp.eq.s32.totalorder %s22, 0
      %p63 = por %p61, %p62
      %p64 = scmp.ne.s32.totalorder %s56, %s58
      %p65 = scmp.eq.s32.totalorder %s27, 1
      %p66 = por %p64, %p65
      %p67 = scmp.ne.s32.totalorder %s58, %s59
      %p68 = scmp.eq.s32.totalorder %s27, 0
      %p69 = por %p67, %p68
      %p70 = scmp.ne.s32.totalorder %s58, %s59
      %p71 = scmp.eq.s32.totalorder %s28, 1
      %p72 = por %p70, %p71
      %p74 = scmp.ne.s32.totalorder %s59, %s73
      %p75 = scmp.eq.s32.totalorder %s28, 0
      %p76 = por %p74, %p75
      %s78 = sadd.s32 %s77, 1
      %p81 = scmp.eq.s32.totalorder %s22, 1
      %p82 = scmp.ne.s32.totalorder %s77, %s79
      %p83 = scmp.eq.s32.totalorder %s22, 0
      %p84 = por %p82, %p83
      %p85 = scmp.ne.s32.totalorder %s77, %s79
      %p86 = scmp.eq.s32.totalorder %s27, 1
      %p87 = por %p85, %p86
      %p88 = scmp.ne.s32.totalorder %s79, %s80
      %p89 = scmp.eq.s32.totalorder %s27, 0
      %p90 = por %p88, %p89
      %p91 = scmp.ne.s32.totalorder %s79, %s80
      %p92 = scmp.eq.s32.totalorder %s28, 1
      %p93 = por %p91, %p92
      %p95 = scmp.ne.s32.totalorder %s80, %s94
      %p96 = scmp.eq.s32.totalorder %s28, 0
      %p97 = por %p95, %p96
      %s99 = sadd.s32 %s98, 1
      %p102 = scmp.eq.s32.totalorder %s22, 1
      %p103 = scmp.ne.s32.totalorder %s98, %s100
      %p104 = scmp.eq.s32.totalorder %s22, 0
      %p105 = por %p103, %p104
      %p106 = scmp.ne.s32.totalorder %s98, %s100
      %p107 = scmp.eq.s32.totalorder %s27, 1
      %p108 = por %p106, %p107
      %p109 = scmp.ne.s32.totalorder %s100, %s101
      %p110 = scmp.eq.s32.totalorder %s27, 0
      %p111 = por %p109, %p110
      %p112 = scmp.ne.s32.totalorder %s100, %s101
      %p113 = scmp.eq.s32.totalorder %s28, 1
      %p114 = por %p112, %p113
      %p116 = scmp.ne.s32.totalorder %s101, %s115
      %p117 = scmp.eq.s32.totalorder %s28, 0
      %p118 = por %p116, %p117
      %s120 = sadd.s32 %s119, 1
      %p123 = scmp.eq.s32.totalorder %s22, 1
      %p124 = scmp.ne.s32.totalorder %s119, %s121
      %p125 = scmp.eq.s32.totalorder %s22, 0
      %p126 = por %p124, %p125
      %p127 = scmp.ne.s32.totalorder %s119, %s121
      %p128 = scmp.eq.s32.totalorder %s27, 1
      %p129 = por %p127, %p128
      %p130 = scmp.ne.s32.totalorder %s121, %s122
      %p131 = scmp.eq.s32.totalorder %s27, 0
      %p132 = por %p130, %p131
      %p133 = scmp.ne.s32.totalorder %s121, %s122
      %p134 = scmp.eq.s32.totalorder %s28, 1
      %p135 = por %p133, %p134
      %p137 = scmp.ne.s32.totalorder %s122, %s136
      %p138 = scmp.eq.s32.totalorder %s28, 0
      %p139 = por %p137, %p138
      %s141 = sadd.s32 %s140, 1
      %p144 = scmp.eq.s32.totalorder %s22, 1
      %p145 = scmp.ne.s32.totalorder %s140, %s142
      %p146 = scmp.eq.s32.totalorder %s22, 0
      %p147 = por %p145, %p146
      %p148 = scmp.ne.s32.totalorder %s140, %s142
      %p149 = scmp.eq.s32.totalorder %s27, 1
      %p150 = por %p148, %p149
      %p151 = scmp.ne.s32.totalorder %s142, %s143
      %p152 = scmp.eq.s32.totalorder %s27, 0
      %p153 = por %p151, %p152
      %p154 = scmp.ne.s32.totalorder %s142, %s143
      %p155 = scmp.eq.s32.totalorder %s28, 1
      %p156 = por %p154, %p155
      %p158 = scmp.ne.s32.totalorder %s143, %s157
      %p159 = scmp.eq.s32.totalorder %s28, 0
      %p160 = por %p158, %p159
      %s162 = sadd.s32 %s161, 1
      %p165 = scmp.eq.s32.totalorder %s22, 1
      %p166 = scmp.ne.s32.totalorder %s161, %s163
      %p167 = scmp.eq.s32.totalorder %s22, 0
      %p168 = por %p166, %p167
      %p169 = scmp.ne.s32.totalorder %s161, %s163
      %p170 = scmp.eq.s32.totalorder %s27, 1
      %p171 = por %p169, %p170
      %p172 = scmp.ne.s32.totalorder %s163, %s164
      %p173 = scmp.eq.s32.totalorder %s27, 0
      %p174 = por %p172, %p173
      %p175 = scmp.ne.s32.totalorder %s163, %s164
      %p176 = scmp.eq.s32.totalorder %s28, 1
      %p177 = por %p175, %p176
      %p179 = scmp.ne.s32.totalorder %s164, %s178
      %p180 = scmp.eq.s32.totalorder %s28, 0
      %p181 = por %p179, %p180
      %s183 = sadd.s32 %s182, 1
      %p186 = scmp.eq.s32.totalorder %s22, 1
      %p187 = scmp.ne.s32.totalorder %s182, %s184
      %p188 = scmp.eq.s32.totalorder %s22, 0
      %p189 = por %p187, %p188
      %p190 = scmp.ne.s32.totalorder %s182, %s184
      %p191 = scmp.eq.s32.totalorder %s27, 1
      %p192 = por %p190, %p191
      %p193 = scmp.ne.s32.totalorder %s184, %s185
      %p194 = scmp.eq.s32.totalorder %s27, 0
      %p195 = por %p193, %p194
      %p196 = scmp.ne.s32.totalorder %s184, %s185
      %p197 = scmp.eq.s32.totalorder %s28, 1
      %p198 = por %p196, %p197
      %p200 = scmp.ne.s32.totalorder %s185, %s199
      %p201 = scmp.eq.s32.totalorder %s28, 0
      %p202 = por %p200, %p201
      %s204 = sadd.s32 %s203, 1
      %p207 = scmp.eq.s32.totalorder %s22, 1
      %p208 = scmp.ne.s32.totalorder %s203, %s205
      %p209 = scmp.eq.s32.totalorder %s22, 0
      %p210 = por %p208, %p209
      %p211 = scmp.ne.s32.totalorder %s203, %s205
      %p212 = scmp.eq.s32.totalorder %s27, 1
      %p213 = por %p211, %p212
      %p214 = scmp.ne.s32.totalorder %s205, %s206
      %p215 = scmp.eq.s32.totalorder %s27, 0
      %p216 = por %p214, %p215
      %p217 = scmp.ne.s32.totalorder %s205, %s206
      %p218 = scmp.eq.s32.totalorder %s28, 1
      %p219 = por %p217, %p218
      %p221 = scmp.ne.s32.totalorder %s206, %s220
      %p222 = scmp.eq.s32.totalorder %s28, 0
      %p223 = por %p221, %p222
      %s225 = sadd.s32 %s224, 1
      %p228 = scmp.eq.s32.totalorder %s22, 1
      %p229 = scmp.ne.s32.totalorder %s224, %s226
      %p230 = scmp.eq.s32.totalorder %s22, 0
      %p231 = por %p229, %p230
      %p232 = scmp.ne.s32.totalorder %s224, %s226
      %p233 = scmp.eq.s32.totalorder %s27, 1
      %p234 = por %p232, %p233
      %p235 = scmp.ne.s32.totalorder %s226, %s227
      %p236 = scmp.eq.s32.totalorder %s27, 0
      %p237 = por %p235, %p236
      %p238 = scmp.ne.s32.totalorder %s226, %s227
      %p239 = scmp.eq.s32.totalorder %s28, 1
      %p240 = por %p238, %p239
      %p242 = scmp.ne.s32.totalorder %s227, %s241
      %p243 = scmp.eq.s32.totalorder %s28, 0
      %p244 = por %p242, %p243
      %s246 = sadd.s32 %s245, 1
      %p249 = scmp.eq.s32.totalorder %s22, 1
      %p250 = scmp.ne.s32.totalorder %s245, %s247
      %p251 = scmp.eq.s32.totalorder %s22, 0
      %p252 = por %p250, %p251
      %p253 = scmp.ne.s32.totalorder %s245, %s247
      %p254 = scmp.eq.s32.totalorder %s27, 1
      %p255 = por %p253, %p254
      %p256 = scmp.ne.s32.totalorder %s247, %s248
      %p257 = scmp.eq.s32.totalorder %s27, 0
      %p258 = por %p256, %p257
      %p259 = scmp.ne.s32.totalorder %s247, %s248
      %p260 = scmp.eq.s32.totalorder %s28, 1
      %p261 = por %p259, %p260
      %p263 = scmp.ne.s32.totalorder %s248, %s262
      %p264 = scmp.eq.s32.totalorder %s28, 0
      %p265 = por %p263, %p264
      %s267 = sadd.s32 %s266, 1
      %p270 = scmp.eq.s32.totalorder %s22, 1
      %p271 = scmp.ne.s32.totalorder %s266, %s268
      %p272 = scmp.eq.s32.totalorder %s22, 0
      %p273 = por %p271, %p272
      %p274 = scmp.ne.s32.totalorder %s266, %s268
      %p275 = scmp.eq.s32.totalorder %s27, 1
      %p276 = por %p274, %p275
      %p277 = scmp.ne.s32.totalorder %s268, %s269
      %p278 = scmp.eq.s32.totalorder %s27, 0
      %p279 = por %p277, %p278
      %p280 = scmp.ne.s32.totalorder %s268, %s269
      %p281 = scmp.eq.s32.totalorder %s28, 1
      %p282 = por %p280, %p281
      %p284 = scmp.ne.s32.totalorder %s269, %s283
      %p285 = scmp.eq.s32.totalorder %s28, 0
      %p286 = por %p284, %p285
      %s288 = sadd.s32 %s287, 1
      %p291 = scmp.eq.s32.totalorder %s22, 1
      %p292 = scmp.ne.s32.totalorder %s287, %s289
      %p293 = scmp.eq.s32.totalorder %s22, 0
      %p294 = por %p292, %p293
      %p295 = scmp.ne.s32.totalorder %s287, %s289
      %p296 = scmp.eq.s32.totalorder %s27, 1
      %p297 = por %p295, %p296
      %p298 = scmp.ne.s32.totalorder %s289, %s290
      %p299 = scmp.eq.s32.totalorder %s27, 0
      %p300 = por %p298, %p299
      %p301 = scmp.ne.s32.totalorder %s289, %s290
      %p302 = scmp.eq.s32.totalorder %s28, 1
      %p303 = por %p301, %p302
      %p305 = scmp.ne.s32.totalorder %s290, %s304
      %p306 = scmp.eq.s32.totalorder %s28, 0
      %p307 = por %p305, %p306
      %s308 = ssub.s32 %s22, %s29
      %p309 = scmp.eq.s32.totalorder %s308, 0
      %s311 = sadd.s32 %s310, 1
      %s312 = scalar_select %p309, %s310, %s311
      %p315 = pneg %p309
      %p316 = scmp.eq.s32.totalorder %s22, 1
      %p317 = por %p315, %p316
      %p318 = scmp.ne.s32.totalorder %s310, %s313
      %p319 = scmp.eq.s32.totalorder %s22, 0
      %p320 = por %p318, %p319
      %p321 = scmp.ne.s32.totalorder %s310, %s313
      %p322 = scmp.eq.s32.totalorder %s27, 1
      %p323 = por %p321, %p322
      %p324 = scmp.ne.s32.totalorder %s313, %s314
      %p325 = scmp.eq.s32.totalorder %s27, 0
      %p326 = por %p324, %p325
      %p327 = scmp.ne.s32.totalorder %s313, %s314
      %p328 = scmp.eq.s32.totalorder %s28, 1
      %p329 = por %p327, %p328
      %p331 = scmp.ne.s32.totalorder %s314, %s330
      %p332 = scmp.eq.s32.totalorder %s28, 0
      %p333 = por %p331, %p332
      %p334 = scmp.le.s32.totalorder 1, %s22
      %p335 = scmp.lt.s32.totalorder %s22, 3
      %p336 = pnand %p334, %p335
      %p337 = pneg %p336
      // Predicated region
      $region9: #{transformer_block.1} parent=5 // pred_check
        _
      $region10: #{transformer_block.1} parent=5 // pred_check_branch
        %339 = sbr.rel (%p336) target = $region12
      $region11: #{transformer_block.1} parent=5 // pred_region
        %s340 = ssub.s32 %s22, 1
        // Predicated region
        $region13: #{transformer_block.1} parent=11 // pred_check
          %p341 = pneg %p69
        $region14: #{transformer_block.1} parent=11 // pred_check_branch
          %343 = sbr.rel (%p341) target = $region16
        $region15: #{transformer_block.1} parent=11 // pred_region
          _
        $region16: #{transformer_block.1} parent=11 // pred_fallthru
          _
        // Predicated region
        $region17: #{transformer_block.1} parent=11 // pred_check
          %p344 = pneg %p90
        $region18: #{transformer_block.1} parent=11 // pred_check_branch
          %346 = sbr.rel (%p344) target = $region20
        $region19: #{transformer_block.1} parent=11 // pred_region
          _
        $region20: #{transformer_block.1} parent=11 // pred_fallthru
          _
        // Predicated region
        $region21: #{transformer_block.1} parent=11 // pred_check
          %p347 = pneg %p111
        $region22: #{transformer_block.1} parent=11 // pred_check_branch
          %349 = sbr.rel (%p347) target = $region24
        $region23: #{transformer_block.1} parent=11 // pred_region
          _
        $region24: #{transformer_block.1} parent=11 // pred_fallthru
          _
        // Predicated region
        $region25: #{transformer_block.1} parent=11 // pred_check
          %p350 = pneg %p132
        $region26: #{transformer_block.1} parent=11 // pred_check_branch
          %352 = sbr.rel (%p350) target = $region28
        $region27: #{transformer_block.1} parent=11 // pred_region
          _
        $region28: #{transformer_block.1} parent=11 // pred_fallthru
          _
        // Predicated region
        $region29: #{transformer_block.1} parent=11 // pred_check
          %p353 = pneg %p153
        $region30: #{transformer_block.1} parent=11 // pred_check_branch
          %355 = sbr.rel (%p353) target = $region32
        $region31: #{transformer_block.1} parent=11 // pred_region
          _
        $region32: #{transformer_block.1} parent=11 // pred_fallthru
          _
        // Predicated region
        $region33: #{transformer_block.1} parent=11 // pred_check
          %p356 = pneg %p174
        $region34: #{transformer_block.1} parent=11 // pred_check_branch
          %358 = sbr.rel (%p356) target = $region36
        $region35: #{transformer_block.1} parent=11 // pred_region
          _
        $region36: #{transformer_block.1} parent=11 // pred_fallthru
          _
        // Predicated region
        $region37: #{transformer_block.1} parent=11 // pred_check
          %p359 = pneg %p195
        $region38: #{transformer_block.1} parent=11 // pred_check_branch
          %361 = sbr.rel (%p359) target = $region40
        $region39: #{transformer_block.1} parent=11 // pred_region
          _
        $region40: #{transformer_block.1} parent=11 // pred_fallthru
          _
        // Predicated region
        $region41: #{transformer_block.1} parent=11 // pred_check
          %p362 = pneg %p216
        $region42: #{transformer_block.1} parent=11 // pred_check_branch
          %364 = sbr.rel (%p362) target = $region44
        $region43: #{transformer_block.1} parent=11 // pred_region
          _
        $region44: #{transformer_block.1} parent=11 // pred_fallthru
          _
        // Predicated region
        $region45: #{transformer_block.1} parent=11 // pred_check
          %p365 = pneg %p237
        $region46: #{transformer_block.1} parent=11 // pred_check_branch
          %367 = sbr.rel (%p365) target = $region48
        $region47: #{transformer_block.1} parent=11 // pred_region
          _
        $region48: #{transformer_block.1} parent=11 // pred_fallthru
          _
        // Predicated region
        $region49: #{transformer_block.1} parent=11 // pred_check
          %p368 = pneg %p258
        $region50: #{transformer_block.1} parent=11 // pred_check_branch
          %370 = sbr.rel (%p368) target = $region52
        $region51: #{transformer_block.1} parent=11 // pred_region
          _
        $region52: #{transformer_block.1} parent=11 // pred_fallthru
          _
        // Predicated region
        $region53: #{transformer_block.1} parent=11 // pred_check
          %p371 = pneg %p279
        $region54: #{transformer_block.1} parent=11 // pred_check_branch
          %373 = sbr.rel (%p371) target = $region56
        $region55: #{transformer_block.1} parent=11 // pred_region
          _
        $region56: #{transformer_block.1} parent=11 // pred_fallthru
          _
        // Predicated region
        $region57: #{transformer_block.1} parent=11 // pred_check
          %p374 = pneg %p300
        $region58: #{transformer_block.1} parent=11 // pred_check_branch
          %376 = sbr.rel (%p374) target = $region60
        $region59: #{transformer_block.1} parent=11 // pred_region
          _
        $region60: #{transformer_block.1} parent=11 // pred_fallthru
          _
      $region12: #{transformer_block.1} parent=5 // pred_fallthru
        _
      %p377 = scmp.lt.s32.totalorder %s22, 2
      // Predicated region
      $region61: #{transformer_block.1} parent=5 // pred_check
        %p378 = pneg %p377
      $region62: #{transformer_block.1} parent=5 // pred_check_branch
        %380 = sbr.rel (%p378) target = $region64
      $region63: #{transformer_block.1} parent=5 // pred_region
        // Predicated region
        $region65: #{transformer_block.1} parent=63 // pred_check
          %p381 = pneg %p42
        $region66: #{transformer_block.1} parent=63 // pred_check_branch
          %383 = sbr.rel (%p381) target = $region68
        $region67: #{transformer_block.1} parent=63 // pred_region
          %p384 = scmp.lt.s32.totalorder %s22, 1
          %s385 = scalar_select %p384, %s22, 1
          %s386 = smul.addr %s385, 4
          %s387 = smul.addr %s386, 8
          %s388 = scalar_lea.vmem %s0, %s387
        $region68: #{transformer_block.1} parent=63 // pred_fallthru
          _
      $region64: #{transformer_block.1} parent=5 // pred_fallthru
        _
      %p389 = scmp.le.s32.totalorder 1, %s22
      %p390 = scmp.lt.s32.totalorder %s22, 3
      %p391 = pnand %p389, %p390
      %p392 = pneg %p391
      // Predicated region
      $region69: #{transformer_block.1} parent=5 // pred_check
        _
      $region70: #{transformer_block.1} parent=5 // pred_check_branch
        %394 = sbr.rel (%p391) target = $region72
      $region71: #{transformer_block.1} parent=5 // pred_region
        %s395 = ssub.s32 %s22, 1
        %p396 = scmp.lt.s32.totalorder %s27, 1
        %s397 = scalar_select %p396, %s27, 1
        %s398 = smul.addr %s397, 4
        %s399 = smul.addr %s398, 8
        %s400 = scalar_lea.vmem %s0, %s399
        %p401 = pneg %p48
        %p402 = pneg %p45
        %p403 = pneg %p69
        %p404 = pneg %p66
        %p405 = pneg %p90
        %p406 = pneg %p87
        %p407 = pneg %p111
        %p408 = pneg %p108
        %p409 = pneg %p132
        %p410 = pneg %p129
        %p411 = pneg %p153
        %p412 = pneg %p150
        %p413 = pneg %p174
        %p414 = pneg %p171
        %p415 = pneg %p195
        %p416 = pneg %p192
        %p417 = pneg %p216
        %p418 = pneg %p213
        %p419 = pneg %p237
        %p420 = pneg %p234
        %p421 = pneg %p258
        %p422 = pneg %p255
        %p423 = pneg %p279
        %p424 = pneg %p276
        %p425 = pneg %p300
        %p426 = pneg %p297
        %p427 = pneg %p326
        %p428 = pneg %p323
        %s429 = sand.u32 %s313, 1
        %s430 = scalar_lea.sflag [#allocation3], %s429
        %s431 = sand.u32 %s313, 1
        %s432 = smul.addr %s431, 32
        %s433 = scalar_lea.vmem [#allocation2], %s432
        %p434 = scmp.lt.s32.totalorder %s27, 1
        %s435 = scalar_select %p434, %s27, 1
        %s436 = smul.addr %s435, 4
        %s437 = smul.addr %s436, 8
        %s438 = scalar_lea.vmem %s0, %s437
        %v440 = vld [vmem:[%s438] sm:$0xff]
        %v441 = vld [vmem:[%s438 + $0x8] sm:$0xff]
        %v442 = vld [vmem:[%s438 + $0x10] sm:$0xff]
        %v443 = vld [vmem:[%s438 + $0x18] sm:$0xff]
        %v444 = vpack.c.bf16 %v442, %v440
        %v445 = vpack.c.bf16 %v443, %v441
        %v446 = vld [vmem:[%s1] sm:$0xff]
        %v447 = vld [vmem:[%s1 + $0x8] sm:$0xff]
        %v448 = vld [vmem:[%s1 + $0x10] sm:$0xff]
        %v449 = vld [vmem:[%s1 + $0x18] sm:$0xff]
        %v450 = vld [vmem:[%s1 + $0x20] sm:$0xff]
        %v451 = vld [vmem:[%s1 + $0x28] sm:$0xff]
        %v452 = vld [vmem:[%s1 + $0x30] sm:$0xff]
        %v453 = vld [vmem:[%s1 + $0x38] sm:$0xff]
        %v454 = vld [vmem:[%s1 + $0x40] sm:$0xff]
        %v455 = vld [vmem:[%s1 + $0x48] sm:$0xff]
        %v456 = vld [vmem:[%s1 + $0x50] sm:$0xff]
        %v457 = vld [vmem:[%s1 + $0x58] sm:$0xff]
        %v458 = vld [vmem:[%s1 + $0x60] sm:$0xff]
        %v459 = vld [vmem:[%s1 + $0x68] sm:$0xff]
        %v460 = vld [vmem:[%s1 + $0x70] sm:$0xff]
        %v461 = vld [vmem:[%s1 + $0x78] sm:$0xff]
        %v462 = vld [vmem:[%s1 + $0x80] sm:$0xff]
        %v463 = vld [vmem:[%s1 + $0x88] sm:$0xff]
        %v464 = vld [vmem:[%s1 + $0x90] sm:$0xff]
        %v465 = vld [vmem:[%s1 + $0x98] sm:$0xff]
        %v466 = vld [vmem:[%s1 + $0xa0] sm:$0xff]
        %v467 = vld [vmem:[%s1 + $0xa8] sm:$0xff]
        %v468 = vld [vmem:[%s1 + $0xb0] sm:$0xff]
        %v469 = vld [vmem:[%s1 + $0xb8] sm:$0xff]
        %v470 = vld [vmem:[%s1 + $0xc0] sm:$0xff]
        %v471 = vld [vmem:[%s1 + $0xc8] sm:$0xff]
        %v472 = vld [vmem:[%s1 + $0xd0] sm:$0xff]
        %v473 = vld [vmem:[%s1 + $0xd8] sm:$0xff]
        %v474 = vld [vmem:[%s1 + $0xe0] sm:$0xff]
        %v475 = vld [vmem:[%s1 + $0xe8] sm:$0xff]
        %v476 = vld [vmem:[%s1 + $0xf0] sm:$0xff]
        %v477 = vld [vmem:[%s1 + $0xf8] sm:$0xff]
        %v478 = vld [vmem:[%s1 + $0x100] sm:$0xff]
        %v479 = vld [vmem:[%s1 + $0x108] sm:$0xff]
        %v480 = vld [vmem:[%s1 + $0x110] sm:$0xff]
        %v481 = vld [vmem:[%s1 + $0x118] sm:$0xff]
        %v482 = vld [vmem:[%s1 + $0x120] sm:$0xff]
        %v483 = vld [vmem:[%s1 + $0x128] sm:$0xff]
        %v484 = vld [vmem:[%s1 + $0x130] sm:$0xff]
        %v485 = vld [vmem:[%s1 + $0x138] sm:$0xff]
        %v486 = vld [vmem:[%s1 + $0x140] sm:$0xff]
        %v487 = vld [vmem:[%s1 + $0x148] sm:$0xff]
        %v488 = vld [vmem:[%s1 + $0x150] sm:$0xff]
        %v489 = vld [vmem:[%s1 + $0x158] sm:$0xff]
        %v490 = vld [vmem:[%s1 + $0x160] sm:$0xff]
        %v491 = vld [vmem:[%s1 + $0x168] sm:$0xff]
        %v492 = vld [vmem:[%s1 + $0x170] sm:$0xff]
        %v493 = vld [vmem:[%s1 + $0x178] sm:$0xff]
        %v494 = vld [vmem:[%s1 + $0x180] sm:$0xff]
        %v495 = vld [vmem:[%s1 + $0x188] sm:$0xff]
        %v496 = vld [vmem:[%s1 + $0x190] sm:$0xff]
        %v497 = vld [vmem:[%s1 + $0x198] sm:$0xff]
        %v498 = vld [vmem:[%s1 + $0x1a0] sm:$0xff]
        %v499 = vld [vmem:[%s1 + $0x1a8] sm:$0xff]
        %v500 = vld [vmem:[%s1 + $0x1b0] sm:$0xff]
        %v501 = vld [vmem:[%s1 + $0x1b8] sm:$0xff]
        %v502 = vld [vmem:[%s1 + $0x1c0] sm:$0xff]
        %v503 = vld [vmem:[%s1 + $0x1c8] sm:$0xff]
        %v504 = vld [vmem:[%s1 + $0x1d0] sm:$0xff]
        %v505 = vld [vmem:[%s1 + $0x1d8] sm:$0xff]
        %v506 = vld [vmem:[%s1 + $0x1e0] sm:$0xff]
        %v507 = vld [vmem:[%s1 + $0x1e8] sm:$0xff]
        %v508 = vld [vmem:[%s1 + $0x1f0] sm:$0xff]
        %v509 = vld [vmem:[%s1 + $0x1f8] sm:$0xff]
        %v510 = vld [vmem:[%s1 + $0x200] sm:$0xff]
        %v511 = vld [vmem:[%s1 + $0x208] sm:$0xff]
        %v512 = vld [vmem:[%s1 + $0x210] sm:$0xff]
        %v513 = vld [vmem:[%s1 + $0x218] sm:$0xff]
        %v514 = vld [vmem:[%s1 + $0x220] sm:$0xff]
        %v515 = vld [vmem:[%s1 + $0x228] sm:$0xff]
        %v516 = vld [vmem:[%s1 + $0x230] sm:$0xff]
        %v517 = vld [vmem:[%s1 + $0x238] sm:$0xff]
        %v518 = vld [vmem:[%s1 + $0x240] sm:$0xff]
        %v519 = vld [vmem:[%s1 + $0x248] sm:$0xff]
        %v520 = vld [vmem:[%s1 + $0x250] sm:$0xff]
        %v521 = vld [vmem:[%s1 + $0x258] sm:$0xff]
        %v522 = vld [vmem:[%s1 + $0x260] sm:$0xff]
        %v523 = vld [vmem:[%s1 + $0x268] sm:$0xff]
        %v524 = vld [vmem:[%s1 + $0x270] sm:$0xff]
        %v525 = vld [vmem:[%s1 + $0x278] sm:$0xff]
        %v526 = vld [vmem:[%s1 + $0x280] sm:$0xff]
        %v527 = vld [vmem:[%s1 + $0x288] sm:$0xff]
        %v528 = vld [vmem:[%s1 + $0x290] sm:$0xff]
        %v529 = vld [vmem:[%s1 + $0x298] sm:$0xff]
        %v530 = vld [vmem:[%s1 + $0x2a0] sm:$0xff]
        %v531 = vld [vmem:[%s1 + $0x2a8] sm:$0xff]
        %v532 = vld [vmem:[%s1 + $0x2b0] sm:$0xff]
        %v533 = vld [vmem:[%s1 + $0x2b8] sm:$0xff]
        %v534 = vld [vmem:[%s1 + $0x2c0] sm:$0xff]
        %v535 = vld [vmem:[%s1 + $0x2c8] sm:$0xff]
        %v536 = vld [vmem:[%s1 + $0x2d0] sm:$0xff]
        %v537 = vld [vmem:[%s1 + $0x2d8] sm:$0xff]
        %v538 = vld [vmem:[%s1 + $0x2e0] sm:$0xff]
        %v539 = vld [vmem:[%s1 + $0x2e8] sm:$0xff]
        %v540 = vld [vmem:[%s1 + $0x2f0] sm:$0xff]
        %v541 = vld [vmem:[%s1 + $0x2f8] sm:$0xff]
        %v542 = vld [vmem:[%s2] sm:$0x3f]
        %v544 = vlaneseq
        %v545 = vshrl.u32 %v544, 7
        %v546 = vsub.s32 0, %v545
        %v547 = vrot.slane %v542, %v546
        %v548 = vlaneseq
        %v549 = vshrl.u32 %v548, 7
        %v550 = vsub.s32 1, %v549
        %v551 = vrot.slane %v542, %v550
        %v552 = vlaneseq
        %v553 = vshrl.u32 %v552, 7
        %v554 = vsub.s32 2, %v553
        %v555 = vrot.slane %v542, %v554
        %v556 = vlaneseq
        %v557 = vshrl.u32 %v556, 7
        %v558 = vsub.s32 3, %v557
        %v559 = vrot.slane %v542, %v558
        %v560 = vlaneseq
        %v561 = vshrl.u32 %v560, 7
        %v562 = vsub.s32 4, %v561
        %v563 = vrot.slane %v542, %v562
        %v564 = vlaneseq
        %v565 = vshrl.u32 %v564, 7
        %v566 = vsub.s32 5, %v565
        %v567 = vrot.slane %v542, %v566
        %v670 = vunpack.c.l.b16 %v446
        %v671 = vunpack.c.h.b16 %v446
        %v672 = vunpack.c.l.b16 %v447
        %v673 = vunpack.c.h.b16 %v447
        %v674 = vunpack.c.l.b16 %v448
        %v675 = vunpack.c.h.b16 %v448
        %v676 = vunpack.c.l.b16 %v449
        %v677 = vunpack.c.h.b16 %v449
        %v678 = vunpack.c.l.b16 %v450
        %v679 = vunpack.c.h.b16 %v450
        %v680 = vunpack.c.l.b16 %v451
        %v681 = vunpack.c.h.b16 %v451
        %v682 = vunpack.c.l.b16 %v452
        %v683 = vunpack.c.h.b16 %v452
        %v684 = vunpack.c.l.b16 %v453
        %v685 = vunpack.c.h.b16 %v453
        %v686 = vunpack.c.l.b16 %v454
        %v687 = vunpack.c.h.b16 %v454
        %v688 = vunpack.c.l.b16 %v455
        %v689 = vunpack.c.h.b16 %v455
        %v690 = vunpack.c.l.b16 %v456
        %v691 = vunpack.c.h.b16 %v456
        %v692 = vunpack.c.l.b16 %v457
        %v693 = vunpack.c.h.b16 %v457
        %v694 = vunpack.c.l.b16 %v458
        %v695 = vunpack.c.h.b16 %v458
        %v696 = vunpack.c.l.b16 %v459
        %v697 = vunpack.c.h.b16 %v459
        %v698 = vunpack.c.l.b16 %v460
        %v699 = vunpack.c.h.b16 %v460
        %v700 = vunpack.c.l.b16 %v461
        %v701 = vunpack.c.h.b16 %v461
        %v702 = vunpack.c.l.b16 %v462
        %v703 = vunpack.c.h.b16 %v462
        %v704 = vunpack.c.l.b16 %v463
        %v705 = vunpack.c.h.b16 %v463
        %v706 = vunpack.c.l.b16 %v464
        %v707 = vunpack.c.h.b16 %v464
        %v708 = vunpack.c.l.b16 %v465
        %v709 = vunpack.c.h.b16 %v465
        %v710 = vunpack.c.l.b16 %v466
        %v711 = vunpack.c.h.b16 %v466
        %v712 = vunpack.c.l.b16 %v467
        %v713 = vunpack.c.h.b16 %v467
        %v714 = vunpack.c.l.b16 %v468
        %v715 = vunpack.c.h.b16 %v468
        %v716 = vunpack.c.l.b16 %v469
        %v717 = vunpack.c.h.b16 %v469
        %v718 = vunpack.c.l.b16 %v470
        %v719 = vunpack.c.h.b16 %v470
        %v720 = vunpack.c.l.b16 %v471
        %v721 = vunpack.c.h.b16 %v471
        %v722 = vunpack.c.l.b16 %v472
        %v723 = vunpack.c.h.b16 %v472
        %v724 = vunpack.c.l.b16 %v473
        %v725 = vunpack.c.h.b16 %v473
        %v726 = vunpack.c.l.b16 %v474
        %v727 = vunpack.c.h.b16 %v474
        %v728 = vunpack.c.l.b16 %v475
        %v729 = vunpack.c.h.b16 %v475
        %v730 = vunpack.c.l.b16 %v476
        %v731 = vunpack.c.h.b16 %v476
        %v732 = vunpack.c.l.b16 %v477
        %v733 = vunpack.c.h.b16 %v477
        %v734 = vunpack.c.l.b16 %v478
        %v735 = vunpack.c.h.b16 %v478
        %v736 = vunpack.c.l.b16 %v479
        %v737 = vunpack.c.h.b16 %v479
        %v738 = vunpack.c.l.b16 %v480
        %v739 = vunpack.c.h.b16 %v480
        %v740 = vunpack.c.l.b16 %v481
        %v741 = vunpack.c.h.b16 %v481
        %v742 = vunpack.c.l.b16 %v482
        %v743 = vunpack.c.h.b16 %v482
        %v744 = vunpack.c.l.b16 %v483
        %v745 = vunpack.c.h.b16 %v483
        %v746 = vunpack.c.l.b16 %v484
        %v747 = vunpack.c.h.b16 %v484
        %v748 = vunpack.c.l.b16 %v485
        %v749 = vunpack.c.h.b16 %v485
        %v750 = vunpack.c.l.b16 %v486
        %v751 = vunpack.c.h.b16 %v486
        %v752 = vunpack.c.l.b16 %v487
        %v753 = vunpack.c.h.b16 %v487
        %v754 = vunpack.c.l.b16 %v488
        %v755 = vunpack.c.h.b16 %v488
        %v756 = vunpack.c.l.b16 %v489
        %v757 = vunpack.c.h.b16 %v489
        %v758 = vunpack.c.l.b16 %v490
        %v759 = vunpack.c.h.b16 %v490
        %v760 = vunpack.c.l.b16 %v491
        %v761 = vunpack.c.h.b16 %v491
        %v762 = vunpack.c.l.b16 %v492
        %v763 = vunpack.c.h.b16 %v492
        %v764 = vunpack.c.l.b16 %v493
        %v765 = vunpack.c.h.b16 %v493
        %v766 = vunpack.c.l.b16 %v494
        %v767 = vunpack.c.h.b16 %v494
        %v768 = vunpack.c.l.b16 %v495
        %v769 = vunpack.c.h.b16 %v495
        %v770 = vunpack.c.l.b16 %v496
        %v771 = vunpack.c.h.b16 %v496
        %v772 = vunpack.c.l.b16 %v497
        %v773 = vunpack.c.h.b16 %v497
        %v774 = vunpack.c.l.b16 %v498
        %v775 = vunpack.c.h.b16 %v498
        %v776 = vunpack.c.l.b16 %v499
        %v777 = vunpack.c.h.b16 %v499
        %v778 = vunpack.c.l.b16 %v500
        %v779 = vunpack.c.h.b16 %v500
        %v780 = vunpack.c.l.b16 %v501
        %v781 = vunpack.c.h.b16 %v501
        %v782 = vunpack.c.l.b16 %v502
        %v783 = vunpack.c.h.b16 %v502
        %v784 = vunpack.c.l.b16 %v503
        %v785 = vunpack.c.h.b16 %v503
        %v786 = vunpack.c.l.b16 %v504
        %v787 = vunpack.c.h.b16 %v504
        %v788 = vunpack.c.l.b16 %v505
        %v789 = vunpack.c.h.b16 %v505
        %v790 = vunpack.c.l.b16 %v506
        %v791 = vunpack.c.h.b16 %v506
        %v792 = vunpack.c.l.b16 %v507
        %v793 = vunpack.c.h.b16 %v507
        %v794 = vunpack.c.l.b16 %v508
        %v795 = vunpack.c.h.b16 %v508
        %v796 = vunpack.c.l.b16 %v509
        %v797 = vunpack.c.h.b16 %v509
        %v798 = vunpack.c.l.b16 %v510
        %v799 = vunpack.c.h.b16 %v510
        %v800 = vunpack.c.l.b16 %v511
        %v801 = vunpack.c.h.b16 %v511
        %v802 = vunpack.c.l.b16 %v512
        %v803 = vunpack.c.h.b16 %v512
        %v804 = vunpack.c.l.b16 %v513
        %v805 = vunpack.c.h.b16 %v513
        %v806 = vunpack.c.l.b16 %v514
        %v807 = vunpack.c.h.b16 %v514
        %v808 = vunpack.c.l.b16 %v515
        %v809 = vunpack.c.h.b16 %v515
        %v810 = vunpack.c.l.b16 %v516
        %v811 = vunpack.c.h.b16 %v516
        %v812 = vunpack.c.l.b16 %v517
        %v813 = vunpack.c.h.b16 %v517
        %v814 = vunpack.c.l.b16 %v518
        %v815 = vunpack.c.h.b16 %v518
        %v816 = vunpack.c.l.b16 %v519
        %v817 = vunpack.c.h.b16 %v519
        %v818 = vunpack.c.l.b16 %v520
        %v819 = vunpack.c.h.b16 %v520
        %v820 = vunpack.c.l.b16 %v521
        %v821 = vunpack.c.h.b16 %v521
        %v822 = vunpack.c.l.b16 %v522
        %v823 = vunpack.c.h.b16 %v522
        %v824 = vunpack.c.l.b16 %v523
        %v825 = vunpack.c.h.b16 %v523
        %v826 = vunpack.c.l.b16 %v524
        %v827 = vunpack.c.h.b16 %v524
        %v828 = vunpack.c.l.b16 %v525
        %v829 = vunpack.c.h.b16 %v525
        %v830 = vunpack.c.l.b16 %v526
        %v831 = vunpack.c.h.b16 %v526
        %v832 = vunpack.c.l.b16 %v527
        %v833 = vunpack.c.h.b16 %v527
        %v834 = vunpack.c.l.b16 %v528
        %v835 = vunpack.c.h.b16 %v528
        %v836 = vunpack.c.l.b16 %v529
        %v837 = vunpack.c.h.b16 %v529
        %v838 = vunpack.c.l.b16 %v530
        %v839 = vunpack.c.h.b16 %v530
        %v840 = vunpack.c.l.b16 %v531
        %v841 = vunpack.c.h.b16 %v531
        %v842 = vunpack.c.l.b16 %v532
        %v843 = vunpack.c.h.b16 %v532
        %v844 = vunpack.c.l.b16 %v533
        %v845 = vunpack.c.h.b16 %v533
        %v846 = vunpack.c.l.b16 %v534
        %v847 = vunpack.c.h.b16 %v534
        %v848 = vunpack.c.l.b16 %v535
        %v849 = vunpack.c.h.b16 %v535
        %v850 = vunpack.c.l.b16 %v536
        %v851 = vunpack.c.h.b16 %v536
        %v852 = vunpack.c.l.b16 %v537
        %v853 = vunpack.c.h.b16 %v537
        %v854 = vunpack.c.l.b16 %v538
        %v855 = vunpack.c.h.b16 %v538
        %v856 = vunpack.c.l.b16 %v539
        %v857 = vunpack.c.h.b16 %v539
        %v858 = vunpack.c.l.b16 %v540
        %v859 = vunpack.c.h.b16 %v540
        %v860 = vunpack.c.l.b16 %v541
        %v861 = vunpack.c.h.b16 %v541
        %v862 = vpack.c.b16 %v676, %v670
        %v863 = vpack.c.b16 %v677, %v671
        %v864 = vpack.c.b16 %v678, %v672
        %v865 = vpack.c.b16 %v679, %v673
        %v866 = vpack.c.b16 %v680, %v674
        %v867 = vpack.c.b16 %v681, %v675
        %v868 = vpack.c.b16 %v688, %v682
        %v869 = vpack.c.b16 %v689, %v683
        %v870 = vpack.c.b16 %v690, %v684
        %v871 = vpack.c.b16 %v691, %v685
        %v872 = vpack.c.b16 %v692, %v686
        %v873 = vpack.c.b16 %v693, %v687
        %v874 = vpack.c.b16 %v700, %v694
        %v875 = vpack.c.b16 %v701, %v695
        %v876 = vpack.c.b16 %v702, %v696
        %v877 = vpack.c.b16 %v703, %v697
        %v878 = vpack.c.b16 %v704, %v698
        %v879 = vpack.c.b16 %v705, %v699
        %v880 = vpack.c.b16 %v712, %v706
        %v881 = vpack.c.b16 %v713, %v707
        %v882 = vpack.c.b16 %v714, %v708
        %v883 = vpack.c.b16 %v715, %v709
        %v884 = vpack.c.b16 %v716, %v710
        %v885 = vpack.c.b16 %v717, %v711
        %v886 = vpack.c.b16 %v724, %v718
        %v887 = vpack.c.b16 %v725, %v719
        %v888 = vpack.c.b16 %v726, %v720
        %v889 = vpack.c.b16 %v727, %v721
        %v890 = vpack.c.b16 %v728, %v722
        %v891 = vpack.c.b16 %v729, %v723
        %v892 = vpack.c.b16 %v736, %v730
        %v893 = vpack.c.b16 %v737, %v731
        %v894 = vpack.c.b16 %v738, %v732
        %v895 = vpack.c.b16 %v739, %v733
        %v896 = vpack.c.b16 %v740, %v734
        %v897 = vpack.c.b16 %v741, %v735
        %v898 = vpack.c.b16 %v748, %v742
        %v899 = vpack.c.b16 %v749, %v743
        %v900 = vpack.c.b16 %v750, %v744
        %v901 = vpack.c.b16 %v751, %v745
        %v902 = vpack.c.b16 %v752, %v746
        %v903 = vpack.c.b16 %v753, %v747
        %v904 = vpack.c.b16 %v760, %v754
        %v905 = vpack.c.b16 %v761, %v755
        %v906 = vpack.c.b16 %v762, %v756
        %v907 = vpack.c.b16 %v763, %v757
        %v908 = vpack.c.b16 %v764, %v758
        %v909 = vpack.c.b16 %v765, %v759
        %v910 = vpack.c.b16 %v772, %v766
        %v911 = vpack.c.b16 %v773, %v767
        %v912 = vpack.c.b16 %v774, %v768
        %v913 = vpack.c.b16 %v775, %v769
        %v914 = vpack.c.b16 %v776, %v770
        %v915 = vpack.c.b16 %v777, %v771
        %v916 = vpack.c.b16 %v784, %v778
        %v917 = vpack.c.b16 %v785, %v779
        %v918 = vpack.c.b16 %v786, %v780
        %v919 = vpack.c.b16 %v787, %v781
        %v920 = vpack.c.b16 %v788, %v782
        %v921 = vpack.c.b16 %v789, %v783
        %v922 = vpack.c.b16 %v796, %v790
        %v923 = vpack.c.b16 %v797, %v791
        %v924 = vpack.c.b16 %v798, %v792
        %v925 = vpack.c.b16 %v799, %v793
        %v926 = vpack.c.b16 %v800, %v794
        %v927 = vpack.c.b16 %v801, %v795
        %v928 = vpack.c.b16 %v808, %v802
        %v929 = vpack.c.b16 %v809, %v803
        %v930 = vpack.c.b16 %v810, %v804
        %v931 = vpack.c.b16 %v811, %v805
        %v932 = vpack.c.b16 %v812, %v806
        %v933 = vpack.c.b16 %v813, %v807
        %v934 = vpack.c.b16 %v820, %v814
        %v935 = vpack.c.b16 %v821, %v815
        %v936 = vpack.c.b16 %v822, %v816
        %v937 = vpack.c.b16 %v823, %v817
        %v938 = vpack.c.b16 %v824, %v818
        %v939 = vpack.c.b16 %v825, %v819
        %v940 = vpack.c.b16 %v832, %v826
        %v941 = vpack.c.b16 %v833, %v827
        %v942 = vpack.c.b16 %v834, %v828
        %v943 = vpack.c.b16 %v835, %v829
        %v944 = vpack.c.b16 %v836, %v830
        %v945 = vpack.c.b16 %v837, %v831
        %v946 = vpack.c.b16 %v844, %v838
        %v947 = vpack.c.b16 %v845, %v839
        %v948 = vpack.c.b16 %v846, %v840
        %v949 = vpack.c.b16 %v847, %v841
        %v950 = vpack.c.b16 %v848, %v842
        %v951 = vpack.c.b16 %v849, %v843
        %v952 = vpack.c.b16 %v856, %v850
        %v953 = vpack.c.b16 %v857, %v851
        %v954 = vpack.c.b16 %v858, %v852
        %v955 = vpack.c.b16 %v859, %v853
        %v956 = vpack.c.b16 %v860, %v854
        %v957 = vpack.c.b16 %v861, %v855
        %1054 = vmatprep.subr.bf16.mxu0 %v863
        %1055 = vmatpush1.bf16.msra.mxu0 %v862
        %1056 = vmatprep.subr.bf16.mxu0 %v869
        %1057 = vmatpush1.bf16.msra.mxu0 %v868
        %1058 = vmatprep.subr.bf16.mxu0 %v875
        %1059 = vmatpush1.bf16.msra.mxu0 %v874
        %1060 = vmatprep.subr.bf16.mxu0 %v881
        %1061 = vmatpush1.bf16.msra.mxu0 %v880
        %1062 = vmatprep.subr.bf16.mxu0 %v887
        %1063 = vmatpush1.bf16.msra.mxu0 %v886
        %1064 = vmatprep.subr.bf16.mxu0 %v893
        %1065 = vmatpush1.bf16.msra.mxu0 %v892
        %1066 = vmatprep.subr.bf16.mxu0 %v899
        %1067 = vmatpush1.bf16.msra.mxu0 %v898
        %1068 = vmatprep.subr.bf16.mxu0 %v905
        %1069 = vmatpush1.bf16.msra.mxu0 %v904
        %1070 = vmatprep.subr.bf16.mxu0 %v911
        %1071 = vmatpush1.bf16.msra.mxu0 %v910
        %1072 = vmatprep.subr.bf16.mxu0 %v917
        %1073 = vmatpush1.bf16.msra.mxu0 %v916
        %1074 = vmatprep.subr.bf16.mxu0 %v923
        %1075 = vmatpush1.bf16.msra.mxu0 %v922
        %1076 = vmatprep.subr.bf16.mxu0 %v929
        %1077 = vmatpush1.bf16.msra.mxu0 %v928
        %1078 = vmatprep.subr.bf16.mxu0 %v935
        %1079 = vmatpush1.bf16.msra.mxu0 %v934
        %1080 = vmatprep.subr.bf16.mxu0 %v941
        %1081 = vmatpush1.bf16.msra.mxu0 %v940
        %1082 = vmatprep.subr.bf16.mxu0 %v947
        %1083 = vmatpush1.bf16.msra.mxu0 %v946
        %1084 = vmatprep.subr.bf16.mxu0 %v953
        %1085 = vmatpush1.bf16.msra.mxu0 %v952
        %1086 = vmatprep.mubr.bf16.mxu0 %v445
        %1087 = vmatmul.mubr.bf16.gmra.mrb[0].mxu0 %v444
        %v1088 = vpop.f32.mrb[0].mxu0
        %v1089 = vadd.f32 %v547, %v1088
        %v1090 = vpop.f32.mrb[0].mxu0
        %v1091 = vadd.f32 %v551, %v1090
        %v1092 = vpop.f32.mrb[0].mxu0
        %v1093 = vadd.f32 %v547, %v1092
        %v1094 = vpop.f32.mrb[0].mxu0
        %v1095 = vadd.f32 %v551, %v1094
        %1096 = vdwg.mxu0
        %1097 = vmatprep.subr.bf16.mxu0 %v865
        %1098 = vmatpush1.bf16.msra.mxu0 %v864
        %1099 = vmatprep.subr.bf16.mxu0 %v871
        %1100 = vmatpush1.bf16.msra.mxu0 %v870
        %1101 = vmatprep.subr.bf16.mxu0 %v877
        %1102 = vmatpush1.bf16.msra.mxu0 %v876
        %1103 = vmatprep.subr.bf16.mxu0 %v883
        %1104 = vmatpush1.bf16.msra.mxu0 %v882
        %1105 = vmatprep.subr.bf16.mxu0 %v889
        %1106 = vmatpush1.bf16.msra.mxu0 %v888
        %1107 = vmatprep.subr.bf16.mxu0 %v895
        %1108 = vmatpush1.bf16.msra.mxu0 %v894
        %1109 = vmatprep.subr.bf16.mxu0 %v901
        %1110 = vmatpush1.bf16.msra.mxu0 %v900
        %1111 = vmatprep.subr.bf16.mxu0 %v907
        %1112 = vmatpush1.bf16.msra.mxu0 %v906
        %1113 = vmatprep.subr.bf16.mxu0 %v913
        %1114 = vmatpush1.bf16.msra.mxu0 %v912
        %1115 = vmatprep.subr.bf16.mxu0 %v919
        %1116 = vmatpush1.bf16.msra.mxu0 %v918
        %1117 = vmatprep.subr.bf16.mxu0 %v925
        %1118 = vmatpush1.bf16.msra.mxu0 %v924
        %1119 = vmatprep.subr.bf16.mxu0 %v931
        %1120 = vmatpush1.bf16.msra.mxu0 %v930
        %1121 = vmatprep.subr.bf16.mxu0 %v937
        %1122 = vmatpush1.bf16.msra.mxu0 %v936
        %1123 = vmatprep.subr.bf16.mxu0 %v943
        %1124 = vmatpush1.bf16.msra.mxu0 %v942
        %1125 = vmatprep.subr.bf16.mxu0 %v949
        %1126 = vmatpush1.bf16.msra.mxu0 %v948
        %1127 = vmatprep.subr.bf16.mxu0 %v955
        %1128 = vmatpush1.bf16.msra.mxu0 %v954
        %1129 = vmatprep.mubr.bf16.mxu0 %v445
        %1130 = vmatmul.mubr.bf16.gmra.mrb[0].mxu0 %v444
        %v1131 = vpop.f32.mrb[0].mxu0
        %v1132 = vadd.f32 %v555, %v1131
        %v1133 = vpop.f32.mrb[0].mxu0
        %v1134 = vadd.f32 %v559, %v1133
        %v1135 = vpop.f32.mrb[0].mxu0
        %v1136 = vadd.f32 %v555, %v1135
        %v1137 = vpop.f32.mrb[0].mxu0
        %v1138 = vadd.f32 %v559, %v1137
        %1139 = vdwg.mxu0
        %1140 = vmatprep.subr.bf16.mxu0 %v867
        %1141 = vmatpush1.bf16.msra.mxu0 %v866
        %1142 = vmatprep.subr.bf16.mxu0 %v873
        %1143 = vmatpush1.bf16.msra.mxu0 %v872
        %1144 = vmatprep.subr.bf16.mxu0 %v879
        %1145 = vmatpush1.bf16.msra.mxu0 %v878
        %1146 = vmatprep.subr.bf16.mxu0 %v885
        %1147 = vmatpush1.bf16.msra.mxu0 %v884
        %1148 = vmatprep.subr.bf16.mxu0 %v891
        %1149 = vmatpush1.bf16.msra.mxu0 %v890
        %1150 = vmatprep.subr.bf16.mxu0 %v897
        %1151 = vmatpush1.bf16.msra.mxu0 %v896
        %1152 = vmatprep.subr.bf16.mxu0 %v903
        %1153 = vmatpush1.bf16.msra.mxu0 %v902
        %1154 = vmatprep.subr.bf16.mxu0 %v909
        %1155 = vmatpush1.bf16.msra.mxu0 %v908
        %1156 = vmatprep.subr.bf16.mxu0 %v915
        %1157 = vmatpush1.bf16.msra.mxu0 %v914
        %1158 = vmatprep.subr.bf16.mxu0 %v921
        %1159 = vmatpush1.bf16.msra.mxu0 %v920
        %1160 = vmatprep.subr.bf16.mxu0 %v927
        %1161 = vmatpush1.bf16.msra.mxu0 %v926
        %1162 = vmatprep.subr.bf16.mxu0 %v933
        %1163 = vmatpush1.bf16.msra.mxu0 %v932
        %1164 = vmatprep.subr.bf16.mxu0 %v939
        %1165 = vmatpush1.bf16.msra.mxu0 %v938
        %1166 = vmatprep.subr.bf16.mxu0 %v945
        %1167 = vmatpush1.bf16.msra.mxu0 %v944
        %1168 = vmatprep.subr.bf16.mxu0 %v951
        %1169 = vmatpush1.bf16.msra.mxu0 %v950
        %1170 = vmatprep.subr.bf16.mxu0 %v957
        %1171 = vmatpush1.bf16.msra.mxu0 %v956
        %1172 = vmatprep.mubr.bf16.mxu0 %v445
        %1173 = vmatmul.mubr.bf16.gmra.mrb[0].mxu0 %v444
        %v1174 = vpop.f32.mrb[0].mxu0
        %v1175 = vadd.f32 %v563, %v1174
        %v1176 = vpop.f32.mrb[0].mxu0
        %v1177 = vadd.f32 %v567, %v1176
        %v1178 = vpop.f32.mrb[0].mxu0
        %v1179 = vadd.f32 %v563, %v1178
        %v1180 = vpop.f32.mrb[0].mxu0
        %v1181 = vadd.f32 %v567, %v1180
        %1182 = vdwg.mxu0
        %v1183 = vpack.c.bf16 %v1093, %v1089
        %v1184 = vpack.c.bf16 %v1136, %v1132
        %v1185 = vpack.c.bf16 %v1179, %v1175
        %vm1186 = vcmask 261120
        %v1188 = vsel %vm1186, %v1183, 0
        %v1191 = vsel %vm1186, %v1184, 0
        %1193 = vmatprep.subr.bf16.mxu0 0
        %1194 = vmatpush1.bf16.xpose.msra.mxu0 %v1191
        %1195 = vmatprep.subr.bf16.mxu0 0
        %1196 = vmatpush1.bf16.xpose.msra.mxu0 0
        %1197 = vmatprep.subr.bf16.mxu0 0
        %1198 = vmatpush1.bf16.xpose.msra.mxu0 0
        %1199 = vmatprep.subr.bf16.mxu0 0
        %1200 = vmatpush1.bf16.xpose.msra.mxu0 0
        %1201 = vmatprep.subr.bf16.mxu0 0
        %1202 = vmatpush1.bf16.xpose.msra.mxu0 0
        %1203 = vmatprep.subr.bf16.mxu0 0
        %1204 = vmatpush1.bf16.xpose.msra.mxu0 0
        %1205 = vmatprep.subr.bf16.mxu0 0
        %1206 = vmatpush1.bf16.xpose.msra.mxu0 0
        %1207 = vmatprep.subr.bf16.mxu0 0
        %1208 = vmatpush1.bf16.xpose.msra.mxu0 0
        %1209 = vmatprep.subr.bf16.mxu0 0
        %1210 = vmatpush1.bf16.xpose.msra.mxu0 0
        %1211 = vmatprep.subr.bf16.mxu0 0
        %1212 = vmatpush1.bf16.xpose.msra.mxu0 0
        %1213 = vmatprep.subr.bf16.mxu0 0
        %1214 = vmatpush1.bf16.xpose.msra.mxu0 0
        %1215 = vmatprep.subr.bf16.mxu0 0
        %1216 = vmatpush1.bf16.xpose.msra.mxu0 0
        %1217 = vmatprep.subr.bf16.mxu0 0
        %1218 = vmatpush1.bf16.xpose.msra.mxu0 0
        %1219 = vmatprep.subr.bf16.mxu0 0
        %1220 = vmatpush1.bf16.xpose.msra.mxu0 0
        %1221 = vmatprep.subr.bf16.mxu0 0
        %1222 = vmatpush1.bf16.xpose.msra.mxu0 0
        %1223 = vmatprep.subr.bf16.mxu0 0
        %1224 = vmatpush1.bf16.xpose.msra.mxu0 0
        %1225 = vmatprep.mubr.bf16.mxu0 0
        %1226 = vmatmul.mubr.bf16.gmra.mrb[0].mxu0 %v1188
        %v1227 = vpop.f32.mrb[0].mxu0
        %v1228 = vadd.f32 0.0, %v1227
        %v1229 = vpop.f32.mrb[0].mxu0
        %v1230 = vpop.f32.mrb[0].mxu0
        %v1231 = vadd.f32 0.0, %v1230
        %v1232 = vpop.f32.mrb[0].mxu0
        %1233 = vdwg.mxu0
        %v1234 = vmul.f32 %v1228, 0.17677669
        %v1235 = vmul.f32 %v1231, 0.17677669
        %vm1236 = vcmask 130048
        %v1237 = vsel %vm1236, %v1234, -inf
        %1238 = vmax.xlane.f32.xlu0 %v1237
        %v1239 = vpop.xlane.xlu0 %1238
        %v1240 = vsel %vm1236, %v1235, -inf
        %1241 = vmax.xlane.f32.xlu0 %v1240
        %v1242 = vpop.xlane.xlu0 %1241
        %v1243 = vsub.f32 %v1234, %v1239
        %v1244 = vsub.f32 %v1235, %v1242
        %v1245 = vmul.f32 %v1243, 1.442695
        %v1246 = vpow.pop %v1245
        %v1247 = vmul.f32 %v1244, 1.442695
        %v1248 = vpow.pop %v1247
        %v1249 = vsel %vm1236, %v1246, 0.0
        %1250 = vadd.xlane.f32.xlu0 %v1249
        %v1251 = vpop.xlane.xlu0 %1250
        %v1252 = vsel %vm1236, %v1248, 0.0
        %1253 = vadd.xlane.f32.xlu0 %v1252
        %v1254 = vpop.xlane.xlu0 %1253
        %v1255 = vrcp.pop %v1251
        %v1256 = vmul.f32 %v1246, %v1255
        %v1257 = vrcp.pop %v1254
        %v1258 = vmul.f32 %v1248, %v1257
        %v1259 = vpack.c.bf16 %v1258, %v1256
        %v1261 = vsel %vm1236, %v1259, 0
        %1263 = vmatprep.subr.bf16.mxu0 0
        %1264 = vmatpush1.bf16.msra.mxu0 %v1185
        %1265 = vmatprep.subr.bf16.mxu0 0
        %1266 = vmatpush1.bf16.msra.mxu0 0
        %1267 = vmatprep.subr.bf16.mxu0 0
        %1268 = vmatpush1.bf16.msra.mxu0 0
        %1269 = vmatprep.subr.bf16.mxu0 0
        %1270 = vmatpush1.bf16.msra.mxu0 0
        %1271 = vmatprep.subr.bf16.mxu0 0
        %1272 = vmatpush1.bf16.msra.mxu0 0
        %1273 = vmatprep.subr.bf16.mxu0 0
        %1274 = vmatpush1.bf16.msra.mxu0 0
        %1275 = vmatprep.subr.bf16.mxu0 0
        %1276 = vmatpush1.bf16.msra.mxu0 0
        %1277 = vmatprep.subr.bf16.mxu0 0
        %1278 = vmatpush1.bf16.msra.mxu0 0
        %1279 = vmatprep.subr.bf16.mxu0 0
        %1280 = vmatpush1.bf16.msra.mxu0 0
        %1281 = vmatprep.subr.bf16.mxu0 0
        %1282 = vmatpush1.bf16.msra.mxu0 0
        %1283 = vmatprep.subr.bf16.mxu0 0
        %1284 = vmatpush1.bf16.msra.mxu0 0
        %1285 = vmatprep.subr.bf16.mxu0 0
        %1286 = vmatpush1.bf16.msra.mxu0 0
        %1287 = vmatprep.subr.bf16.mxu0 0
        %1288 = vmatpush1.bf16.msra.mxu0 0
        %1289 = vmatprep.subr.bf16.mxu0 0
        %1290 = vmatpush1.bf16.msra.mxu0 0
        %1291 = vmatprep.subr.bf16.mxu0 0
        %1292 = vmatpush1.bf16.msra.mxu0 0
        %1293 = vmatprep.subr.bf16.mxu0 0
        %1294 = vmatpush1.bf16.msra.mxu0 0
        %1295 = vmatprep.mubr.bf16.mxu0 0
        %1296 = vmatmul.mubr.bf16.gmra.mrb[0].mxu0 %v1261
        %v1297 = vpop.f32.mrb[0].mxu0
        %v1298 = vadd.f32 0.0, %v1297
        %v1299 = vpop.f32.mrb[0].mxu0
        %v1300 = vpop.f32.mrb[0].mxu0
        %v1301 = vadd.f32 0.0, %v1300
        %v1302 = vpop.f32.mrb[0].mxu0
        %1303 = vdwg.mxu0
        %1305 = vrot.lane.b32.xlu0 %v1183, 96
        %v1306 = vpop.permute.xlu0 %1305
        %1308 = vrot.lane.b32.xlu0 %v1184, 96
        %v1309 = vpop.permute.xlu0 %1308
        %v1311 = vsel %vm1186, %v1306, 0
        %v1314 = vsel %vm1186, %v1309, 0
        %1316 = vmatprep.subr.bf16.mxu0 0
        %1317 = vmatpush1.bf16.xpose.msra.mxu0 %v1314
        %1318 = vmatprep.subr.bf16.mxu0 0
        %1319 = vmatpush1.bf16.xpose.msra.mxu0 0
        %1320 = vmatprep.subr.bf16.mxu0 0
        %1321 = vmatpush1.bf16.xpose.msra.mxu0 0
        %1322 = vmatprep.subr.bf16.mxu0 0
        %1323 = vmatpush1.bf16.xpose.msra.mxu0 0
        %1324 = vmatprep.subr.bf16.mxu0 0
        %1325 = vmatpush1.bf16.xpose.msra.mxu0 0
        %1326 = vmatprep.subr.bf16.mxu0 0
        %1327 = vmatpush1.bf16.xpose.msra.mxu0 0
        %1328 = vmatprep.subr.bf16.mxu0 0
        %1329 = vmatpush1.bf16.xpose.msra.mxu0 0
        %1330 = vmatprep.subr.bf16.mxu0 0
        %1331 = vmatpush1.bf16.xpose.msra.mxu0 0
        %1332 = vmatprep.subr.bf16.mxu0 0
        %1333 = vmatpush1.bf16.xpose.msra.mxu0 0
        %1334 = vmatprep.subr.bf16.mxu0 0
        %1335 = vmatpush1.bf16.xpose.msra.mxu0 0
        %1336 = vmatprep.subr.bf16.mxu0 0
        %1337 = vmatpush1.bf16.xpose.msra.mxu0 0
        %1338 = vmatprep.subr.bf16.mxu0 0
        %1339 = vmatpush1.bf16.xpose.msra.mxu0 0
        %1340 = vmatprep.subr.bf16.mxu0 0
        %1341 = vmatpush1.bf16.xpose.msra.mxu0 0
        %1342 = vmatprep.subr.bf16.mxu0 0
        %1343 = vmatpush1.bf16.xpose.msra.mxu0 0
        %1344 = vmatprep.subr.bf16.mxu0 0
        %1345 = vmatpush1.bf16.xpose.msra.mxu0 0
        %1346 = vmatprep.subr.bf16.mxu0 0
        %1347 = vmatpush1.bf16.xpose.msra.mxu0 0
        %1348 = vmatprep.mubr.bf16.mxu0 0
        %1349 = vmatmul.mubr.bf16.gmra.mrb[0].mxu0 %v1311
        %v1350 = vpop.f32.mrb[0].mxu0
        %v1351 = vadd.f32 0.0, %v1350
        %v1352 = vpop.f32.mrb[0].mxu0
        %v1353 = vpop.f32.mrb[0].mxu0
        %v1354 = vadd.f32 0.0, %v1353
        %v1355 = vpop.f32.mrb[0].mxu0
        %1356 = vdwg.mxu0
        %v1357 = vmul.f32 %v1351, 0.17677669
        %v1358 = vmul.f32 %v1354, 0.17677669
        %v1359 = vsel %vm1236, %v1357, -inf
        %1360 = vmax.xlane.f32.xlu0 %v1359
        %v1361 = vpop.xlane.xlu0 %1360
        %v1362 = vsel %vm1236, %v1358, -inf
        %1363 = vmax.xlane.f32.xlu0 %v1362
        %v1364 = vpop.xlane.xlu0 %1363
        %v1365 = vsub.f32 %v1357, %v1361
        %v1366 = vsub.f32 %v1358, %v1364
        %v1367 = vmul.f32 %v1365, 1.442695
        %v1368 = vpow.pop %v1367
        %v1369 = vmul.f32 %v1366, 1.442695
        %v1370 = vpow.pop %v1369
        %v1371 = vsel %vm1236, %v1368, 0.0
        %1372 = vadd.xlane.f32.xlu0 %v1371
        %v1373 = vpop.xlane.xlu0 %1372
        %v1374 = vsel %vm1236, %v1370, 0.0
        %1375 = vadd.xlane.f32.xlu0 %v1374
        %v1376 = vpop.xlane.xlu0 %1375
        %v1377 = vrcp.pop %v1373
        %v1378 = vmul.f32 %v1368, %v1377
        %v1379 = vrcp.pop %v1376
        %v1380 = vmul.f32 %v1370, %v1379
        %v1381 = vpack.c.bf16 %v1380, %v1378
        %1383 = vrot.lane.b32.xlu0 %v1185, 96
        %v1384 = vpop.permute.xlu0 %1383
        %v1387 = vsel %vm1236, %v1381, 0
        %1389 = vmatprep.subr.bf16.mxu0 0
        %1390 = vmatpush1.bf16.msra.mxu0 %v1384
        %1391 = vmatprep.subr.bf16.mxu0 0
        %1392 = vmatpush1.bf16.msra.mxu0 0
        %1393 = vmatprep.subr.bf16.mxu0 0
        %1394 = vmatpush1.bf16.msra.mxu0 0
        %1395 = vmatprep.subr.bf16.mxu0 0
        %1396 = vmatpush1.bf16.msra.mxu0 0
        %1397 = vmatprep.subr.bf16.mxu0 0
        %1398 = vmatpush1.bf16.msra.mxu0 0
        %1399 = vmatprep.subr.bf16.mxu0 0
        %1400 = vmatpush1.bf16.msra.mxu0 0
        %1401 = vmatprep.subr.bf16.mxu0 0
        %1402 = vmatpush1.bf16.msra.mxu0 0
        %1403 = vmatprep.subr.bf16.mxu0 0
        %1404 = vmatpush1.bf16.msra.mxu0 0
        %1405 = vmatprep.subr.bf16.mxu0 0
        %1406 = vmatpush1.bf16.msra.mxu0 0
        %1407 = vmatprep.subr.bf16.mxu0 0
        %1408 = vmatpush1.bf16.msra.mxu0 0
        %1409 = vmatprep.subr.bf16.mxu0 0
        %1410 = vmatpush1.bf16.msra.mxu0 0
        %1411 = vmatprep.subr.bf16.mxu0 0
        %1412 = vmatpush1.bf16.msra.mxu0 0
        %1413 = vmatprep.subr.bf16.mxu0 0
        %1414 = vmatpush1.bf16.msra.mxu0 0
        %1415 = vmatprep.subr.bf16.mxu0 0
        %1416 = vmatpush1.bf16.msra.mxu0 0
        %1417 = vmatprep.subr.bf16.mxu0 0
        %1418 = vmatpush1.bf16.msra.mxu0 0
        %1419 = vmatprep.subr.bf16.mxu0 0
        %1420 = vmatpush1.bf16.msra.mxu0 0
        %1421 = vmatprep.mubr.bf16.mxu0 0
        %1422 = vmatmul.mubr.bf16.gmra.mrb[0].mxu0 %v1387
        %v1423 = vpop.f32.mrb[0].mxu0
        %v1424 = vadd.f32 0.0, %v1423
        %v1425 = vpop.f32.mrb[0].mxu0
        %v1426 = vpop.f32.mrb[0].mxu0
        %v1427 = vadd.f32 0.0, %v1426
        %v1428 = vpop.f32.mrb[0].mxu0
        %1429 = vdwg.mxu0
        %1430 = vrot.lane.b32.xlu0 %v1183, 64
        %v1431 = vpop.permute.xlu0 %1430
        %1432 = vrot.lane.b32.xlu0 %v1184, 64
        %v1433 = vpop.permute.xlu0 %1432
        %v1435 = vsel %vm1186, %v1431, 0
        %v1438 = vsel %vm1186, %v1433, 0
        %1440 = vmatprep.subr.bf16.mxu0 0
        %1441 = vmatpush1.bf16.xpose.msra.mxu0 %v1438
        %1442 = vmatprep.subr.bf16.mxu0 0
        %1443 = vmatpush1.bf16.xpose.msra.mxu0 0
        %1444 = vmatprep.subr.bf16.mxu0 0
        %1445 = vmatpush1.bf16.xpose.msra.mxu0 0
        %1446 = vmatprep.subr.bf16.mxu0 0
        %1447 = vmatpush1.bf16.xpose.msra.mxu0 0
        %1448 = vmatprep.subr.bf16.mxu0 0
        %1449 = vmatpush1.bf16.xpose.msra.mxu0 0
        %1450 = vmatprep.subr.bf16.mxu0 0
        %1451 = vmatpush1.bf16.xpose.msra.mxu0 0
        %1452 = vmatprep.subr.bf16.mxu0 0
        %1453 = vmatpush1.bf16.xpose.msra.mxu0 0
        %1454 = vmatprep.subr.bf16.mxu0 0
        %1455 = vmatpush1.bf16.xpose.msra.mxu0 0
        %1456 = vmatprep.subr.bf16.mxu0 0
        %1457 = vmatpush1.bf16.xpose.msra.mxu0 0
        %1458 = vmatprep.subr.bf16.mxu0 0
        %1459 = vmatpush1.bf16.xpose.msra.mxu0 0
        %1460 = vmatprep.subr.bf16.mxu0 0
        %1461 = vmatpush1.bf16.xpose.msra.mxu0 0
        %1462 = vmatprep.subr.bf16.mxu0 0
        %1463 = vmatpush1.bf16.xpose.msra.mxu0 0
        %1464 = vmatprep.subr.bf16.mxu0 0
        %1465 = vmatpush1.bf16.xpose.msra.mxu0 0
        %1466 = vmatprep.subr.bf16.mxu0 0
        %1467 = vmatpush1.bf16.xpose.msra.mxu0 0
        %1468 = vmatprep.subr.bf16.mxu0 0
        %1469 = vmatpush1.bf16.xpose.msra.mxu0 0
        %1470 = vmatprep.subr.bf16.mxu0 0
        %1471 = vmatpush1.bf16.xpose.msra.mxu0 0
        %1472 = vmatprep.mubr.bf16.mxu0 0
        %1473 = vmatmul.mubr.bf16.gmra.mrb[0].mxu0 %v1435
        %v1474 = vpop.f32.mrb[0].mxu0
        %v1475 = vadd.f32 0.0, %v1474
        %v1476 = vpop.f32.mrb[0].mxu0
        %v1477 = vpop.f32.mrb[0].mxu0
        %v1478 = vadd.f32 0.0, %v1477
        %v1479 = vpop.f32.mrb[0].mxu0
        %1480 = vdwg.mxu0
        %v1481 = vmul.f32 %v1475, 0.17677669
        %v1482 = vmul.f32 %v1478, 0.17677669
        %v1483 = vsel %vm1236, %v1481, -inf
        %1484 = vmax.xlane.f32.xlu0 %v1483
        %v1485 = vpop.xlane.xlu0 %1484
        %v1486 = vsel %vm1236, %v1482, -inf
        %1487 = vmax.xlane.f32.xlu0 %v1486
        %v1488 = vpop.xlane.xlu0 %1487
        %v1489 = vsub.f32 %v1481, %v1485
        %v1490 = vsub.f32 %v1482, %v1488
        %v1491 = vmul.f32 %v1489, 1.442695
        %v1492 = vpow.pop %v1491
        %v1493 = vmul.f32 %v1490, 1.442695
        %v1494 = vpow.pop %v1493
        %v1495 = vsel %vm1236, %v1492, 0.0
        %1496 = vadd.xlane.f32.xlu0 %v1495
        %v1497 = vpop.xlane.xlu0 %1496
        %v1498 = vsel %vm1236, %v1494, 0.0
        %1499 = vadd.xlane.f32.xlu0 %v1498
        %v1500 = vpop.xlane.xlu0 %1499
        %v1501 = vrcp.pop %v1497
        %v1502 = vmul.f32 %v1492, %v1501
        %v1503 = vrcp.pop %v1500
        %v1504 = vmul.f32 %v1494, %v1503
        %v1505 = vpack.c.bf16 %v1504, %v1502
        %1506 = vrot.lane.b32.xlu0 %v1185, 64
        %v1507 = vpop.permute.xlu0 %1506
        %v1510 = vsel %vm1236, %v1505, 0
        %1512 = vmatprep.subr.bf16.mxu0 0
        %1513 = vmatpush1.bf16.msra.mxu0 %v1507
        %1514 = vmatprep.subr.bf16.mxu0 0
        %1515 = vmatpush1.bf16.msra.mxu0 0
        %1516 = vmatprep.subr.bf16.mxu0 0
        %1517 = vmatpush1.bf16.msra.mxu0 0
        %1518 = vmatprep.subr.bf16.mxu0 0
        %1519 = vmatpush1.bf16.msra.mxu0 0
        %1520 = vmatprep.subr.bf16.mxu0 0
        %1521 = vmatpush1.bf16.msra.mxu0 0
        %1522 = vmatprep.subr.bf16.mxu0 0
        %1523 = vmatpush1.bf16.msra.mxu0 0
        %1524 = vmatprep.subr.bf16.mxu0 0
        %1525 = vmatpush1.bf16.msra.mxu0 0
        %1526 = vmatprep.subr.bf16.mxu0 0
        %1527 = vmatpush1.bf16.msra.mxu0 0
        %1528 = vmatprep.subr.bf16.mxu0 0
        %1529 = vmatpush1.bf16.msra.mxu0 0
        %1530 = vmatprep.subr.bf16.mxu0 0
        %1531 = vmatpush1.bf16.msra.mxu0 0
        %1532 = vmatprep.subr.bf16.mxu0 0
        %1533 = vmatpush1.bf16.msra.mxu0 0
        %1534 = vmatprep.subr.bf16.mxu0 0
        %1535 = vmatpush1.bf16.msra.mxu0 0
        %1536 = vmatprep.subr.bf16.mxu0 0
        %1537 = vmatpush1.bf16.msra.mxu0 0
        %1538 = vmatprep.subr.bf16.mxu0 0
        %1539 = vmatpush1.bf16.msra.mxu0 0
        %1540 = vmatprep.subr.bf16.mxu0 0
        %1541 = vmatpush1.bf16.msra.mxu0 0
        %1542 = vmatprep.subr.bf16.mxu0 0
        %1543 = vmatpush1.bf16.msra.mxu0 0
        %1544 = vmatprep.mubr.bf16.mxu0 0
        %1545 = vmatmul.mubr.bf16.gmra.mrb[0].mxu0 %v1510
        %v1546 = vpop.f32.mrb[0].mxu0
        %v1547 = vadd.f32 0.0, %v1546
        %v1548 = vpop.f32.mrb[0].mxu0
        %v1549 = vpop.f32.mrb[0].mxu0
        %v1550 = vadd.f32 0.0, %v1549
        %v1551 = vpop.f32.mrb[0].mxu0
        %1552 = vdwg.mxu0
        %1553 = vrot.lane.b32.xlu0 %v1183, 32
        %v1554 = vpop.permute.xlu0 %1553
        %1555 = vrot.lane.b32.xlu0 %v1184, 32
        %v1556 = vpop.permute.xlu0 %1555
        %v1558 = vsel %vm1186, %v1554, 0
        %v1561 = vsel %vm1186, %v1556, 0
        %1563 = vmatprep.subr.bf16.mxu0 0
        %1564 = vmatpush1.bf16.xpose.msra.mxu0 %v1561
        %1565 = vmatprep.subr.bf16.mxu0 0
        %1566 = vmatpush1.bf16.xpose.msra.mxu0 0
        %1567 = vmatprep.subr.bf16.mxu0 0
        %1568 = vmatpush1.bf16.xpose.msra.mxu0 0
        %1569 = vmatprep.subr.bf16.mxu0 0
        %1570 = vmatpush1.bf16.xpose.msra.mxu0 0
        %1571 = vmatprep.subr.bf16.mxu0 0
        %1572 = vmatpush1.bf16.xpose.msra.mxu0 0
        %1573 = vmatprep.subr.bf16.mxu0 0
        %1574 = vmatpush1.bf16.xpose.msra.mxu0 0
        %1575 = vmatprep.subr.bf16.mxu0 0
        %1576 = vmatpush1.bf16.xpose.msra.mxu0 0
        %1577 = vmatprep.subr.bf16.mxu0 0
        %1578 = vmatpush1.bf16.xpose.msra.mxu0 0
        %1579 = vmatprep.subr.bf16.mxu0 0
        %1580 = vmatpush1.bf16.xpose.msra.mxu0 0
        %1581 = vmatprep.subr.bf16.mxu0 0
        %1582 = vmatpush1.bf16.xpose.msra.mxu0 0
        %1583 = vmatprep.subr.bf16.mxu0 0
        %1584 = vmatpush1.bf16.xpose.msra.mxu0 0
        %1585 = vmatprep.subr.bf16.mxu0 0
        %1586 = vmatpush1.bf16.xpose.msra.mxu0 0
        %1587 = vmatprep.subr.bf16.mxu0 0
        %1588 = vmatpush1.bf16.xpose.msra.mxu0 0
        %1589 = vmatprep.subr.bf16.mxu0 0
        %1590 = vmatpush1.bf16.xpose.msra.mxu0 0
        %1591 = vmatprep.subr.bf16.mxu0 0
        %1592 = vmatpush1.bf16.xpose.msra.mxu0 0
        %1593 = vmatprep.subr.bf16.mxu0 0
        %1594 = vmatpush1.bf16.xpose.msra.mxu0 0
        %1595 = vmatprep.mubr.bf16.mxu0 0
        %1596 = vmatmul.mubr.bf16.gmra.mrb[0].mxu0 %v1558
        %v1597 = vpop.f32.mrb[0].mxu0
        %v1598 = vadd.f32 0.0, %v1597
        %v1599 = vpop.f32.mrb[0].mxu0
        %v1600 = vpop.f32.mrb[0].mxu0
        %v1601 = vadd.f32 0.0, %v1600
        %v1602 = vpop.f32.mrb[0].mxu0
        %1603 = vdwg.mxu0
        %v1604 = vmul.f32 %v1598, 0.17677669
        %v1605 = vmul.f32 %v1601, 0.17677669
        %v1606 = vsel %vm1236, %v1604, -inf
        %1607 = vmax.xlane.f32.xlu0 %v1606
        %v1608 = vpop.xlane.xlu0 %1607
        %v1609 = vsel %vm1236, %v1605, -inf
        %1610 = vmax.xlane.f32.xlu0 %v1609
        %v1611 = vpop.xlane.xlu0 %1610
        %v1612 = vsub.f32 %v1604, %v1608
        %v1613 = vsub.f32 %v1605, %v1611
        %v1614 = vmul.f32 %v1612, 1.442695
        %v1615 = vpow.pop %v1614
        %v1616 = vmul.f32 %v1613, 1.442695
        %v1617 = vpow.pop %v1616
        %v1618 = vsel %vm1236, %v1615, 0.0
        %1619 = vadd.xlane.f32.xlu0 %v1618
        %v1620 = vpop.xlane.xlu0 %1619
        %v1621 = vsel %vm1236, %v1617, 0.0
        %1622 = vadd.xlane.f32.xlu0 %v1621
        %v1623 = vpop.xlane.xlu0 %1622
        %v1624 = vrcp.pop %v1620
        %v1625 = vmul.f32 %v1615, %v1624
        %v1626 = vrcp.pop %v1623
        %v1627 = vmul.f32 %v1617, %v1626
        %v1628 = vpack.c.bf16 %v1627, %v1625
        %1629 = vrot.lane.b32.xlu0 %v1185, 32
        %v1630 = vpop.permute.xlu0 %1629
        %v1633 = vsel %vm1236, %v1628, 0
        %1635 = vmatprep.subr.bf16.mxu0 0
        %1636 = vmatpush1.bf16.msra.mxu0 %v1630
        %1637 = vmatprep.subr.bf16.mxu0 0
        %1638 = vmatpush1.bf16.msra.mxu0 0
        %1639 = vmatprep.subr.bf16.mxu0 0
        %1640 = vmatpush1.bf16.msra.mxu0 0
        %1641 = vmatprep.subr.bf16.mxu0 0
        %1642 = vmatpush1.bf16.msra.mxu0 0
        %1643 = vmatprep.subr.bf16.mxu0 0
        %1644 = vmatpush1.bf16.msra.mxu0 0
        %1645 = vmatprep.subr.bf16.mxu0 0
        %1646 = vmatpush1.bf16.msra.mxu0 0
        %1647 = vmatprep.subr.bf16.mxu0 0
        %1648 = vmatpush1.bf16.msra.mxu0 0
        %1649 = vmatprep.subr.bf16.mxu0 0
        %1650 = vmatpush1.bf16.msra.mxu0 0
        %1651 = vmatprep.subr.bf16.mxu0 0
        %1652 = vmatpush1.bf16.msra.mxu0 0
        %1653 = vmatprep.subr.bf16.mxu0 0
        %1654 = vmatpush1.bf16.msra.mxu0 0
        %1655 = vmatprep.subr.bf16.mxu0 0
        %1656 = vmatpush1.bf16.msra.mxu0 0
        %1657 = vmatprep.subr.bf16.mxu0 0
        %1658 = vmatpush1.bf16.msra.mxu0 0
        %1659 = vmatprep.subr.bf16.mxu0 0
        %1660 = vmatpush1.bf16.msra.mxu0 0
        %1661 = vmatprep.subr.bf16.mxu0 0
        %1662 = vmatpush1.bf16.msra.mxu0 0
        %1663 = vmatprep.subr.bf16.mxu0 0
        %1664 = vmatpush1.bf16.msra.mxu0 0
        %1665 = vmatprep.subr.bf16.mxu0 0
        %1666 = vmatpush1.bf16.msra.mxu0 0
        %1667 = vmatprep.mubr.bf16.mxu0 0
        %1668 = vmatmul.mubr.bf16.gmra.mrb[0].mxu0 %v1633
        %v1669 = vpop.f32.mrb[0].mxu0
        %v1670 = vadd.f32 0.0, %v1669
        %v1671 = vpop.f32.mrb[0].mxu0
        %v1672 = vpop.f32.mrb[0].mxu0
        %v1673 = vadd.f32 0.0, %v1672
        %v1674 = vpop.f32.mrb[0].mxu0
        %1675 = vdwg.mxu0
        %v1676 = vpack.c.bf16 %v1095, %v1091
        %v1677 = vpack.c.bf16 %v1138, %v1134
        %v1678 = vpack.c.bf16 %v1181, %v1177
        %v1680 = vsel %vm1186, %v1676, 0
        %v1683 = vsel %vm1186, %v1677, 0
        %1685 = vmatprep.subr.bf16.mxu0 0
        %1686 = vmatpush1.bf16.xpose.msra.mxu0 %v1683
        %1687 = vmatprep.subr.bf16.mxu0 0
        %1688 = vmatpush1.bf16.xpose.msra.mxu0 0
        %1689 = vmatprep.subr.bf16.mxu0 0
        %1690 = vmatpush1.bf16.xpose.msra.mxu0 0
        %1691 = vmatprep.subr.bf16.mxu0 0
        %1692 = vmatpush1.bf16.xpose.msra.mxu0 0
        %1693 = vmatprep.subr.bf16.mxu0 0
        %1694 = vmatpush1.bf16.xpose.msra.mxu0 0
        %1695 = vmatprep.subr.bf16.mxu0 0
        %1696 = vmatpush1.bf16.xpose.msra.mxu0 0
        %1697 = vmatprep.subr.bf16.mxu0 0
        %1698 = vmatpush1.bf16.xpose.msra.mxu0 0
        %1699 = vmatprep.subr.bf16.mxu0 0
        %1700 = vmatpush1.bf16.xpose.msra.mxu0 0
        %1701 = vmatprep.subr.bf16.mxu0 0
        %1702 = vmatpush1.bf16.xpose.msra.mxu0 0
        %1703 = vmatprep.subr.bf16.mxu0 0
        %1704 = vmatpush1.bf16.xpose.msra.mxu0 0
        %1705 = vmatprep.subr.bf16.mxu0 0
        %1706 = vmatpush1.bf16.xpose.msra.mxu0 0
        %1707 = vmatprep.subr.bf16.mxu0 0
        %1708 = vmatpush1.bf16.xpose.msra.mxu0 0
        %1709 = vmatprep.subr.bf16.mxu0 0
        %1710 = vmatpush1.bf16.xpose.msra.mxu0 0
        %1711 = vmatprep.subr.bf16.mxu0 0
        %1712 = vmatpush1.bf16.xpose.msra.mxu0 0
        %1713 = vmatprep.subr.bf16.mxu0 0
        %1714 = vmatpush1.bf16.xpose.msra.mxu0 0
        %1715 = vmatprep.subr.bf16.mxu0 0
        %1716 = vmatpush1.bf16.xpose.msra.mxu0 0
        %1717 = vmatprep.mubr.bf16.mxu0 0
        %1718 = vmatmul.mubr.bf16.gmra.mrb[0].mxu0 %v1680
        %v1719 = vpop.f32.mrb[0].mxu0
        %v1720 = vadd.f32 0.0, %v1719
        %v1721 = vpop.f32.mrb[0].mxu0
        %v1722 = vpop.f32.mrb[0].mxu0
        %v1723 = vadd.f32 0.0, %v1722
        %v1724 = vpop.f32.mrb[0].mxu0
        %1725 = vdwg.mxu0
        %v1726 = vmul.f32 %v1720, 0.17677669
        %v1727 = vmul.f32 %v1723, 0.17677669
        %v1728 = vsel %vm1236, %v1726, -inf
        %1729 = vmax.xlane.f32.xlu0 %v1728
        %v1730 = vpop.xlane.xlu0 %1729
        %v1731 = vsel %vm1236, %v1727, -inf
        %1732 = vmax.xlane.f32.xlu0 %v1731
        %v1733 = vpop.xlane.xlu0 %1732
        %v1734 = vsub.f32 %v1726, %v1730
        %v1735 = vsub.f32 %v1727, %v1733
        %v1736 = vmul.f32 %v1734, 1.442695
        %v1737 = vpow.pop %v1736
        %v1738 = vmul.f32 %v1735, 1.442695
        %v1739 = vpow.pop %v1738
        %v1740 = vsel %vm1236, %v1737, 0.0
        %1741 = vadd.xlane.f32.xlu0 %v1740
        %v1742 = vpop.xlane.xlu0 %1741
        %v1743 = vsel %vm1236, %v1739, 0.0
        %1744 = vadd.xlane.f32.xlu0 %v1743
        %v1745 = vpop.xlane.xlu0 %1744
        %v1746 = vrcp.pop %v1742
        %v1747 = vmul.f32 %v1737, %v1746
        %v1748 = vrcp.pop %v1745
        %v1749 = vmul.f32 %v1739, %v1748
        %v1750 = vpack.c.bf16 %v1749, %v1747
        %v1752 = vsel %vm1236, %v1750, 0
        %1754 = vmatprep.subr.bf16.mxu0 0
        %1755 = vmatpush1.bf16.msra.mxu0 %v1678
        %1756 = vmatprep.subr.bf16.mxu0 0
        %1757 = vmatpush1.bf16.msra.mxu0 0
        %1758 = vmatprep.subr.bf16.mxu0 0
        %1759 = vmatpush1.bf16.msra.mxu0 0
        %1760 = vmatprep.subr.bf16.mxu0 0
        %1761 = vmatpush1.bf16.msra.mxu0 0
        %1762 = vmatprep.subr.bf16.mxu0 0
        %1763 = vmatpush1.bf16.msra.mxu0 0
        %1764 = vmatprep.subr.bf16.mxu0 0
        %1765 = vmatpush1.bf16.msra.mxu0 0
        %1766 = vmatprep.subr.bf16.mxu0 0
        %1767 = vmatpush1.bf16.msra.mxu0 0
        %1768 = vmatprep.subr.bf16.mxu0 0
        %1769 = vmatpush1.bf16.msra.mxu0 0
        %1770 = vmatprep.subr.bf16.mxu0 0
        %1771 = vmatpush1.bf16.msra.mxu0 0
        %1772 = vmatprep.subr.bf16.mxu0 0
        %1773 = vmatpush1.bf16.msra.mxu0 0
        %1774 = vmatprep.subr.bf16.mxu0 0
        %1775 = vmatpush1.bf16.msra.mxu0 0
        %1776 = vmatprep.subr.bf16.mxu0 0
        %1777 = vmatpush1.bf16.msra.mxu0 0
        %1778 = vmatprep.subr.bf16.mxu0 0
        %1779 = vmatpush1.bf16.msra.mxu0 0
        %1780 = vmatprep.subr.bf16.mxu0 0
        %1781 = vmatpush1.bf16.msra.mxu0 0
        %1782 = vmatprep.subr.bf16.mxu0 0
        %1783 = vmatpush1.bf16.msra.mxu0 0
        %1784 = vmatprep.subr.bf16.mxu0 0
        %1785 = vmatpush1.bf16.msra.mxu0 0
        %1786 = vmatprep.mubr.bf16.mxu0 0
        %1787 = vmatmul.mubr.bf16.gmra.mrb[0].mxu0 %v1752
        %v1788 = vpop.f32.mrb[0].mxu0
        %v1789 = vadd.f32 0.0, %v1788
        %v1790 = vpop.f32.mrb[0].mxu0
        %v1791 = vpop.f32.mrb[0].mxu0
        %v1792 = vadd.f32 0.0, %v1791
        %v1793 = vpop.f32.mrb[0].mxu0
        %1794 = vdwg.mxu0
        %1796 = vrot.lane.b32.xlu0 %v1676, 96
        %v1797 = vpop.permute.xlu0 %1796
        %1799 = vrot.lane.b32.xlu0 %v1677, 96
        %v1800 = vpop.permute.xlu0 %1799
        %v1802 = vsel %vm1186, %v1797, 0
        %v1805 = vsel %vm1186, %v1800, 0
        %1807 = vmatprep.subr.bf16.mxu0 0
        %1808 = vmatpush1.bf16.xpose.msra.mxu0 %v1805
        %1809 = vmatprep.subr.bf16.mxu0 0
        %1810 = vmatpush1.bf16.xpose.msra.mxu0 0
        %1811 = vmatprep.subr.bf16.mxu0 0
        %1812 = vmatpush1.bf16.xpose.msra.mxu0 0
        %1813 = vmatprep.subr.bf16.mxu0 0
        %1814 = vmatpush1.bf16.xpose.msra.mxu0 0
        %1815 = vmatprep.subr.bf16.mxu0 0
        %1816 = vmatpush1.bf16.xpose.msra.mxu0 0
        %1817 = vmatprep.subr.bf16.mxu0 0
        %1818 = vmatpush1.bf16.xpose.msra.mxu0 0
        %1819 = vmatprep.subr.bf16.mxu0 0
        %1820 = vmatpush1.bf16.xpose.msra.mxu0 0
        %1821 = vmatprep.subr.bf16.mxu0 0
        %1822 = vmatpush1.bf16.xpose.msra.mxu0 0
        %1823 = vmatprep.subr.bf16.mxu0 0
        %1824 = vmatpush1.bf16.xpose.msra.mxu0 0
        %1825 = vmatprep.subr.bf16.mxu0 0
        %1826 = vmatpush1.bf16.xpose.msra.mxu0 0
        %1827 = vmatprep.subr.bf16.mxu0 0
        %1828 = vmatpush1.bf16.xpose.msra.mxu0 0
        %1829 = vmatprep.subr.bf16.mxu0 0
        %1830 = vmatpush1.bf16.xpose.msra.mxu0 0
        %1831 = vmatprep.subr.bf16.mxu0 0
        %1832 = vmatpush1.bf16.xpose.msra.mxu0 0
        %1833 = vmatprep.subr.bf16.mxu0 0
        %1834 = vmatpush1.bf16.xpose.msra.mxu0 0
        %1835 = vmatprep.subr.bf16.mxu0 0
        %1836 = vmatpush1.bf16.xpose.msra.mxu0 0
        %1837 = vmatprep.subr.bf16.mxu0 0
        %1838 = vmatpush1.bf16.xpose.msra.mxu0 0
        %1839 = vmatprep.mubr.bf16.mxu0 0
        %1840 = vmatmul.mubr.bf16.gmra.mrb[0].mxu0 %v1802
        %v1841 = vpop.f32.mrb[0].mxu0
        %v1842 = vadd.f32 0.0, %v1841
        %v1843 = vpop.f32.mrb[0].mxu0
        %v1844 = vpop.f32.mrb[0].mxu0
        %v1845 = vadd.f32 0.0, %v1844
        %v1846 = vpop.f32.mrb[0].mxu0
        %1847 = vdwg.mxu0
        %v1848 = vmul.f32 %v1842, 0.17677669
        %v1849 = vmul.f32 %v1845, 0.17677669
        %v1850 = vsel %vm1236, %v1848, -inf
        %1851 = vmax.xlane.f32.xlu0 %v1850
        %v1852 = vpop.xlane.xlu0 %1851
        %v1853 = vsel %vm1236, %v1849, -inf
        %1854 = vmax.xlane.f32.xlu0 %v1853
        %v1855 = vpop.xlane.xlu0 %1854
        %v1856 = vsub.f32 %v1848, %v1852
        %v1857 = vsub.f32 %v1849, %v1855
        %v1858 = vmul.f32 %v1856, 1.442695
        %v1859 = vpow.pop %v1858
        %v1860 = vmul.f32 %v1857, 1.442695
        %v1861 = vpow.pop %v1860
        %v1862 = vsel %vm1236, %v1859, 0.0
        %1863 = vadd.xlane.f32.xlu0 %v1862
        %v1864 = vpop.xlane.xlu0 %1863
        %v1865 = vsel %vm1236, %v1861, 0.0
        %1866 = vadd.xlane.f32.xlu0 %v1865
        %v1867 = vpop.xlane.xlu0 %1866
        %v1868 = vrcp.pop %v1864
        %v1869 = vmul.f32 %v1859, %v1868
        %v1870 = vrcp.pop %v1867
        %v1871 = vmul.f32 %v1861, %v1870
        %v1872 = vpack.c.bf16 %v1871, %v1869
        %1874 = vrot.lane.b32.xlu0 %v1678, 96
        %v1875 = vpop.permute.xlu0 %1874
        %v1878 = vsel %vm1236, %v1872, 0
        %1880 = vmatprep.subr.bf16.mxu0 0
        %1881 = vmatpush1.bf16.msra.mxu0 %v1875
        %1882 = vmatprep.subr.bf16.mxu0 0
        %1883 = vmatpush1.bf16.msra.mxu0 0
        %1884 = vmatprep.subr.bf16.mxu0 0
        %1885 = vmatpush1.bf16.msra.mxu0 0
        %1886 = vmatprep.subr.bf16.mxu0 0
        %1887 = vmatpush1.bf16.msra.mxu0 0
        %1888 = vmatprep.subr.bf16.mxu0 0
        %1889 = vmatpush1.bf16.msra.mxu0 0
        %1890 = vmatprep.subr.bf16.mxu0 0
        %1891 = vmatpush1.bf16.msra.mxu0 0
        %1892 = vmatprep.subr.bf16.mxu0 0
        %1893 = vmatpush1.bf16.msra.mxu0 0
        %1894 = vmatprep.subr.bf16.mxu0 0
        %1895 = vmatpush1.bf16.msra.mxu0 0
        %1896 = vmatprep.subr.bf16.mxu0 0
        %1897 = vmatpush1.bf16.msra.mxu0 0
        %1898 = vmatprep.subr.bf16.mxu0 0
        %1899 = vmatpush1.bf16.msra.mxu0 0
        %1900 = vmatprep.subr.bf16.mxu0 0
        %1901 = vmatpush1.bf16.msra.mxu0 0
        %1902 = vmatprep.subr.bf16.mxu0 0
        %1903 = vmatpush1.bf16.msra.mxu0 0
        %1904 = vmatprep.subr.bf16.mxu0 0
        %1905 = vmatpush1.bf16.msra.mxu0 0
        %1906 = vmatprep.subr.bf16.mxu0 0
        %1907 = vmatpush1.bf16.msra.mxu0 0
        %1908 = vmatprep.subr.bf16.mxu0 0
        %1909 = vmatpush1.bf16.msra.mxu0 0
        %1910 = vmatprep.subr.bf16.mxu0 0
        %1911 = vmatpush1.bf16.msra.mxu0 0
        %1912 = vmatprep.mubr.bf16.mxu0 0
        %1913 = vmatmul.mubr.bf16.gmra.mrb[0].mxu0 %v1878
        %v1914 = vpop.f32.mrb[0].mxu0
        %v1915 = vadd.f32 0.0, %v1914
        %v1916 = vpop.f32.mrb[0].mxu0
        %v1917 = vpop.f32.mrb[0].mxu0
        %v1918 = vadd.f32 0.0, %v1917
        %v1919 = vpop.f32.mrb[0].mxu0
        %1920 = vdwg.mxu0
        %1921 = vrot.lane.b32.xlu0 %v1676, 64
        %v1922 = vpop.permute.xlu0 %1921
        %1923 = vrot.lane.b32.xlu0 %v1677, 64
        %v1924 = vpop.permute.xlu0 %1923
        %v1926 = vsel %vm1186, %v1922, 0
        %v1929 = vsel %vm1186, %v1924, 0
        %1931 = vmatprep.subr.bf16.mxu0 0
        %1932 = vmatpush1.bf16.xpose.msra.mxu0 %v1929
        %1933 = vmatprep.subr.bf16.mxu0 0
        %1934 = vmatpush1.bf16.xpose.msra.mxu0 0
        %1935 = vmatprep.subr.bf16.mxu0 0
        %1936 = vmatpush1.bf16.xpose.msra.mxu0 0
        %1937 = vmatprep.subr.bf16.mxu0 0
        %1938 = vmatpush1.bf16.xpose.msra.mxu0 0
        %1939 = vmatprep.subr.bf16.mxu0 0
        %1940 = vmatpush1.bf16.xpose.msra.mxu0 0
        %1941 = vmatprep.subr.bf16.mxu0 0
        %1942 = vmatpush1.bf16.xpose.msra.mxu0 0
        %1943 = vmatprep.subr.bf16.mxu0 0
        %1944 = vmatpush1.bf16.xpose.msra.mxu0 0
        %1945 = vmatprep.subr.bf16.mxu0 0
        %1946 = vmatpush1.bf16.xpose.msra.mxu0 0
        %1947 = vmatprep.subr.bf16.mxu0 0
        %1948 = vmatpush1.bf16.xpose.msra.mxu0 0
        %1949 = vmatprep.subr.bf16.mxu0 0
        %1950 = vmatpush1.bf16.xpose.msra.mxu0 0
        %1951 = vmatprep.subr.bf16.mxu0 0
        %1952 = vmatpush1.bf16.xpose.msra.mxu0 0
        %1953 = vmatprep.subr.bf16.mxu0 0
        %1954 = vmatpush1.bf16.xpose.msra.mxu0 0
        %1955 = vmatprep.subr.bf16.mxu0 0
        %1956 = vmatpush1.bf16.xpose.msra.mxu0 0
        %1957 = vmatprep.subr.bf16.mxu0 0
        %1958 = vmatpush1.bf16.xpose.msra.mxu0 0
        %1959 = vmatprep.subr.bf16.mxu0 0
        %1960 = vmatpush1.bf16.xpose.msra.mxu0 0
        %1961 = vmatprep.subr.bf16.mxu0 0
        %1962 = vmatpush1.bf16.xpose.msra.mxu0 0
        %1963 = vmatprep.mubr.bf16.mxu0 0
        %1964 = vmatmul.mubr.bf16.gmra.mrb[0].mxu0 %v1926
        %v1965 = vpop.f32.mrb[0].mxu0
        %v1966 = vadd.f32 0.0, %v1965
        %v1967 = vpop.f32.mrb[0].mxu0
        %v1968 = vpop.f32.mrb[0].mxu0
        %v1969 = vadd.f32 0.0, %v1968
        %v1970 = vpop.f32.mrb[0].mxu0
        %1971 = vdwg.mxu0
        %v1972 = vmul.f32 %v1966, 0.17677669
        %v1973 = vmul.f32 %v1969, 0.17677669
        %v1974 = vsel %vm1236, %v1972, -inf
        %1975 = vmax.xlane.f32.xlu0 %v1974
        %v1976 = vpop.xlane.xlu0 %1975
        %v1977 = vsel %vm1236, %v1973, -inf
        %1978 = vmax.xlane.f32.xlu0 %v1977
        %v1979 = vpop.xlane.xlu0 %1978
        %v1980 = vsub.f32 %v1972, %v1976
        %v1981 = vsub.f32 %v1973, %v1979
        %v1982 = vmul.f32 %v1980, 1.442695
        %v1983 = vpow.pop %v1982
        %v1984 = vmul.f32 %v1981, 1.442695
        %v1985 = vpow.pop %v1984
        %v1986 = vsel %vm1236, %v1983, 0.0
        %1987 = vadd.xlane.f32.xlu0 %v1986
        %v1988 = vpop.xlane.xlu0 %1987
        %v1989 = vsel %vm1236, %v1985, 0.0
        %1990 = vadd.xlane.f32.xlu0 %v1989
        %v1991 = vpop.xlane.xlu0 %1990
        %v1992 = vrcp.pop %v1988
        %v1993 = vmul.f32 %v1983, %v1992
        %v1994 = vrcp.pop %v1991
        %v1995 = vmul.f32 %v1985, %v1994
        %v1996 = vpack.c.bf16 %v1995, %v1993
        %1997 = vrot.lane.b32.xlu0 %v1678, 64
        %v1998 = vpop.permute.xlu0 %1997
        %v2001 = vsel %vm1236, %v1996, 0
        %2003 = vmatprep.subr.bf16.mxu0 0
        %2004 = vmatpush1.bf16.msra.mxu0 %v1998
        %2005 = vmatprep.subr.bf16.mxu0 0
        %2006 = vmatpush1.bf16.msra.mxu0 0
        %2007 = vmatprep.subr.bf16.mxu0 0
        %2008 = vmatpush1.bf16.msra.mxu0 0
        %2009 = vmatprep.subr.bf16.mxu0 0
        %2010 = vmatpush1.bf16.msra.mxu0 0
        %2011 = vmatprep.subr.bf16.mxu0 0
        %2012 = vmatpush1.bf16.msra.mxu0 0
        %2013 = vmatprep.subr.bf16.mxu0 0
        %2014 = vmatpush1.bf16.msra.mxu0 0
        %2015 = vmatprep.subr.bf16.mxu0 0
        %2016 = vmatpush1.bf16.msra.mxu0 0
        %2017 = vmatprep.subr.bf16.mxu0 0
        %2018 = vmatpush1.bf16.msra.mxu0 0
        %2019 = vmatprep.subr.bf16.mxu0 0
        %2020 = vmatpush1.bf16.msra.mxu0 0
        %2021 = vmatprep.subr.bf16.mxu0 0
        %2022 = vmatpush1.bf16.msra.mxu0 0
        %2023 = vmatprep.subr.bf16.mxu0 0
        %2024 = vmatpush1.bf16.msra.mxu0 0
        %2025 = vmatprep.subr.bf16.mxu0 0
        %2026 = vmatpush1.bf16.msra.mxu0 0
        %2027 = vmatprep.subr.bf16.mxu0 0
        %2028 = vmatpush1.bf16.msra.mxu0 0
        %2029 = vmatprep.subr.bf16.mxu0 0
        %2030 = vmatpush1.bf16.msra.mxu0 0
        %2031 = vmatprep.subr.bf16.mxu0 0
        %2032 = vmatpush1.bf16.msra.mxu0 0
        %2033 = vmatprep.subr.bf16.mxu0 0
        %2034 = vmatpush1.bf16.msra.mxu0 0
        %2035 = vmatprep.mubr.bf16.mxu0 0
        %2036 = vmatmul.mubr.bf16.gmra.mrb[0].mxu0 %v2001
        %v2037 = vpop.f32.mrb[0].mxu0
        %v2038 = vadd.f32 0.0, %v2037
        %v2039 = vpop.f32.mrb[0].mxu0
        %v2040 = vpop.f32.mrb[0].mxu0
        %v2041 = vadd.f32 0.0, %v2040
        %v2042 = vpop.f32.mrb[0].mxu0
        %2043 = vdwg.mxu0
        %2044 = vrot.lane.b32.xlu0 %v1676, 32
        %v2045 = vpop.permute.xlu0 %2044
        %2046 = vrot.lane.b32.xlu0 %v1677, 32
        %v2047 = vpop.permute.xlu0 %2046
        %v2049 = vsel %vm1186, %v2045, 0
        %v2052 = vsel %vm1186, %v2047, 0
        %2054 = vmatprep.subr.bf16.mxu0 0
        %2055 = vmatpush1.bf16.xpose.msra.mxu0 %v2052
        %2056 = vmatprep.subr.bf16.mxu0 0
        %2057 = vmatpush1.bf16.xpose.msra.mxu0 0
        %2058 = vmatprep.subr.bf16.mxu0 0
        %2059 = vmatpush1.bf16.xpose.msra.mxu0 0
        %2060 = vmatprep.subr.bf16.mxu0 0
        %2061 = vmatpush1.bf16.xpose.msra.mxu0 0
        %2062 = vmatprep.subr.bf16.mxu0 0
        %2063 = vmatpush1.bf16.xpose.msra.mxu0 0
        %2064 = vmatprep.subr.bf16.mxu0 0
        %2065 = vmatpush1.bf16.xpose.msra.mxu0 0
        %2066 = vmatprep.subr.bf16.mxu0 0
        %2067 = vmatpush1.bf16.xpose.msra.mxu0 0
        %2068 = vmatprep.subr.bf16.mxu0 0
        %2069 = vmatpush1.bf16.xpose.msra.mxu0 0
        %2070 = vmatprep.subr.bf16.mxu0 0
        %2071 = vmatpush1.bf16.xpose.msra.mxu0 0
        %2072 = vmatprep.subr.bf16.mxu0 0
        %2073 = vmatpush1.bf16.xpose.msra.mxu0 0
        %2074 = vmatprep.subr.bf16.mxu0 0
        %2075 = vmatpush1.bf16.xpose.msra.mxu0 0
        %2076 = vmatprep.subr.bf16.mxu0 0
        %2077 = vmatpush1.bf16.xpose.msra.mxu0 0
        %2078 = vmatprep.subr.bf16.mxu0 0
        %2079 = vmatpush1.bf16.xpose.msra.mxu0 0
        %2080 = vmatprep.subr.bf16.mxu0 0
        %2081 = vmatpush1.bf16.xpose.msra.mxu0 0
        %2082 = vmatprep.subr.bf16.mxu0 0
        %2083 = vmatpush1.bf16.xpose.msra.mxu0 0
        %2084 = vmatprep.subr.bf16.mxu0 0
        %2085 = vmatpush1.bf16.xpose.msra.mxu0 0
        %2086 = vmatprep.mubr.bf16.mxu0 0
        %2087 = vmatmul.mubr.bf16.gmra.mrb[0].mxu0 %v2049
        %v2088 = vpop.f32.mrb[0].mxu0
        %v2089 = vadd.f32 0.0, %v2088
        %v2090 = vpop.f32.mrb[0].mxu0
        %v2091 = vpop.f32.mrb[0].mxu0
        %v2092 = vadd.f32 0.0, %v2091
        %v2093 = vpop.f32.mrb[0].mxu0
        %2094 = vdwg.mxu0
        %v2095 = vmul.f32 %v2089, 0.17677669
        %v2096 = vmul.f32 %v2092, 0.17677669
        %v2097 = vsel %vm1236, %v2095, -inf
        %2098 = vmax.xlane.f32.xlu0 %v2097
        %v2099 = vpop.xlane.xlu0 %2098
        %v2100 = vsel %vm1236, %v2096, -inf
        %2101 = vmax.xlane.f32.xlu0 %v2100
        %v2102 = vpop.xlane.xlu0 %2101
        %v2103 = vsub.f32 %v2095, %v2099
        %v2104 = vsub.f32 %v2096, %v2102
        %v2105 = vmul.f32 %v2103, 1.442695
        %v2106 = vpow.pop %v2105
        %v2107 = vmul.f32 %v2104, 1.442695
        %v2108 = vpow.pop %v2107
        %v2109 = vsel %vm1236, %v2106, 0.0
        %2110 = vadd.xlane.f32.xlu0 %v2109
        %v2111 = vpop.xlane.xlu0 %2110
        %v2112 = vsel %vm1236, %v2108, 0.0
        %2113 = vadd.xlane.f32.xlu0 %v2112
        %v2114 = vpop.xlane.xlu0 %2113
        %v2115 = vrcp.pop %v2111
        %v2116 = vmul.f32 %v2106, %v2115
        %v2117 = vrcp.pop %v2114
        %v2118 = vmul.f32 %v2108, %v2117
        %v2119 = vpack.c.bf16 %v2118, %v2116
        %2120 = vrot.lane.b32.xlu0 %v1678, 32
        %v2121 = vpop.permute.xlu0 %2120
        %v2124 = vsel %vm1236, %v2119, 0
        %2126 = vmatprep.subr.bf16.mxu0 0
        %2127 = vmatpush1.bf16.msra.mxu0 %v2121
        %2128 = vmatprep.subr.bf16.mxu0 0
        %2129 = vmatpush1.bf16.msra.mxu0 0
        %2130 = vmatprep.subr.bf16.mxu0 0
        %2131 = vmatpush1.bf16.msra.mxu0 0
        %2132 = vmatprep.subr.bf16.mxu0 0
        %2133 = vmatpush1.bf16.msra.mxu0 0
        %2134 = vmatprep.subr.bf16.mxu0 0
        %2135 = vmatpush1.bf16.msra.mxu0 0
        %2136 = vmatprep.subr.bf16.mxu0 0
        %2137 = vmatpush1.bf16.msra.mxu0 0
        %2138 = vmatprep.subr.bf16.mxu0 0
        %2139 = vmatpush1.bf16.msra.mxu0 0
        %2140 = vmatprep.subr.bf16.mxu0 0
        %2141 = vmatpush1.bf16.msra.mxu0 0
        %2142 = vmatprep.subr.bf16.mxu0 0
        %2143 = vmatpush1.bf16.msra.mxu0 0
        %2144 = vmatprep.subr.bf16.mxu0 0
        %2145 = vmatpush1.bf16.msra.mxu0 0
        %2146 = vmatprep.subr.bf16.mxu0 0
        %2147 = vmatpush1.bf16.msra.mxu0 0
        %2148 = vmatprep.subr.bf16.mxu0 0
        %2149 = vmatpush1.bf16.msra.mxu0 0
        %2150 = vmatprep.subr.bf16.mxu0 0
        %2151 = vmatpush1.bf16.msra.mxu0 0
        %2152 = vmatprep.subr.bf16.mxu0 0
        %2153 = vmatpush1.bf16.msra.mxu0 0
        %2154 = vmatprep.subr.bf16.mxu0 0
        %2155 = vmatpush1.bf16.msra.mxu0 0
        %2156 = vmatprep.subr.bf16.mxu0 0
        %2157 = vmatpush1.bf16.msra.mxu0 0
        %2158 = vmatprep.mubr.bf16.mxu0 0
        %2159 = vmatmul.mubr.bf16.gmra.mrb[0].mxu0 %v2124
        %v2160 = vpop.f32.mrb[0].mxu0
        %v2161 = vadd.f32 0.0, %v2160
        %v2162 = vpop.f32.mrb[0].mxu0
        %v2163 = vpop.f32.mrb[0].mxu0
        %v2164 = vadd.f32 0.0, %v2163
        %v2165 = vpop.f32.mrb[0].mxu0
        %2166 = vdwg.mxu0
        %2169 = vrot.lane.b32.xlu0 %v1424, 32
        %v2170 = vpop.permute.xlu0 %2169
        %2171 = vrot.lane.b32.xlu0 %v1427, 32
        %v2172 = vpop.permute.xlu0 %2171
        %2177 = vrot.lane.b32.xlu0 %v1547, 64
        %v2178 = vpop.permute.xlu0 %2177
        %2179 = vrot.lane.b32.xlu0 %v1550, 64
        %v2180 = vpop.permute.xlu0 %2179
        %2185 = vrot.lane.b32.xlu0 %v1670, 96
        %v2186 = vpop.permute.xlu0 %2185
        %2187 = vrot.lane.b32.xlu0 %v1673, 96
        %v2188 = vpop.permute.xlu0 %2187
        %2193 = vrot.lane.b32.xlu0 %v1915, 32
        %v2194 = vpop.permute.xlu0 %2193
        %2195 = vrot.lane.b32.xlu0 %v1918, 32
        %v2196 = vpop.permute.xlu0 %2195
        %2201 = vrot.lane.b32.xlu0 %v2038, 64
        %v2202 = vpop.permute.xlu0 %2201
        %2203 = vrot.lane.b32.xlu0 %v2041, 64
        %v2204 = vpop.permute.xlu0 %2203
        %2209 = vrot.lane.b32.xlu0 %v2161, 96
        %v2210 = vpop.permute.xlu0 %2209
        %2211 = vrot.lane.b32.xlu0 %v2164, 96
        %v2212 = vpop.permute.xlu0 %2211
        %v2215 = vsel %vm1186, %v1298, %v2170
        %v2216 = vsel %vm1186, %v1301, %v2172
        %vm2217 = vcmask 523264
        %v2218 = vsel %vm2217, %v2215, %v2178
        %v2219 = vsel %vm2217, %v2216, %v2180
        %vm2220 = vcmask 785408
        %v2221 = vsel %vm2220, %v2218, %v2186
        %v2222 = vsel %vm2220, %v2219, %v2188
        %v2223 = vsel %vm1186, %v1789, %v2194
        %v2224 = vsel %vm1186, %v1792, %v2196
        %v2225 = vsel %vm2217, %v2223, %v2202
        %v2226 = vsel %vm2217, %v2224, %v2204
        %v2227 = vsel %vm2220, %v2225, %v2210
        %v2228 = vsel %vm2220, %v2226, %v2212
        %v2229 = vpack.c.bf16 %v2222, %v2221
        %v2230 = vpack.c.bf16 %v2228, %v2227
        %v2231 = vld [vmem:[%s3] sm:$0xff]
        %v2232 = vld [vmem:[%s3 + $0x8] sm:$0xff]
        %v2233 = vld [vmem:[%s3 + $0x10] sm:$0xff]
        %v2234 = vld [vmem:[%s3 + $0x18] sm:$0xff]
        %v2235 = vld [vmem:[%s3 + $0x20] sm:$0xff]
        %v2236 = vld [vmem:[%s3 + $0x28] sm:$0xff]
        %v2237 = vld [vmem:[%s3 + $0x30] sm:$0xff]
        %v2238 = vld [vmem:[%s3 + $0x38] sm:$0xff]
        %v2239 = vld [vmem:[%s3 + $0x40] sm:$0xff]
        %v2240 = vld [vmem:[%s3 + $0x48] sm:$0xff]
        %v2241 = vld [vmem:[%s3 + $0x50] sm:$0xff]
        %v2242 = vld [vmem:[%s3 + $0x58] sm:$0xff]
        %v2243 = vld [vmem:[%s3 + $0x60] sm:$0xff]
        %v2244 = vld [vmem:[%s3 + $0x68] sm:$0xff]
        %v2245 = vld [vmem:[%s3 + $0x70] sm:$0xff]
        %v2246 = vld [vmem:[%s3 + $0x78] sm:$0xff]
        %v2247 = vld [vmem:[%s3 + $0x80] sm:$0xff]
        %v2248 = vld [vmem:[%s3 + $0x88] sm:$0xff]
        %v2249 = vld [vmem:[%s3 + $0x90] sm:$0xff]
        %v2250 = vld [vmem:[%s3 + $0x98] sm:$0xff]
        %v2251 = vld [vmem:[%s3 + $0xa0] sm:$0xff]
        %v2252 = vld [vmem:[%s3 + $0xa8] sm:$0xff]
        %v2253 = vld [vmem:[%s3 + $0xb0] sm:$0xff]
        %v2254 = vld [vmem:[%s3 + $0xb8] sm:$0xff]
        %v2255 = vld [vmem:[%s3 + $0xc0] sm:$0xff]
        %v2256 = vld [vmem:[%s3 + $0xc8] sm:$0xff]
        %v2257 = vld [vmem:[%s3 + $0xd0] sm:$0xff]
        %v2258 = vld [vmem:[%s3 + $0xd8] sm:$0xff]
        %v2259 = vld [vmem:[%s3 + $0xe0] sm:$0xff]
        %v2260 = vld [vmem:[%s3 + $0xe8] sm:$0xff]
        %v2261 = vld [vmem:[%s3 + $0xf0] sm:$0xff]
        %v2262 = vld [vmem:[%s3 + $0xf8] sm:$0xff]
        %v2263 = vld [vmem:[%s4] sm:$0x3]
        %v2265 = vlaneseq
        %v2266 = vshrl.u32 %v2265, 7
        %v2267 = vsub.s32 0, %v2266
        %v2268 = vrot.slane %v2263, %v2267
        %v2269 = vlaneseq
        %v2270 = vshrl.u32 %v2269, 7
        %v2271 = vsub.s32 1, %v2270
        %v2272 = vrot.slane %v2263, %v2271
        %v2307 = vunpack.c.l.b16 %v2231
        %v2308 = vunpack.c.h.b16 %v2231
        %v2309 = vunpack.c.l.b16 %v2232
        %v2310 = vunpack.c.h.b16 %v2232
        %v2311 = vunpack.c.l.b16 %v2233
        %v2312 = vunpack.c.h.b16 %v2233
        %v2313 = vunpack.c.l.b16 %v2234
        %v2314 = vunpack.c.h.b16 %v2234
        %v2315 = vunpack.c.l.b16 %v2235
        %v2316 = vunpack.c.h.b16 %v2235
        %v2317 = vunpack.c.l.b16 %v2236
        %v2318 = vunpack.c.h.b16 %v2236
        %v2319 = vunpack.c.l.b16 %v2237
        %v2320 = vunpack.c.h.b16 %v2237
        %v2321 = vunpack.c.l.b16 %v2238
        %v2322 = vunpack.c.h.b16 %v2238
        %v2323 = vunpack.c.l.b16 %v2239
        %v2324 = vunpack.c.h.b16 %v2239
        %v2325 = vunpack.c.l.b16 %v2240
        %v2326 = vunpack.c.h.b16 %v2240
        %v2327 = vunpack.c.l.b16 %v2241
        %v2328 = vunpack.c.h.b16 %v2241
        %v2329 = vunpack.c.l.b16 %v2242
        %v2330 = vunpack.c.h.b16 %v2242
        %v2331 = vunpack.c.l.b16 %v2243
        %v2332 = vunpack.c.h.b16 %v2243
        %v2333 = vunpack.c.l.b16 %v2244
        %v2334 = vunpack.c.h.b16 %v2244
        %v2335 = vunpack.c.l.b16 %v2245
        %v2336 = vunpack.c.h.b16 %v2245
        %v2337 = vunpack.c.l.b16 %v2246
        %v2338 = vunpack.c.h.b16 %v2246
        %v2339 = vunpack.c.l.b16 %v2247
        %v2340 = vunpack.c.h.b16 %v2247
        %v2341 = vunpack.c.l.b16 %v2248
        %v2342 = vunpack.c.h.b16 %v2248
        %v2343 = vunpack.c.l.b16 %v2249
        %v2344 = vunpack.c.h.b16 %v2249
        %v2345 = vunpack.c.l.b16 %v2250
        %v2346 = vunpack.c.h.b16 %v2250
        %v2347 = vunpack.c.l.b16 %v2251
        %v2348 = vunpack.c.h.b16 %v2251
        %v2349 = vunpack.c.l.b16 %v2252
        %v2350 = vunpack.c.h.b16 %v2252
        %v2351 = vunpack.c.l.b16 %v2253
        %v2352 = vunpack.c.h.b16 %v2253
        %v2353 = vunpack.c.l.b16 %v2254
        %v2354 = vunpack.c.h.b16 %v2254
        %v2355 = vunpack.c.l.b16 %v2255
        %v2356 = vunpack.c.h.b16 %v2255
        %v2357 = vunpack.c.l.b16 %v2256
        %v2358 = vunpack.c.h.b16 %v2256
        %v2359 = vunpack.c.l.b16 %v2257
        %v2360 = vunpack.c.h.b16 %v2257
        %v2361 = vunpack.c.l.b16 %v2258
        %v2362 = vunpack.c.h.b16 %v2258
        %v2363 = vunpack.c.l.b16 %v2259
        %v2364 = vunpack.c.h.b16 %v2259
        %v2365 = vunpack.c.l.b16 %v2260
        %v2366 = vunpack.c.h.b16 %v2260
        %v2367 = vunpack.c.l.b16 %v2261
        %v2368 = vunpack.c.h.b16 %v2261
        %v2369 = vunpack.c.l.b16 %v2262
        %v2370 = vunpack.c.h.b16 %v2262
        %v2371 = vpack.c.b16 %v2309, %v2307
        %v2372 = vpack.c.b16 %v2310, %v2308
        %v2373 = vpack.c.b16 %v2313, %v2311
        %v2374 = vpack.c.b16 %v2314, %v2312
        %v2375 = vpack.c.b16 %v2317, %v2315
        %v2376 = vpack.c.b16 %v2318, %v2316
        %v2377 = vpack.c.b16 %v2321, %v2319
        %v2378 = vpack.c.b16 %v2322, %v2320
        %v2379 = vpack.c.b16 %v2325, %v2323
        %v2380 = vpack.c.b16 %v2326, %v2324
        %v2381 = vpack.c.b16 %v2329, %v2327
        %v2382 = vpack.c.b16 %v2330, %v2328
        %v2383 = vpack.c.b16 %v2333, %v2331
        %v2384 = vpack.c.b16 %v2334, %v2332
        %v2385 = vpack.c.b16 %v2337, %v2335
        %v2386 = vpack.c.b16 %v2338, %v2336
        %v2387 = vpack.c.b16 %v2341, %v2339
        %v2388 = vpack.c.b16 %v2342, %v2340
        %v2389 = vpack.c.b16 %v2345, %v2343
        %v2390 = vpack.c.b16 %v2346, %v2344
        %v2391 = vpack.c.b16 %v2349, %v2347
        %v2392 = vpack.c.b16 %v2350, %v2348
        %v2393 = vpack.c.b16 %v2353, %v2351
        %v2394 = vpack.c.b16 %v2354, %v2352
        %v2395 = vpack.c.b16 %v2357, %v2355
        %v2396 = vpack.c.b16 %v2358, %v2356
        %v2397 = vpack.c.b16 %v2361, %v2359
        %v2398 = vpack.c.b16 %v2362, %v2360
        %v2399 = vpack.c.b16 %v2365, %v2363
        %v2400 = vpack.c.b16 %v2366, %v2364
        %v2401 = vpack.c.b16 %v2369, %v2367
        %v2402 = vpack.c.b16 %v2370, %v2368
        %2435 = vmatprep.subr.bf16.mxu0 %v2372
        %2436 = vmatpush1.bf16.msra.mxu0 %v2371
        %2437 = vmatprep.subr.bf16.mxu0 %v2374
        %2438 = vmatpush1.bf16.msra.mxu0 %v2373
        %2439 = vmatprep.subr.bf16.mxu0 %v2376
        %2440 = vmatpush1.bf16.msra.mxu0 %v2375
        %2441 = vmatprep.subr.bf16.mxu0 %v2378
        %2442 = vmatpush1.bf16.msra.mxu0 %v2377
        %2443 = vmatprep.subr.bf16.mxu0 %v2380
        %2444 = vmatpush1.bf16.msra.mxu0 %v2379
        %2445 = vmatprep.subr.bf16.mxu0 %v2382
        %2446 = vmatpush1.bf16.msra.mxu0 %v2381
        %2447 = vmatprep.subr.bf16.mxu0 %v2384
        %2448 = vmatpush1.bf16.msra.mxu0 %v2383
        %2449 = vmatprep.subr.bf16.mxu0 %v2386
        %2450 = vmatpush1.bf16.msra.mxu0 %v2385
        %2451 = vmatprep.subr.bf16.mxu0 %v2388
        %2452 = vmatpush1.bf16.msra.mxu0 %v2387
        %2453 = vmatprep.subr.bf16.mxu0 %v2390
        %2454 = vmatpush1.bf16.msra.mxu0 %v2389
        %2455 = vmatprep.subr.bf16.mxu0 %v2392
        %2456 = vmatpush1.bf16.msra.mxu0 %v2391
        %2457 = vmatprep.subr.bf16.mxu0 %v2394
        %2458 = vmatpush1.bf16.msra.mxu0 %v2393
        %2459 = vmatprep.subr.bf16.mxu0 %v2396
        %2460 = vmatpush1.bf16.msra.mxu0 %v2395
        %2461 = vmatprep.subr.bf16.mxu0 %v2398
        %2462 = vmatpush1.bf16.msra.mxu0 %v2397
        %2463 = vmatprep.subr.bf16.mxu0 %v2400
        %2464 = vmatpush1.bf16.msra.mxu0 %v2399
        %2465 = vmatprep.subr.bf16.mxu0 %v2402
        %2466 = vmatpush1.bf16.msra.mxu0 %v2401
        %2467 = vmatprep.mubr.bf16.mxu0 %v2230
        %2468 = vmatmul.mubr.bf16.gmra.mrb[0].mxu0 %v2229
        %v2469 = vpop.f32.mrb[0].mxu0
        %v2470 = vadd.f32 %v2268, %v2469
        %v2471 = vpop.f32.mrb[0].mxu0
        %v2472 = vadd.f32 %v2272, %v2471
        %v2473 = vpop.f32.mrb[0].mxu0
        %v2474 = vadd.f32 %v2268, %v2473
        %v2475 = vpop.f32.mrb[0].mxu0
        %v2476 = vadd.f32 %v2272, %v2475
        %2477 = vdwg.mxu0
        %v2478 = vadd.f32 %v440, %v2470
        %v2479 = vadd.f32 %v441, %v2472
        %v2480 = vadd.f32 %v442, %v2474
        %v2481 = vadd.f32 %v443, %v2476
        %v2482 = vld [vmem:[%s5] sm:$0x3]
        %v2483 = vld [vmem:[%s6] sm:$0x3]
        %v2484 = vadd.f32 %v2478, %v2479
        %2485 = vadd.xlane.f32.xlu0 %v2484
        %v2486 = vpop.xlane.xlu0 %2485
        %v2487 = vadd.f32 %v2480, %v2481
        %2488 = vadd.xlane.f32.xlu0 %v2487
        %v2489 = vpop.xlane.xlu0 %2488
        %v2490 = vrcp.pop 256.0
        %v2491 = vmul.f32 %v2486, %v2490
        %v2492 = vmul.f32 %v2489, %v2490
        %v2493 = vsub.f32 %v2478, %v2491
        %v2494 = vsub.f32 %v2479, %v2491
        %v2495 = vsub.f32 %v2480, %v2492
        %v2496 = vsub.f32 %v2481, %v2492
        %v2497 = vmul.f32 %v2493, %v2493
        %v2498 = vmul.f32 %v2494, %v2494
        %v2499 = vmul.f32 %v2495, %v2495
        %v2500 = vmul.f32 %v2496, %v2496
        %v2501 = vadd.f32 %v2497, %v2498
        %2502 = vadd.xlane.f32.xlu0 %v2501
        %v2503 = vpop.xlane.xlu0 %2502
        %v2504 = vadd.f32 %v2499, %v2500
        %2505 = vadd.xlane.f32.xlu0 %v2504
        %v2506 = vpop.xlane.xlu0 %2505
        %v2507 = vmul.f32 %v2503, %v2490
        %v2508 = vmul.f32 %v2506, %v2490
        %v2509 = vadd.f32 %v2507, 1e-05
        %v2510 = vadd.f32 %v2508, 1e-05
        %v2511 = vrsqrt.pop %v2509
        %v2512 = vrsqrt.pop %v2510
        %v2513 = vmul.f32 %v2493, %v2511
        %v2514 = vmul.f32 %v2494, %v2511
        %v2515 = vmul.f32 %v2495, %v2512
        %v2516 = vmul.f32 %v2496, %v2512
        %v2518 = vlaneseq
        %v2519 = vshrl.u32 %v2518, 7
        %v2520 = vsub.s32 0, %v2519
        %v2521 = vrot.slane %v2482, %v2520
        %v2522 = vlaneseq
        %v2523 = vshrl.u32 %v2522, 7
        %v2524 = vsub.s32 1, %v2523
        %v2525 = vrot.slane %v2482, %v2524
        %v2528 = vmul.f32 %v2513, %v2521
        %v2529 = vmul.f32 %v2514, %v2525
        %v2530 = vmul.f32 %v2515, %v2521
        %v2531 = vmul.f32 %v2516, %v2525
        %v2533 = vlaneseq
        %v2534 = vshrl.u32 %v2533, 7
        %v2535 = vsub.s32 0, %v2534
        %v2536 = vrot.slane %v2483, %v2535
        %v2537 = vlaneseq
        %v2538 = vshrl.u32 %v2537, 7
        %v2539 = vsub.s32 1, %v2538
        %v2540 = vrot.slane %v2483, %v2539
        %v2543 = vadd.f32 %v2528, %v2536
        %v2544 = vadd.f32 %v2529, %v2540
        %v2545 = vadd.f32 %v2530, %v2536
        %v2546 = vadd.f32 %v2531, %v2540
        %v2547 = vpack.c.bf16 %v2545, %v2543
        %v2548 = vpack.c.bf16 %v2546, %v2544
        %v2549 = vld [vmem:[%s7] sm:$0xff]
        %v2550 = vld [vmem:[%s7 + $0x8] sm:$0xff]
        %v2551 = vld [vmem:[%s7 + $0x10] sm:$0xff]
        %v2552 = vld [vmem:[%s7 + $0x18] sm:$0xff]
        %v2553 = vld [vmem:[%s7 + $0x20] sm:$0xff]
        %v2554 = vld [vmem:[%s7 + $0x28] sm:$0xff]
        %v2555 = vld [vmem:[%s7 + $0x30] sm:$0xff]
        %v2556 = vld [vmem:[%s7 + $0x38] sm:$0xff]
        %v2557 = vld [vmem:[%s7 + $0x40] sm:$0xff]
        %v2558 = vld [vmem:[%s7 + $0x48] sm:$0xff]
        %v2559 = vld [vmem:[%s7 + $0x50] sm:$0xff]
        %v2560 = vld [vmem:[%s7 + $0x58] sm:$0xff]
        %v2561 = vld [vmem:[%s7 + $0x60] sm:$0xff]
        %v2562 = vld [vmem:[%s7 + $0x68] sm:$0xff]
        %v2563 = vld [vmem:[%s7 + $0x70] sm:$0xff]
        %v2564 = vld [vmem:[%s7 + $0x78] sm:$0xff]
        %v2565 = vld [vmem:[%s7 + $0x80] sm:$0xff]
        %v2566 = vld [vmem:[%s7 + $0x88] sm:$0xff]
        %v2567 = vld [vmem:[%s7 + $0x90] sm:$0xff]
        %v2568 = vld [vmem:[%s7 + $0x98] sm:$0xff]
        %v2569 = vld [vmem:[%s7 + $0xa0] sm:$0xff]
        %v2570 = vld [vmem:[%s7 + $0xa8] sm:$0xff]
        %v2571 = vld [vmem:[%s7 + $0xb0] sm:$0xff]
        %v2572 = vld [vmem:[%s7 + $0xb8] sm:$0xff]
        %v2573 = vld [vmem:[%s7 + $0xc0] sm:$0xff]
        %v2574 = vld [vmem:[%s7 + $0xc8] sm:$0xff]
        %v2575 = vld [vmem:[%s7 + $0xd0] sm:$0xff]
        %v2576 = vld [vmem:[%s7 + $0xd8] sm:$0xff]
        %v2577 = vld [vmem:[%s7 + $0xe0] sm:$0xff]
        %v2578 = vld [vmem:[%s7 + $0xe8] sm:$0xff]
        %v2579 = vld [vmem:[%s7 + $0xf0] sm:$0xff]
        %v2580 = vld [vmem:[%s7 + $0xf8] sm:$0xff]
        %v2581 = vld [vmem:[%s7 + $0x100] sm:$0xff]
        %v2582 = vld [vmem:[%s7 + $0x108] sm:$0xff]
        %v2583 = vld [vmem:[%s7 + $0x110] sm:$0xff]
        %v2584 = vld [vmem:[%s7 + $0x118] sm:$0xff]
        %v2585 = vld [vmem:[%s7 + $0x120] sm:$0xff]
        %v2586 = vld [vmem:[%s7 + $0x128] sm:$0xff]
        %v2587 = vld [vmem:[%s7 + $0x130] sm:$0xff]
        %v2588 = vld [vmem:[%s7 + $0x138] sm:$0xff]
        %v2589 = vld [vmem:[%s7 + $0x140] sm:$0xff]
        %v2590 = vld [vmem:[%s7 + $0x148] sm:$0xff]
        %v2591 = vld [vmem:[%s7 + $0x150] sm:$0xff]
        %v2592 = vld [vmem:[%s7 + $0x158] sm:$0xff]
        %v2593 = vld [vmem:[%s7 + $0x160] sm:$0xff]
        %v2594 = vld [vmem:[%s7 + $0x168] sm:$0xff]
        %v2595 = vld [vmem:[%s7 + $0x170] sm:$0xff]
        %v2596 = vld [vmem:[%s7 + $0x178] sm:$0xff]
        %v2597 = vld [vmem:[%s7 + $0x180] sm:$0xff]
        %v2598 = vld [vmem:[%s7 + $0x188] sm:$0xff]
        %v2599 = vld [vmem:[%s7 + $0x190] sm:$0xff]
        %v2600 = vld [vmem:[%s7 + $0x198] sm:$0xff]
        %v2601 = vld [vmem:[%s7 + $0x1a0] sm:$0xff]
        %v2602 = vld [vmem:[%s7 + $0x1a8] sm:$0xff]
        %v2603 = vld [vmem:[%s7 + $0x1b0] sm:$0xff]
        %v2604 = vld [vmem:[%s7 + $0x1b8] sm:$0xff]
        %v2605 = vld [vmem:[%s7 + $0x1c0] sm:$0xff]
        %v2606 = vld [vmem:[%s7 + $0x1c8] sm:$0xff]
        %v2607 = vld [vmem:[%s7 + $0x1d0] sm:$0xff]
        %v2608 = vld [vmem:[%s7 + $0x1d8] sm:$0xff]
        %v2609 = vld [vmem:[%s7 + $0x1e0] sm:$0xff]
        %v2610 = vld [vmem:[%s7 + $0x1e8] sm:$0xff]
        %v2611 = vld [vmem:[%s7 + $0x1f0] sm:$0xff]
        %v2612 = vld [vmem:[%s7 + $0x1f8] sm:$0xff]
        %v2613 = vld [vmem:[%s7 + $0x200] sm:$0xff]
        %v2614 = vld [vmem:[%s7 + $0x208] sm:$0xff]
        %v2615 = vld [vmem:[%s7 + $0x210] sm:$0xff]
        %v2616 = vld [vmem:[%s7 + $0x218] sm:$0xff]
        %v2617 = vld [vmem:[%s7 + $0x220] sm:$0xff]
        %v2618 = vld [vmem:[%s7 + $0x228] sm:$0xff]
        %v2619 = vld [vmem:[%s7 + $0x230] sm:$0xff]
        %v2620 = vld [vmem:[%s7 + $0x238] sm:$0xff]
        %v2621 = vld [vmem:[%s7 + $0x240] sm:$0xff]
        %v2622 = vld [vmem:[%s7 + $0x248] sm:$0xff]
        %v2623 = vld [vmem:[%s7 + $0x250] sm:$0xff]
        %v2624 = vld [vmem:[%s7 + $0x258] sm:$0xff]
        %v2625 = vld [vmem:[%s7 + $0x260] sm:$0xff]
        %v2626 = vld [vmem:[%s7 + $0x268] sm:$0xff]
        %v2627 = vld [vmem:[%s7 + $0x270] sm:$0xff]
        %v2628 = vld [vmem:[%s7 + $0x278] sm:$0xff]
        %v2629 = vld [vmem:[%s7 + $0x280] sm:$0xff]
        %v2630 = vld [vmem:[%s7 + $0x288] sm:$0xff]
        %v2631 = vld [vmem:[%s7 + $0x290] sm:$0xff]
        %v2632 = vld [vmem:[%s7 + $0x298] sm:$0xff]
        %v2633 = vld [vmem:[%s7 + $0x2a0] sm:$0xff]
        %v2634 = vld [vmem:[%s7 + $0x2a8] sm:$0xff]
        %v2635 = vld [vmem:[%s7 + $0x2b0] sm:$0xff]
        %v2636 = vld [vmem:[%s7 + $0x2b8] sm:$0xff]
        %v2637 = vld [vmem:[%s7 + $0x2c0] sm:$0xff]
        %v2638 = vld [vmem:[%s7 + $0x2c8] sm:$0xff]
        %v2639 = vld [vmem:[%s7 + $0x2d0] sm:$0xff]
        %v2640 = vld [vmem:[%s7 + $0x2d8] sm:$0xff]
        %v2641 = vld [vmem:[%s7 + $0x2e0] sm:$0xff]
        %v2642 = vld [vmem:[%s7 + $0x2e8] sm:$0xff]
        %v2643 = vld [vmem:[%s7 + $0x2f0] sm:$0xff]
        %v2644 = vld [vmem:[%s7 + $0x2f8] sm:$0xff]
        %v2645 = vld [vmem:[%s7 + $0x300] sm:$0xff]
        %v2646 = vld [vmem:[%s7 + $0x308] sm:$0xff]
        %v2647 = vld [vmem:[%s7 + $0x310] sm:$0xff]
        %v2648 = vld [vmem:[%s7 + $0x318] sm:$0xff]
        %v2649 = vld [vmem:[%s7 + $0x320] sm:$0xff]
        %v2650 = vld [vmem:[%s7 + $0x328] sm:$0xff]
        %v2651 = vld [vmem:[%s7 + $0x330] sm:$0xff]
        %v2652 = vld [vmem:[%s7 + $0x338] sm:$0xff]
        %v2653 = vld [vmem:[%s7 + $0x340] sm:$0xff]
        %v2654 = vld [vmem:[%s7 + $0x348] sm:$0xff]
        %v2655 = vld [vmem:[%s7 + $0x350] sm:$0xff]
        %v2656 = vld [vmem:[%s7 + $0x358] sm:$0xff]
        %v2657 = vld [vmem:[%s7 + $0x360] sm:$0xff]
        %v2658 = vld [vmem:[%s7 + $0x368] sm:$0xff]
        %v2659 = vld [vmem:[%s7 + $0x370] sm:$0xff]
        %v2660 = vld [vmem:[%s7 + $0x378] sm:$0xff]
        %v2661 = vld [vmem:[%s7 + $0x380] sm:$0xff]
        %v2662 = vld [vmem:[%s7 + $0x388] sm:$0xff]
        %v2663 = vld [vmem:[%s7 + $0x390] sm:$0xff]
        %v2664 = vld [vmem:[%s7 + $0x398] sm:$0xff]
        %v2665 = vld [vmem:[%s7 + $0x3a0] sm:$0xff]
        %v2666 = vld [vmem:[%s7 + $0x3a8] sm:$0xff]
        %v2667 = vld [vmem:[%s7 + $0x3b0] sm:$0xff]
        %v2668 = vld [vmem:[%s7 + $0x3b8] sm:$0xff]
        %v2669 = vld [vmem:[%s7 + $0x3c0] sm:$0xff]
        %v2670 = vld [vmem:[%s7 + $0x3c8] sm:$0xff]
        %v2671 = vld [vmem:[%s7 + $0x3d0] sm:$0xff]
        %v2672 = vld [vmem:[%s7 + $0x3d8] sm:$0xff]
        %v2673 = vld [vmem:[%s7 + $0x3e0] sm:$0xff]
        %v2674 = vld [vmem:[%s7 + $0x3e8] sm:$0xff]
        %v2675 = vld [vmem:[%s7 + $0x3f0] sm:$0xff]
        %v2676 = vld [vmem:[%s7 + $0x3f8] sm:$0xff]
        %v2677 = vld [vmem:[%s8] sm:$0xff]
        %v2679 = vlaneseq
        %v2680 = vshrl.u32 %v2679, 7
        %v2681 = vsub.s32 0, %v2680
        %v2682 = vrot.slane %v2677, %v2681
        %v2683 = vlaneseq
        %v2684 = vshrl.u32 %v2683, 7
        %v2685 = vsub.s32 1, %v2684
        %v2686 = vrot.slane %v2677, %v2685
        %v2687 = vlaneseq
        %v2688 = vshrl.u32 %v2687, 7
        %v2689 = vsub.s32 2, %v2688
        %v2690 = vrot.slane %v2677, %v2689
        %v2691 = vlaneseq
        %v2692 = vshrl.u32 %v2691, 7
        %v2693 = vsub.s32 3, %v2692
        %v2694 = vrot.slane %v2677, %v2693
        %v2695 = vlaneseq
        %v2696 = vshrl.u32 %v2695, 7
        %v2697 = vsub.s32 4, %v2696
        %v2698 = vrot.slane %v2677, %v2697
        %v2699 = vlaneseq
        %v2700 = vshrl.u32 %v2699, 7
        %v2701 = vsub.s32 5, %v2700
        %v2702 = vrot.slane %v2677, %v2701
        %v2703 = vlaneseq
        %v2704 = vshrl.u32 %v2703, 7
        %v2705 = vsub.s32 6, %v2704
        %v2706 = vrot.slane %v2677, %v2705
        %v2707 = vlaneseq
        %v2708 = vshrl.u32 %v2707, 7
        %v2709 = vsub.s32 7, %v2708
        %v2710 = vrot.slane %v2677, %v2709
        %v2847 = vunpack.c.l.b16 %v2549
        %v2848 = vunpack.c.h.b16 %v2549
        %v2849 = vunpack.c.l.b16 %v2550
        %v2850 = vunpack.c.h.b16 %v2550
        %v2851 = vunpack.c.l.b16 %v2551
        %v2852 = vunpack.c.h.b16 %v2551
        %v2853 = vunpack.c.l.b16 %v2552
        %v2854 = vunpack.c.h.b16 %v2552
        %v2855 = vunpack.c.l.b16 %v2553
        %v2856 = vunpack.c.h.b16 %v2553
        %v2857 = vunpack.c.l.b16 %v2554
        %v2858 = vunpack.c.h.b16 %v2554
        %v2859 = vunpack.c.l.b16 %v2555
        %v2860 = vunpack.c.h.b16 %v2555
        %v2861 = vunpack.c.l.b16 %v2556
        %v2862 = vunpack.c.h.b16 %v2556
        %v2863 = vunpack.c.l.b16 %v2557
        %v2864 = vunpack.c.h.b16 %v2557
        %v2865 = vunpack.c.l.b16 %v2558
        %v2866 = vunpack.c.h.b16 %v2558
        %v2867 = vunpack.c.l.b16 %v2559
        %v2868 = vunpack.c.h.b16 %v2559
        %v2869 = vunpack.c.l.b16 %v2560
        %v2870 = vunpack.c.h.b16 %v2560
        %v2871 = vunpack.c.l.b16 %v2561
        %v2872 = vunpack.c.h.b16 %v2561
        %v2873 = vunpack.c.l.b16 %v2562
        %v2874 = vunpack.c.h.b16 %v2562
        %v2875 = vunpack.c.l.b16 %v2563
        %v2876 = vunpack.c.h.b16 %v2563
        %v2877 = vunpack.c.l.b16 %v2564
        %v2878 = vunpack.c.h.b16 %v2564
        %v2879 = vunpack.c.l.b16 %v2565
        %v2880 = vunpack.c.h.b16 %v2565
        %v2881 = vunpack.c.l.b16 %v2566
        %v2882 = vunpack.c.h.b16 %v2566
        %v2883 = vunpack.c.l.b16 %v2567
        %v2884 = vunpack.c.h.b16 %v2567
        %v2885 = vunpack.c.l.b16 %v2568
        %v2886 = vunpack.c.h.b16 %v2568
        %v2887 = vunpack.c.l.b16 %v2569
        %v2888 = vunpack.c.h.b16 %v2569
        %v2889 = vunpack.c.l.b16 %v2570
        %v2890 = vunpack.c.h.b16 %v2570
        %v2891 = vunpack.c.l.b16 %v2571
        %v2892 = vunpack.c.h.b16 %v2571
        %v2893 = vunpack.c.l.b16 %v2572
        %v2894 = vunpack.c.h.b16 %v2572
        %v2895 = vunpack.c.l.b16 %v2573
        %v2896 = vunpack.c.h.b16 %v2573
        %v2897 = vunpack.c.l.b16 %v2574
        %v2898 = vunpack.c.h.b16 %v2574
        %v2899 = vunpack.c.l.b16 %v2575
        %v2900 = vunpack.c.h.b16 %v2575
        %v2901 = vunpack.c.l.b16 %v2576
        %v2902 = vunpack.c.h.b16 %v2576
        %v2903 = vunpack.c.l.b16 %v2577
        %v2904 = vunpack.c.h.b16 %v2577
        %v2905 = vunpack.c.l.b16 %v2578
        %v2906 = vunpack.c.h.b16 %v2578
        %v2907 = vunpack.c.l.b16 %v2579
        %v2908 = vunpack.c.h.b16 %v2579
        %v2909 = vunpack.c.l.b16 %v2580
        %v2910 = vunpack.c.h.b16 %v2580
        %v2911 = vunpack.c.l.b16 %v2581
        %v2912 = vunpack.c.h.b16 %v2581
        %v2913 = vunpack.c.l.b16 %v2582
        %v2914 = vunpack.c.h.b16 %v2582
        %v2915 = vunpack.c.l.b16 %v2583
        %v2916 = vunpack.c.h.b16 %v2583
        %v2917 = vunpack.c.l.b16 %v2584
        %v2918 = vunpack.c.h.b16 %v2584
        %v2919 = vunpack.c.l.b16 %v2585
        %v2920 = vunpack.c.h.b16 %v2585
        %v2921 = vunpack.c.l.b16 %v2586
        %v2922 = vunpack.c.h.b16 %v2586
        %v2923 = vunpack.c.l.b16 %v2587
        %v2924 = vunpack.c.h.b16 %v2587
        %v2925 = vunpack.c.l.b16 %v2588
        %v2926 = vunpack.c.h.b16 %v2588
        %v2927 = vunpack.c.l.b16 %v2589
        %v2928 = vunpack.c.h.b16 %v2589
        %v2929 = vunpack.c.l.b16 %v2590
        %v2930 = vunpack.c.h.b16 %v2590
        %v2931 = vunpack.c.l.b16 %v2591
        %v2932 = vunpack.c.h.b16 %v2591
        %v2933 = vunpack.c.l.b16 %v2592
        %v2934 = vunpack.c.h.b16 %v2592
        %v2935 = vunpack.c.l.b16 %v2593
        %v2936 = vunpack.c.h.b16 %v2593
        %v2937 = vunpack.c.l.b16 %v2594
        %v2938 = vunpack.c.h.b16 %v2594
        %v2939 = vunpack.c.l.b16 %v2595
        %v2940 = vunpack.c.h.b16 %v2595
        %v2941 = vunpack.c.l.b16 %v2596
        %v2942 = vunpack.c.h.b16 %v2596
        %v2943 = vunpack.c.l.b16 %v2597
        %v2944 = vunpack.c.h.b16 %v2597
        %v2945 = vunpack.c.l.b16 %v2598
        %v2946 = vunpack.c.h.b16 %v2598
        %v2947 = vunpack.c.l.b16 %v2599
        %v2948 = vunpack.c.h.b16 %v2599
        %v2949 = vunpack.c.l.b16 %v2600
        %v2950 = vunpack.c.h.b16 %v2600
        %v2951 = vunpack.c.l.b16 %v2601
        %v2952 = vunpack.c.h.b16 %v2601
        %v2953 = vunpack.c.l.b16 %v2602
        %v2954 = vunpack.c.h.b16 %v2602
        %v2955 = vunpack.c.l.b16 %v2603
        %v2956 = vunpack.c.h.b16 %v2603
        %v2957 = vunpack.c.l.b16 %v2604
        %v2958 = vunpack.c.h.b16 %v2604
        %v2959 = vunpack.c.l.b16 %v2605
        %v2960 = vunpack.c.h.b16 %v2605
        %v2961 = vunpack.c.l.b16 %v2606
        %v2962 = vunpack.c.h.b16 %v2606
        %v2963 = vunpack.c.l.b16 %v2607
        %v2964 = vunpack.c.h.b16 %v2607
        %v2965 = vunpack.c.l.b16 %v2608
        %v2966 = vunpack.c.h.b16 %v2608
        %v2967 = vunpack.c.l.b16 %v2609
        %v2968 = vunpack.c.h.b16 %v2609
        %v2969 = vunpack.c.l.b16 %v2610
        %v2970 = vunpack.c.h.b16 %v2610
        %v2971 = vunpack.c.l.b16 %v2611
        %v2972 = vunpack.c.h.b16 %v2611
        %v2973 = vunpack.c.l.b16 %v2612
        %v2974 = vunpack.c.h.b16 %v2612
        %v2975 = vunpack.c.l.b16 %v2613
        %v2976 = vunpack.c.h.b16 %v2613
        %v2977 = vunpack.c.l.b16 %v2614
        %v2978 = vunpack.c.h.b16 %v2614
        %v2979 = vunpack.c.l.b16 %v2615
        %v2980 = vunpack.c.h.b16 %v2615
        %v2981 = vunpack.c.l.b16 %v2616
        %v2982 = vunpack.c.h.b16 %v2616
        %v2983 = vunpack.c.l.b16 %v2617
        %v2984 = vunpack.c.h.b16 %v2617
        %v2985 = vunpack.c.l.b16 %v2618
        %v2986 = vunpack.c.h.b16 %v2618
        %v2987 = vunpack.c.l.b16 %v2619
        %v2988 = vunpack.c.h.b16 %v2619
        %v2989 = vunpack.c.l.b16 %v2620
        %v2990 = vunpack.c.h.b16 %v2620
        %v2991 = vunpack.c.l.b16 %v2621
        %v2992 = vunpack.c.h.b16 %v2621
        %v2993 = vunpack.c.l.b16 %v2622
        %v2994 = vunpack.c.h.b16 %v2622
        %v2995 = vunpack.c.l.b16 %v2623
        %v2996 = vunpack.c.h.b16 %v2623
        %v2997 = vunpack.c.l.b16 %v2624
        %v2998 = vunpack.c.h.b16 %v2624
        %v2999 = vunpack.c.l.b16 %v2625
        %v3000 = vunpack.c.h.b16 %v2625
        %v3001 = vunpack.c.l.b16 %v2626
        %v3002 = vunpack.c.h.b16 %v2626
        %v3003 = vunpack.c.l.b16 %v2627
        %v3004 = vunpack.c.h.b16 %v2627
        %v3005 = vunpack.c.l.b16 %v2628
        %v3006 = vunpack.c.h.b16 %v2628
        %v3007 = vunpack.c.l.b16 %v2629
        %v3008 = vunpack.c.h.b16 %v2629
        %v3009 = vunpack.c.l.b16 %v2630
        %v3010 = vunpack.c.h.b16 %v2630
        %v3011 = vunpack.c.l.b16 %v2631
        %v3012 = vunpack.c.h.b16 %v2631
        %v3013 = vunpack.c.l.b16 %v2632
        %v3014 = vunpack.c.h.b16 %v2632
        %v3015 = vunpack.c.l.b16 %v2633
        %v3016 = vunpack.c.h.b16 %v2633
        %v3017 = vunpack.c.l.b16 %v2634
        %v3018 = vunpack.c.h.b16 %v2634
        %v3019 = vunpack.c.l.b16 %v2635
        %v3020 = vunpack.c.h.b16 %v2635
        %v3021 = vunpack.c.l.b16 %v2636
        %v3022 = vunpack.c.h.b16 %v2636
        %v3023 = vunpack.c.l.b16 %v2637
        %v3024 = vunpack.c.h.b16 %v2637
        %v3025 = vunpack.c.l.b16 %v2638
        %v3026 = vunpack.c.h.b16 %v2638
        %v3027 = vunpack.c.l.b16 %v2639
        %v3028 = vunpack.c.h.b16 %v2639
        %v3029 = vunpack.c.l.b16 %v2640
        %v3030 = vunpack.c.h.b16 %v2640
        %v3031 = vunpack.c.l.b16 %v2641
        %v3032 = vunpack.c.h.b16 %v2641
        %v3033 = vunpack.c.l.b16 %v2642
        %v3034 = vunpack.c.h.b16 %v2642
        %v3035 = vunpack.c.l.b16 %v2643
        %v3036 = vunpack.c.h.b16 %v2643
        %v3037 = vunpack.c.l.b16 %v2644
        %v3038 = vunpack.c.h.b16 %v2644
        %v3039 = vunpack.c.l.b16 %v2645
        %v3040 = vunpack.c.h.b16 %v2645
        %v3041 = vunpack.c.l.b16 %v2646
        %v3042 = vunpack.c.h.b16 %v2646
        %v3043 = vunpack.c.l.b16 %v2647
        %v3044 = vunpack.c.h.b16 %v2647
        %v3045 = vunpack.c.l.b16 %v2648
        %v3046 = vunpack.c.h.b16 %v2648
        %v3047 = vunpack.c.l.b16 %v2649
        %v3048 = vunpack.c.h.b16 %v2649
        %v3049 = vunpack.c.l.b16 %v2650
        %v3050 = vunpack.c.h.b16 %v2650
        %v3051 = vunpack.c.l.b16 %v2651
        %v3052 = vunpack.c.h.b16 %v2651
        %v3053 = vunpack.c.l.b16 %v2652
        %v3054 = vunpack.c.h.b16 %v2652
        %v3055 = vunpack.c.l.b16 %v2653
        %v3056 = vunpack.c.h.b16 %v2653
        %v3057 = vunpack.c.l.b16 %v2654
        %v3058 = vunpack.c.h.b16 %v2654
        %v3059 = vunpack.c.l.b16 %v2655
        %v3060 = vunpack.c.h.b16 %v2655
        %v3061 = vunpack.c.l.b16 %v2656
        %v3062 = vunpack.c.h.b16 %v2656
        %v3063 = vunpack.c.l.b16 %v2657
        %v3064 = vunpack.c.h.b16 %v2657
        %v3065 = vunpack.c.l.b16 %v2658
        %v3066 = vunpack.c.h.b16 %v2658
        %v3067 = vunpack.c.l.b16 %v2659
        %v3068 = vunpack.c.h.b16 %v2659
        %v3069 = vunpack.c.l.b16 %v2660
        %v3070 = vunpack.c.h.b16 %v2660
        %v3071 = vunpack.c.l.b16 %v2661
        %v3072 = vunpack.c.h.b16 %v2661
        %v3073 = vunpack.c.l.b16 %v2662
        %v3074 = vunpack.c.h.b16 %v2662
        %v3075 = vunpack.c.l.b16 %v2663
        %v3076 = vunpack.c.h.b16 %v2663
        %v3077 = vunpack.c.l.b16 %v2664
        %v3078 = vunpack.c.h.b16 %v2664
        %v3079 = vunpack.c.l.b16 %v2665
        %v3080 = vunpack.c.h.b16 %v2665
        %v3081 = vunpack.c.l.b16 %v2666
        %v3082 = vunpack.c.h.b16 %v2666
        %v3083 = vunpack.c.l.b16 %v2667
        %v3084 = vunpack.c.h.b16 %v2667
        %v3085 = vunpack.c.l.b16 %v2668
        %v3086 = vunpack.c.h.b16 %v2668
        %v3087 = vunpack.c.l.b16 %v2669
        %v3088 = vunpack.c.h.b16 %v2669
        %v3089 = vunpack.c.l.b16 %v2670
        %v3090 = vunpack.c.h.b16 %v2670
        %v3091 = vunpack.c.l.b16 %v2671
        %v3092 = vunpack.c.h.b16 %v2671
        %v3093 = vunpack.c.l.b16 %v2672
        %v3094 = vunpack.c.h.b16 %v2672
        %v3095 = vunpack.c.l.b16 %v2673
        %v3096 = vunpack.c.h.b16 %v2673
        %v3097 = vunpack.c.l.b16 %v2674
        %v3098 = vunpack.c.h.b16 %v2674
        %v3099 = vunpack.c.l.b16 %v2675
        %v3100 = vunpack.c.h.b16 %v2675
        %v3101 = vunpack.c.l.b16 %v2676
        %v3102 = vunpack.c.h.b16 %v2676
        %v3103 = vpack.c.b16 %v2855, %v2847
        %v3104 = vpack.c.b16 %v2856, %v2848
        %v3105 = vpack.c.b16 %v2857, %v2849
        %v3106 = vpack.c.b16 %v2858, %v2850
        %v3107 = vpack.c.b16 %v2859, %v2851
        %v3108 = vpack.c.b16 %v2860, %v2852
        %v3109 = vpack.c.b16 %v2861, %v2853
        %v3110 = vpack.c.b16 %v2862, %v2854
        %v3111 = vpack.c.b16 %v2871, %v2863
        %v3112 = vpack.c.b16 %v2872, %v2864
        %v3113 = vpack.c.b16 %v2873, %v2865
        %v3114 = vpack.c.b16 %v2874, %v2866
        %v3115 = vpack.c.b16 %v2875, %v2867
        %v3116 = vpack.c.b16 %v2876, %v2868
        %v3117 = vpack.c.b16 %v2877, %v2869
        %v3118 = vpack.c.b16 %v2878, %v2870
        %v3119 = vpack.c.b16 %v2887, %v2879
        %v3120 = vpack.c.b16 %v2888, %v2880
        %v3121 = vpack.c.b16 %v2889, %v2881
        %v3122 = vpack.c.b16 %v2890, %v2882
        %v3123 = vpack.c.b16 %v2891, %v2883
        %v3124 = vpack.c.b16 %v2892, %v2884
        %v3125 = vpack.c.b16 %v2893, %v2885
        %v3126 = vpack.c.b16 %v2894, %v2886
        %v3127 = vpack.c.b16 %v2903, %v2895
        %v3128 = vpack.c.b16 %v2904, %v2896
        %v3129 = vpack.c.b16 %v2905, %v2897
        %v3130 = vpack.c.b16 %v2906, %v2898
        %v3131 = vpack.c.b16 %v2907, %v2899
        %v3132 = vpack.c.b16 %v2908, %v2900
        %v3133 = vpack.c.b16 %v2909, %v2901
        %v3134 = vpack.c.b16 %v2910, %v2902
        %v3135 = vpack.c.b16 %v2919, %v2911
        %v3136 = vpack.c.b16 %v2920, %v2912
        %v3137 = vpack.c.b16 %v2921, %v2913
        %v3138 = vpack.c.b16 %v2922, %v2914
        %v3139 = vpack.c.b16 %v2923, %v2915
        %v3140 = vpack.c.b16 %v2924, %v2916
        %v3141 = vpack.c.b16 %v2925, %v2917
        %v3142 = vpack.c.b16 %v2926, %v2918
        %v3143 = vpack.c.b16 %v2935, %v2927
        %v3144 = vpack.c.b16 %v2936, %v2928
        %v3145 = vpack.c.b16 %v2937, %v2929
        %v3146 = vpack.c.b16 %v2938, %v2930
        %v3147 = vpack.c.b16 %v2939, %v2931
        %v3148 = vpack.c.b16 %v2940, %v2932
        %v3149 = vpack.c.b16 %v2941, %v2933
        %v3150 = vpack.c.b16 %v2942, %v2934
        %v3151 = vpack.c.b16 %v2951, %v2943
        %v3152 = vpack.c.b16 %v2952, %v2944
        %v3153 = vpack.c.b16 %v2953, %v2945
        %v3154 = vpack.c.b16 %v2954, %v2946
        %v3155 = vpack.c.b16 %v2955, %v2947
        %v3156 = vpack.c.b16 %v2956, %v2948
        %v3157 = vpack.c.b16 %v2957, %v2949
        %v3158 = vpack.c.b16 %v2958, %v2950
        %v3159 = vpack.c.b16 %v2967, %v2959
        %v3160 = vpack.c.b16 %v2968, %v2960
        %v3161 = vpack.c.b16 %v2969, %v2961
        %v3162 = vpack.c.b16 %v2970, %v2962
        %v3163 = vpack.c.b16 %v2971, %v2963
        %v3164 = vpack.c.b16 %v2972, %v2964
        %v3165 = vpack.c.b16 %v2973, %v2965
        %v3166 = vpack.c.b16 %v2974, %v2966
        %v3167 = vpack.c.b16 %v2983, %v2975
        %v3168 = vpack.c.b16 %v2984, %v2976
        %v3169 = vpack.c.b16 %v2985, %v2977
        %v3170 = vpack.c.b16 %v2986, %v2978
        %v3171 = vpack.c.b16 %v2987, %v2979
        %v3172 = vpack.c.b16 %v2988, %v2980
        %v3173 = vpack.c.b16 %v2989, %v2981
        %v3174 = vpack.c.b16 %v2990, %v2982
        %v3175 = vpack.c.b16 %v2999, %v2991
        %v3176 = vpack.c.b16 %v3000, %v2992
        %v3177 = vpack.c.b16 %v3001, %v2993
        %v3178 = vpack.c.b16 %v3002, %v2994
        %v3179 = vpack.c.b16 %v3003, %v2995
        %v3180 = vpack.c.b16 %v3004, %v2996
        %v3181 = vpack.c.b16 %v3005, %v2997
        %v3182 = vpack.c.b16 %v3006, %v2998
        %v3183 = vpack.c.b16 %v3015, %v3007
        %v3184 = vpack.c.b16 %v3016, %v3008
        %v3185 = vpack.c.b16 %v3017, %v3009
        %v3186 = vpack.c.b16 %v3018, %v3010
        %v3187 = vpack.c.b16 %v3019, %v3011
        %v3188 = vpack.c.b16 %v3020, %v3012
        %v3189 = vpack.c.b16 %v3021, %v3013
        %v3190 = vpack.c.b16 %v3022, %v3014
        %v3191 = vpack.c.b16 %v3031, %v3023
        %v3192 = vpack.c.b16 %v3032, %v3024
        %v3193 = vpack.c.b16 %v3033, %v3025
        %v3194 = vpack.c.b16 %v3034, %v3026
        %v3195 = vpack.c.b16 %v3035, %v3027
        %v3196 = vpack.c.b16 %v3036, %v3028
        %v3197 = vpack.c.b16 %v3037, %v3029
        %v3198 = vpack.c.b16 %v3038, %v3030
        %v3199 = vpack.c.b16 %v3047, %v3039
        %v3200 = vpack.c.b16 %v3048, %v3040
        %v3201 = vpack.c.b16 %v3049, %v3041
        %v3202 = vpack.c.b16 %v3050, %v3042
        %v3203 = vpack.c.b16 %v3051, %v3043
        %v3204 = vpack.c.b16 %v3052, %v3044
        %v3205 = vpack.c.b16 %v3053, %v3045
        %v3206 = vpack.c.b16 %v3054, %v3046
        %v3207 = vpack.c.b16 %v3063, %v3055
        %v3208 = vpack.c.b16 %v3064, %v3056
        %v3209 = vpack.c.b16 %v3065, %v3057
        %v3210 = vpack.c.b16 %v3066, %v3058
        %v3211 = vpack.c.b16 %v3067, %v3059
        %v3212 = vpack.c.b16 %v3068, %v3060
        %v3213 = vpack.c.b16 %v3069, %v3061
        %v3214 = vpack.c.b16 %v3070, %v3062
        %v3215 = vpack.c.b16 %v3079, %v3071
        %v3216 = vpack.c.b16 %v3080, %v3072
        %v3217 = vpack.c.b16 %v3081, %v3073
        %v3218 = vpack.c.b16 %v3082, %v3074
        %v3219 = vpack.c.b16 %v3083, %v3075
        %v3220 = vpack.c.b16 %v3084, %v3076
        %v3221 = vpack.c.b16 %v3085, %v3077
        %v3222 = vpack.c.b16 %v3086, %v3078
        %v3223 = vpack.c.b16 %v3095, %v3087
        %v3224 = vpack.c.b16 %v3096, %v3088
        %v3225 = vpack.c.b16 %v3097, %v3089
        %v3226 = vpack.c.b16 %v3098, %v3090
        %v3227 = vpack.c.b16 %v3099, %v3091
        %v3228 = vpack.c.b16 %v3100, %v3092
        %v3229 = vpack.c.b16 %v3101, %v3093
        %v3230 = vpack.c.b16 %v3102, %v3094
        %3359 = vmatprep.subr.bf16.mxu0 %v3104
        %3360 = vmatpush1.bf16.msra.mxu0 %v3103
        %3361 = vmatprep.subr.bf16.mxu0 %v3112
        %3362 = vmatpush1.bf16.msra.mxu0 %v3111
        %3363 = vmatprep.subr.bf16.mxu0 %v3120
        %3364 = vmatpush1.bf16.msra.mxu0 %v3119
        %3365 = vmatprep.subr.bf16.mxu0 %v3128
        %3366 = vmatpush1.bf16.msra.mxu0 %v3127
        %3367 = vmatprep.subr.bf16.mxu0 %v3136
        %3368 = vmatpush1.bf16.msra.mxu0 %v3135
        %3369 = vmatprep.subr.bf16.mxu0 %v3144
        %3370 = vmatpush1.bf16.msra.mxu0 %v3143
        %3371 = vmatprep.subr.bf16.mxu0 %v3152
        %3372 = vmatpush1.bf16.msra.mxu0 %v3151
        %3373 = vmatprep.subr.bf16.mxu0 %v3160
        %3374 = vmatpush1.bf16.msra.mxu0 %v3159
        %3375 = vmatprep.subr.bf16.mxu0 %v3168
        %3376 = vmatpush1.bf16.msra.mxu0 %v3167
        %3377 = vmatprep.subr.bf16.mxu0 %v3176
        %3378 = vmatpush1.bf16.msra.mxu0 %v3175
        %3379 = vmatprep.subr.bf16.mxu0 %v3184
        %3380 = vmatpush1.bf16.msra.mxu0 %v3183
        %3381 = vmatprep.subr.bf16.mxu0 %v3192
        %3382 = vmatpush1.bf16.msra.mxu0 %v3191
        %3383 = vmatprep.subr.bf16.mxu0 %v3200
        %3384 = vmatpush1.bf16.msra.mxu0 %v3199
        %3385 = vmatprep.subr.bf16.mxu0 %v3208
        %3386 = vmatpush1.bf16.msra.mxu0 %v3207
        %3387 = vmatprep.subr.bf16.mxu0 %v3216
        %3388 = vmatpush1.bf16.msra.mxu0 %v3215
        %3389 = vmatprep.subr.bf16.mxu0 %v3224
        %3390 = vmatpush1.bf16.msra.mxu0 %v3223
        %3391 = vmatprep.mubr.bf16.mxu0 %v2548
        %3392 = vmatmul.mubr.bf16.gmra.mrb[0].mxu0 %v2547
        %v3393 = vpop.f32.mrb[0].mxu0
        %v3394 = vadd.f32 %v2682, %v3393
        %v3395 = vpop.f32.mrb[0].mxu0
        %v3396 = vadd.f32 %v2686, %v3395
        %v3397 = vpop.f32.mrb[0].mxu0
        %v3398 = vadd.f32 %v2682, %v3397
        %v3399 = vpop.f32.mrb[0].mxu0
        %v3400 = vadd.f32 %v2686, %v3399
        %3401 = vdwg.mxu0
        %3402 = vmatprep.subr.bf16.mxu0 %v3106
        %3403 = vmatpush1.bf16.msra.mxu0 %v3105
        %3404 = vmatprep.subr.bf16.mxu0 %v3114
        %3405 = vmatpush1.bf16.msra.mxu0 %v3113
        %3406 = vmatprep.subr.bf16.mxu0 %v3122
        %3407 = vmatpush1.bf16.msra.mxu0 %v3121
        %3408 = vmatprep.subr.bf16.mxu0 %v3130
        %3409 = vmatpush1.bf16.msra.mxu0 %v3129
        %3410 = vmatprep.subr.bf16.mxu0 %v3138
        %3411 = vmatpush1.bf16.msra.mxu0 %v3137
        %3412 = vmatprep.subr.bf16.mxu0 %v3146
        %3413 = vmatpush1.bf16.msra.mxu0 %v3145
        %3414 = vmatprep.subr.bf16.mxu0 %v3154
        %3415 = vmatpush1.bf16.msra.mxu0 %v3153
        %3416 = vmatprep.subr.bf16.mxu0 %v3162
        %3417 = vmatpush1.bf16.msra.mxu0 %v3161
        %3418 = vmatprep.subr.bf16.mxu0 %v3170
        %3419 = vmatpush1.bf16.msra.mxu0 %v3169
        %3420 = vmatprep.subr.bf16.mxu0 %v3178
        %3421 = vmatpush1.bf16.msra.mxu0 %v3177
        %3422 = vmatprep.subr.bf16.mxu0 %v3186
        %3423 = vmatpush1.bf16.msra.mxu0 %v3185
        %3424 = vmatprep.subr.bf16.mxu0 %v3194
        %3425 = vmatpush1.bf16.msra.mxu0 %v3193
        %3426 = vmatprep.subr.bf16.mxu0 %v3202
        %3427 = vmatpush1.bf16.msra.mxu0 %v3201
        %3428 = vmatprep.subr.bf16.mxu0 %v3210
        %3429 = vmatpush1.bf16.msra.mxu0 %v3209
        %3430 = vmatprep.subr.bf16.mxu0 %v3218
        %3431 = vmatpush1.bf16.msra.mxu0 %v3217
        %3432 = vmatprep.subr.bf16.mxu0 %v3226
        %3433 = vmatpush1.bf16.msra.mxu0 %v3225
        %3434 = vmatprep.mubr.bf16.mxu0 %v2548
        %3435 = vmatmul.mubr.bf16.gmra.mrb[0].mxu0 %v2547
        %v3436 = vpop.f32.mrb[0].mxu0
        %v3437 = vadd.f32 %v2690, %v3436
        %v3438 = vpop.f32.mrb[0].mxu0
        %v3439 = vadd.f32 %v2694, %v3438
        %v3440 = vpop.f32.mrb[0].mxu0
        %v3441 = vadd.f32 %v2690, %v3440
        %v3442 = vpop.f32.mrb[0].mxu0
        %v3443 = vadd.f32 %v2694, %v3442
        %3444 = vdwg.mxu0
        %3445 = vmatprep.subr.bf16.mxu0 %v3108
        %3446 = vmatpush1.bf16.msra.mxu0 %v3107
        %3447 = vmatprep.subr.bf16.mxu0 %v3116
        %3448 = vmatpush1.bf16.msra.mxu0 %v3115
        %3449 = vmatprep.subr.bf16.mxu0 %v3124
        %3450 = vmatpush1.bf16.msra.mxu0 %v3123
        %3451 = vmatprep.subr.bf16.mxu0 %v3132
        %3452 = vmatpush1.bf16.msra.mxu0 %v3131
        %3453 = vmatprep.subr.bf16.mxu0 %v3140
        %3454 = vmatpush1.bf16.msra.mxu0 %v3139
        %3455 = vmatprep.subr.bf16.mxu0 %v3148
        %3456 = vmatpush1.bf16.msra.mxu0 %v3147
        %3457 = vmatprep.subr.bf16.mxu0 %v3156
        %3458 = vmatpush1.bf16.msra.mxu0 %v3155
        %3459 = vmatprep.subr.bf16.mxu0 %v3164
        %3460 = vmatpush1.bf16.msra.mxu0 %v3163
        %3461 = vmatprep.subr.bf16.mxu0 %v3172
        %3462 = vmatpush1.bf16.msra.mxu0 %v3171
        %3463 = vmatprep.subr.bf16.mxu0 %v3180
        %3464 = vmatpush1.bf16.msra.mxu0 %v3179
        %3465 = vmatprep.subr.bf16.mxu0 %v3188
        %3466 = vmatpush1.bf16.msra.mxu0 %v3187
        %3467 = vmatprep.subr.bf16.mxu0 %v3196
        %3468 = vmatpush1.bf16.msra.mxu0 %v3195
        %3469 = vmatprep.subr.bf16.mxu0 %v3204
        %3470 = vmatpush1.bf16.msra.mxu0 %v3203
        %3471 = vmatprep.subr.bf16.mxu0 %v3212
        %3472 = vmatpush1.bf16.msra.mxu0 %v3211
        %3473 = vmatprep.subr.bf16.mxu0 %v3220
        %3474 = vmatpush1.bf16.msra.mxu0 %v3219
        %3475 = vmatprep.subr.bf16.mxu0 %v3228
        %3476 = vmatpush1.bf16.msra.mxu0 %v3227
        %3477 = vmatprep.mubr.bf16.mxu0 %v2548
        %3478 = vmatmul.mubr.bf16.gmra.mrb[0].mxu0 %v2547
        %v3479 = vpop.f32.mrb[0].mxu0
        %v3480 = vadd.f32 %v2698, %v3479
        %v3481 = vpop.f32.mrb[0].mxu0
        %v3482 = vadd.f32 %v2702, %v3481
        %v3483 = vpop.f32.mrb[0].mxu0
        %v3484 = vadd.f32 %v2698, %v3483
        %v3485 = vpop.f32.mrb[0].mxu0
        %v3486 = vadd.f32 %v2702, %v3485
        %3487 = vdwg.mxu0
        %3488 = vmatprep.subr.bf16.mxu0 %v3110
        %3489 = vmatpush1.bf16.msra.mxu0 %v3109
        %3490 = vmatprep.subr.bf16.mxu0 %v3118
        %3491 = vmatpush1.bf16.msra.mxu0 %v3117
        %3492 = vmatprep.subr.bf16.mxu0 %v3126
        %3493 = vmatpush1.bf16.msra.mxu0 %v3125
        %3494 = vmatprep.subr.bf16.mxu0 %v3134
        %3495 = vmatpush1.bf16.msra.mxu0 %v3133
        %3496 = vmatprep.subr.bf16.mxu0 %v3142
        %3497 = vmatpush1.bf16.msra.mxu0 %v3141
        %3498 = vmatprep.subr.bf16.mxu0 %v3150
        %3499 = vmatpush1.bf16.msra.mxu0 %v3149
        %3500 = vmatprep.subr.bf16.mxu0 %v3158
        %3501 = vmatpush1.bf16.msra.mxu0 %v3157
        %3502 = vmatprep.subr.bf16.mxu0 %v3166
        %3503 = vmatpush1.bf16.msra.mxu0 %v3165
        %3504 = vmatprep.subr.bf16.mxu0 %v3174
        %3505 = vmatpush1.bf16.msra.mxu0 %v3173
        %3506 = vmatprep.subr.bf16.mxu0 %v3182
        %3507 = vmatpush1.bf16.msra.mxu0 %v3181
        %3508 = vmatprep.subr.bf16.mxu0 %v3190
        %3509 = vmatpush1.bf16.msra.mxu0 %v3189
        %3510 = vmatprep.subr.bf16.mxu0 %v3198
        %3511 = vmatpush1.bf16.msra.mxu0 %v3197
        %3512 = vmatprep.subr.bf16.mxu0 %v3206
        %3513 = vmatpush1.bf16.msra.mxu0 %v3205
        %3514 = vmatprep.subr.bf16.mxu0 %v3214
        %3515 = vmatpush1.bf16.msra.mxu0 %v3213
        %3516 = vmatprep.subr.bf16.mxu0 %v3222
        %3517 = vmatpush1.bf16.msra.mxu0 %v3221
        %3518 = vmatprep.subr.bf16.mxu0 %v3230
        %3519 = vmatpush1.bf16.msra.mxu0 %v3229
        %3520 = vmatprep.mubr.bf16.mxu0 %v2548
        %3521 = vmatmul.mubr.bf16.gmra.mrb[0].mxu0 %v2547
        %v3522 = vpop.f32.mrb[0].mxu0
        %v3523 = vadd.f32 %v2706, %v3522
        %v3524 = vpop.f32.mrb[0].mxu0
        %v3525 = vadd.f32 %v2710, %v3524
        %v3526 = vpop.f32.mrb[0].mxu0
        %v3527 = vadd.f32 %v2706, %v3526
        %v3528 = vpop.f32.mrb[0].mxu0
        %v3529 = vadd.f32 %v2710, %v3528
        %3530 = vdwg.mxu0
        %v3531 = vmax.f32 %v3394, 0.0
        %v3532 = vmax.f32 %v3396, 0.0
        %v3533 = vmax.f32 %v3437, 0.0
        %v3534 = vmax.f32 %v3439, 0.0
        %v3535 = vmax.f32 %v3480, 0.0
        %v3536 = vmax.f32 %v3482, 0.0
        %v3537 = vmax.f32 %v3523, 0.0
        %v3538 = vmax.f32 %v3525, 0.0
        %v3539 = vmax.f32 %v3398, 0.0
        %v3540 = vmax.f32 %v3400, 0.0
        %v3541 = vmax.f32 %v3441, 0.0
        %v3542 = vmax.f32 %v3443, 0.0
        %v3543 = vmax.f32 %v3484, 0.0
        %v3544 = vmax.f32 %v3486, 0.0
        %v3545 = vmax.f32 %v3527, 0.0
        %v3546 = vmax.f32 %v3529, 0.0
        %v3547 = vpack.c.bf16 %v3539, %v3531
        %v3548 = vpack.c.bf16 %v3540, %v3532
        %v3549 = vpack.c.bf16 %v3541, %v3533
        %v3550 = vpack.c.bf16 %v3542, %v3534
        %v3551 = vpack.c.bf16 %v3543, %v3535
        %v3552 = vpack.c.bf16 %v3544, %v3536
        %v3553 = vpack.c.bf16 %v3545, %v3537
        %v3554 = vpack.c.bf16 %v3546, %v3538
        %v3555 = vld [vmem:[%s9] sm:$0xff]
        %v3556 = vld [vmem:[%s9 + $0x8] sm:$0xff]
        %v3557 = vld [vmem:[%s9 + $0x10] sm:$0xff]
        %v3558 = vld [vmem:[%s9 + $0x18] sm:$0xff]
        %v3559 = vld [vmem:[%s9 + $0x20] sm:$0xff]
        %v3560 = vld [vmem:[%s9 + $0x28] sm:$0xff]
        %v3561 = vld [vmem:[%s9 + $0x30] sm:$0xff]
        %v3562 = vld [vmem:[%s9 + $0x38] sm:$0xff]
        %v3563 = vld [vmem:[%s9 + $0x40] sm:$0xff]
        %v3564 = vld [vmem:[%s9 + $0x48] sm:$0xff]
        %v3565 = vld [vmem:[%s9 + $0x50] sm:$0xff]
        %v3566 = vld [vmem:[%s9 + $0x58] sm:$0xff]
        %v3567 = vld [vmem:[%s9 + $0x60] sm:$0xff]
        %v3568 = vld [vmem:[%s9 + $0x68] sm:$0xff]
        %v3569 = vld [vmem:[%s9 + $0x70] sm:$0xff]
        %v3570 = vld [vmem:[%s9 + $0x78] sm:$0xff]
        %v3571 = vld [vmem:[%s9 + $0x80] sm:$0xff]
        %v3572 = vld [vmem:[%s9 + $0x88] sm:$0xff]
        %v3573 = vld [vmem:[%s9 + $0x90] sm:$0xff]
        %v3574 = vld [vmem:[%s9 + $0x98] sm:$0xff]
        %v3575 = vld [vmem:[%s9 + $0xa0] sm:$0xff]
        %v3576 = vld [vmem:[%s9 + $0xa8] sm:$0xff]
        %v3577 = vld [vmem:[%s9 + $0xb0] sm:$0xff]
        %v3578 = vld [vmem:[%s9 + $0xb8] sm:$0xff]
        %v3579 = vld [vmem:[%s9 + $0xc0] sm:$0xff]
        %v3580 = vld [vmem:[%s9 + $0xc8] sm:$0xff]
        %v3581 = vld [vmem:[%s9 + $0xd0] sm:$0xff]
        %v3582 = vld [vmem:[%s9 + $0xd8] sm:$0xff]
        %v3583 = vld [vmem:[%s9 + $0xe0] sm:$0xff]
        %v3584 = vld [vmem:[%s9 + $0xe8] sm:$0xff]
        %v3585 = vld [vmem:[%s9 + $0xf0] sm:$0xff]
        %v3586 = vld [vmem:[%s9 + $0xf8] sm:$0xff]
        %v3587 = vld [vmem:[%s9 + $0x100] sm:$0xff]
        %v3588 = vld [vmem:[%s9 + $0x108] sm:$0xff]
        %v3589 = vld [vmem:[%s9 + $0x110] sm:$0xff]
        %v3590 = vld [vmem:[%s9 + $0x118] sm:$0xff]
        %v3591 = vld [vmem:[%s9 + $0x120] sm:$0xff]
        %v3592 = vld [vmem:[%s9 + $0x128] sm:$0xff]
        %v3593 = vld [vmem:[%s9 + $0x130] sm:$0xff]
        %v3594 = vld [vmem:[%s9 + $0x138] sm:$0xff]
        %v3595 = vld [vmem:[%s9 + $0x140] sm:$0xff]
        %v3596 = vld [vmem:[%s9 + $0x148] sm:$0xff]
        %v3597 = vld [vmem:[%s9 + $0x150] sm:$0xff]
        %v3598 = vld [vmem:[%s9 + $0x158] sm:$0xff]
        %v3599 = vld [vmem:[%s9 + $0x160] sm:$0xff]
        %v3600 = vld [vmem:[%s9 + $0x168] sm:$0xff]
        %v3601 = vld [vmem:[%s9 + $0x170] sm:$0xff]
        %v3602 = vld [vmem:[%s9 + $0x178] sm:$0xff]
        %v3603 = vld [vmem:[%s9 + $0x180] sm:$0xff]
        %v3604 = vld [vmem:[%s9 + $0x188] sm:$0xff]
        %v3605 = vld [vmem:[%s9 + $0x190] sm:$0xff]
        %v3606 = vld [vmem:[%s9 + $0x198] sm:$0xff]
        %v3607 = vld [vmem:[%s9 + $0x1a0] sm:$0xff]
        %v3608 = vld [vmem:[%s9 + $0x1a8] sm:$0xff]
        %v3609 = vld [vmem:[%s9 + $0x1b0] sm:$0xff]
        %v3610 = vld [vmem:[%s9 + $0x1b8] sm:$0xff]
        %v3611 = vld [vmem:[%s9 + $0x1c0] sm:$0xff]
        %v3612 = vld [vmem:[%s9 + $0x1c8] sm:$0xff]
        %v3613 = vld [vmem:[%s9 + $0x1d0] sm:$0xff]
        %v3614 = vld [vmem:[%s9 + $0x1d8] sm:$0xff]
        %v3615 = vld [vmem:[%s9 + $0x1e0] sm:$0xff]
        %v3616 = vld [vmem:[%s9 + $0x1e8] sm:$0xff]
        %v3617 = vld [vmem:[%s9 + $0x1f0] sm:$0xff]
        %v3618 = vld [vmem:[%s9 + $0x1f8] sm:$0xff]
        %v3619 = vld [vmem:[%s9 + $0x200] sm:$0xff]
        %v3620 = vld [vmem:[%s9 + $0x208] sm:$0xff]
        %v3621 = vld [vmem:[%s9 + $0x210] sm:$0xff]
        %v3622 = vld [vmem:[%s9 + $0x218] sm:$0xff]
        %v3623 = vld [vmem:[%s9 + $0x220] sm:$0xff]
        %v3624 = vld [vmem:[%s9 + $0x228] sm:$0xff]
        %v3625 = vld [vmem:[%s9 + $0x230] sm:$0xff]
        %v3626 = vld [vmem:[%s9 + $0x238] sm:$0xff]
        %v3627 = vld [vmem:[%s9 + $0x240] sm:$0xff]
        %v3628 = vld [vmem:[%s9 + $0x248] sm:$0xff]
        %v3629 = vld [vmem:[%s9 + $0x250] sm:$0xff]
        %v3630 = vld [vmem:[%s9 + $0x258] sm:$0xff]
        %v3631 = vld [vmem:[%s9 + $0x260] sm:$0xff]
        %v3632 = vld [vmem:[%s9 + $0x268] sm:$0xff]
        %v3633 = vld [vmem:[%s9 + $0x270] sm:$0xff]
        %v3634 = vld [vmem:[%s9 + $0x278] sm:$0xff]
        %v3635 = vld [vmem:[%s9 + $0x280] sm:$0xff]
        %v3636 = vld [vmem:[%s9 + $0x288] sm:$0xff]
        %v3637 = vld [vmem:[%s9 + $0x290] sm:$0xff]
        %v3638 = vld [vmem:[%s9 + $0x298] sm:$0xff]
        %v3639 = vld [vmem:[%s9 + $0x2a0] sm:$0xff]
        %v3640 = vld [vmem:[%s9 + $0x2a8] sm:$0xff]
        %v3641 = vld [vmem:[%s9 + $0x2b0] sm:$0xff]
        %v3642 = vld [vmem:[%s9 + $0x2b8] sm:$0xff]
        %v3643 = vld [vmem:[%s9 + $0x2c0] sm:$0xff]
        %v3644 = vld [vmem:[%s9 + $0x2c8] sm:$0xff]
        %v3645 = vld [vmem:[%s9 + $0x2d0] sm:$0xff]
        %v3646 = vld [vmem:[%s9 + $0x2d8] sm:$0xff]
        %v3647 = vld [vmem:[%s9 + $0x2e0] sm:$0xff]
        %v3648 = vld [vmem:[%s9 + $0x2e8] sm:$0xff]
        %v3649 = vld [vmem:[%s9 + $0x2f0] sm:$0xff]
        %v3650 = vld [vmem:[%s9 + $0x2f8] sm:$0xff]
        %v3651 = vld [vmem:[%s9 + $0x300] sm:$0xff]
        %v3652 = vld [vmem:[%s9 + $0x308] sm:$0xff]
        %v3653 = vld [vmem:[%s9 + $0x310] sm:$0xff]
        %v3654 = vld [vmem:[%s9 + $0x318] sm:$0xff]
        %v3655 = vld [vmem:[%s9 + $0x320] sm:$0xff]
        %v3656 = vld [vmem:[%s9 + $0x328] sm:$0xff]
        %v3657 = vld [vmem:[%s9 + $0x330] sm:$0xff]
        %v3658 = vld [vmem:[%s9 + $0x338] sm:$0xff]
        %v3659 = vld [vmem:[%s9 + $0x340] sm:$0xff]
        %v3660 = vld [vmem:[%s9 + $0x348] sm:$0xff]
        %v3661 = vld [vmem:[%s9 + $0x350] sm:$0xff]
        %v3662 = vld [vmem:[%s9 + $0x358] sm:$0xff]
        %v3663 = vld [vmem:[%s9 + $0x360] sm:$0xff]
        %v3664 = vld [vmem:[%s9 + $0x368] sm:$0xff]
        %v3665 = vld [vmem:[%s9 + $0x370] sm:$0xff]
        %v3666 = vld [vmem:[%s9 + $0x378] sm:$0xff]
        %v3667 = vld [vmem:[%s9 + $0x380] sm:$0xff]
        %v3668 = vld [vmem:[%s9 + $0x388] sm:$0xff]
        %v3669 = vld [vmem:[%s9 + $0x390] sm:$0xff]
        %v3670 = vld [vmem:[%s9 + $0x398] sm:$0xff]
        %v3671 = vld [vmem:[%s9 + $0x3a0] sm:$0xff]
        %v3672 = vld [vmem:[%s9 + $0x3a8] sm:$0xff]
        %v3673 = vld [vmem:[%s9 + $0x3b0] sm:$0xff]
        %v3674 = vld [vmem:[%s9 + $0x3b8] sm:$0xff]
        %v3675 = vld [vmem:[%s9 + $0x3c0] sm:$0xff]
        %v3676 = vld [vmem:[%s9 + $0x3c8] sm:$0xff]
        %v3677 = vld [vmem:[%s9 + $0x3d0] sm:$0xff]
        %v3678 = vld [vmem:[%s9 + $0x3d8] sm:$0xff]
        %v3679 = vld [vmem:[%s9 + $0x3e0] sm:$0xff]
        %v3680 = vld [vmem:[%s9 + $0x3e8] sm:$0xff]
        %v3681 = vld [vmem:[%s9 + $0x3f0] sm:$0xff]
        %v3682 = vld [vmem:[%s9 + $0x3f8] sm:$0xff]
        %v3683 = vld [vmem:[%s10] sm:$0x3]
        %v3685 = vlaneseq
        %v3686 = vshrl.u32 %v3685, 7
        %v3687 = vsub.s32 0, %v3686
        %v3688 = vrot.slane %v3683, %v3687
        %v3689 = vlaneseq
        %v3690 = vshrl.u32 %v3689, 7
        %v3691 = vsub.s32 1, %v3690
        %v3692 = vrot.slane %v3683, %v3691
        %v3823 = vunpack.c.l.b16 %v3555
        %v3824 = vunpack.c.h.b16 %v3555
        %v3825 = vunpack.c.l.b16 %v3556
        %v3826 = vunpack.c.h.b16 %v3556
        %v3827 = vunpack.c.l.b16 %v3557
        %v3828 = vunpack.c.h.b16 %v3557
        %v3829 = vunpack.c.l.b16 %v3558
        %v3830 = vunpack.c.h.b16 %v3558
        %v3831 = vunpack.c.l.b16 %v3559
        %v3832 = vunpack.c.h.b16 %v3559
        %v3833 = vunpack.c.l.b16 %v3560
        %v3834 = vunpack.c.h.b16 %v3560
        %v3835 = vunpack.c.l.b16 %v3561
        %v3836 = vunpack.c.h.b16 %v3561
        %v3837 = vunpack.c.l.b16 %v3562
        %v3838 = vunpack.c.h.b16 %v3562
        %v3839 = vunpack.c.l.b16 %v3563
        %v3840 = vunpack.c.h.b16 %v3563
        %v3841 = vunpack.c.l.b16 %v3564
        %v3842 = vunpack.c.h.b16 %v3564
        %v3843 = vunpack.c.l.b16 %v3565
        %v3844 = vunpack.c.h.b16 %v3565
        %v3845 = vunpack.c.l.b16 %v3566
        %v3846 = vunpack.c.h.b16 %v3566
        %v3847 = vunpack.c.l.b16 %v3567
        %v3848 = vunpack.c.h.b16 %v3567
        %v3849 = vunpack.c.l.b16 %v3568
        %v3850 = vunpack.c.h.b16 %v3568
        %v3851 = vunpack.c.l.b16 %v3569
        %v3852 = vunpack.c.h.b16 %v3569
        %v3853 = vunpack.c.l.b16 %v3570
        %v3854 = vunpack.c.h.b16 %v3570
        %v3855 = vunpack.c.l.b16 %v3571
        %v3856 = vunpack.c.h.b16 %v3571
        %v3857 = vunpack.c.l.b16 %v3572
        %v3858 = vunpack.c.h.b16 %v3572
        %v3859 = vunpack.c.l.b16 %v3573
        %v3860 = vunpack.c.h.b16 %v3573
        %v3861 = vunpack.c.l.b16 %v3574
        %v3862 = vunpack.c.h.b16 %v3574
        %v3863 = vunpack.c.l.b16 %v3575
        %v3864 = vunpack.c.h.b16 %v3575
        %v3865 = vunpack.c.l.b16 %v3576
        %v3866 = vunpack.c.h.b16 %v3576
        %v3867 = vunpack.c.l.b16 %v3577
        %v3868 = vunpack.c.h.b16 %v3577
        %v3869 = vunpack.c.l.b16 %v3578
        %v3870 = vunpack.c.h.b16 %v3578
        %v3871 = vunpack.c.l.b16 %v3579
        %v3872 = vunpack.c.h.b16 %v3579
        %v3873 = vunpack.c.l.b16 %v3580
        %v3874 = vunpack.c.h.b16 %v3580
        %v3875 = vunpack.c.l.b16 %v3581
        %v3876 = vunpack.c.h.b16 %v3581
        %v3877 = vunpack.c.l.b16 %v3582
        %v3878 = vunpack.c.h.b16 %v3582
        %v3879 = vunpack.c.l.b16 %v3583
        %v3880 = vunpack.c.h.b16 %v3583
        %v3881 = vunpack.c.l.b16 %v3584
        %v3882 = vunpack.c.h.b16 %v3584
        %v3883 = vunpack.c.l.b16 %v3585
        %v3884 = vunpack.c.h.b16 %v3585
        %v3885 = vunpack.c.l.b16 %v3586
        %v3886 = vunpack.c.h.b16 %v3586
        %v3887 = vunpack.c.l.b16 %v3587
        %v3888 = vunpack.c.h.b16 %v3587
        %v3889 = vunpack.c.l.b16 %v3588
        %v3890 = vunpack.c.h.b16 %v3588
        %v3891 = vunpack.c.l.b16 %v3589
        %v3892 = vunpack.c.h.b16 %v3589
        %v3893 = vunpack.c.l.b16 %v3590
        %v3894 = vunpack.c.h.b16 %v3590
        %v3895 = vunpack.c.l.b16 %v3591
        %v3896 = vunpack.c.h.b16 %v3591
        %v3897 = vunpack.c.l.b16 %v3592
        %v3898 = vunpack.c.h.b16 %v3592
        %v3899 = vunpack.c.l.b16 %v3593
        %v3900 = vunpack.c.h.b16 %v3593
        %v3901 = vunpack.c.l.b16 %v3594
        %v3902 = vunpack.c.h.b16 %v3594
        %v3903 = vunpack.c.l.b16 %v3595
        %v3904 = vunpack.c.h.b16 %v3595
        %v3905 = vunpack.c.l.b16 %v3596
        %v3906 = vunpack.c.h.b16 %v3596
        %v3907 = vunpack.c.l.b16 %v3597
        %v3908 = vunpack.c.h.b16 %v3597
        %v3909 = vunpack.c.l.b16 %v3598
        %v3910 = vunpack.c.h.b16 %v3598
        %v3911 = vunpack.c.l.b16 %v3599
        %v3912 = vunpack.c.h.b16 %v3599
        %v3913 = vunpack.c.l.b16 %v3600
        %v3914 = vunpack.c.h.b16 %v3600
        %v3915 = vunpack.c.l.b16 %v3601
        %v3916 = vunpack.c.h.b16 %v3601
        %v3917 = vunpack.c.l.b16 %v3602
        %v3918 = vunpack.c.h.b16 %v3602
        %v3919 = vunpack.c.l.b16 %v3603
        %v3920 = vunpack.c.h.b16 %v3603
        %v3921 = vunpack.c.l.b16 %v3604
        %v3922 = vunpack.c.h.b16 %v3604
        %v3923 = vunpack.c.l.b16 %v3605
        %v3924 = vunpack.c.h.b16 %v3605
        %v3925 = vunpack.c.l.b16 %v3606
        %v3926 = vunpack.c.h.b16 %v3606
        %v3927 = vunpack.c.l.b16 %v3607
        %v3928 = vunpack.c.h.b16 %v3607
        %v3929 = vunpack.c.l.b16 %v3608
        %v3930 = vunpack.c.h.b16 %v3608
        %v3931 = vunpack.c.l.b16 %v3609
        %v3932 = vunpack.c.h.b16 %v3609
        %v3933 = vunpack.c.l.b16 %v3610
        %v3934 = vunpack.c.h.b16 %v3610
        %v3935 = vunpack.c.l.b16 %v3611
        %v3936 = vunpack.c.h.b16 %v3611
        %v3937 = vunpack.c.l.b16 %v3612
        %v3938 = vunpack.c.h.b16 %v3612
        %v3939 = vunpack.c.l.b16 %v3613
        %v3940 = vunpack.c.h.b16 %v3613
        %v3941 = vunpack.c.l.b16 %v3614
        %v3942 = vunpack.c.h.b16 %v3614
        %v3943 = vunpack.c.l.b16 %v3615
        %v3944 = vunpack.c.h.b16 %v3615
        %v3945 = vunpack.c.l.b16 %v3616
        %v3946 = vunpack.c.h.b16 %v3616
        %v3947 = vunpack.c.l.b16 %v3617
        %v3948 = vunpack.c.h.b16 %v3617
        %v3949 = vunpack.c.l.b16 %v3618
        %v3950 = vunpack.c.h.b16 %v3618
        %v3951 = vunpack.c.l.b16 %v3619
        %v3952 = vunpack.c.h.b16 %v3619
        %v3953 = vunpack.c.l.b16 %v3620
        %v3954 = vunpack.c.h.b16 %v3620
        %v3955 = vunpack.c.l.b16 %v3621
        %v3956 = vunpack.c.h.b16 %v3621
        %v3957 = vunpack.c.l.b16 %v3622
        %v3958 = vunpack.c.h.b16 %v3622
        %v3959 = vunpack.c.l.b16 %v3623
        %v3960 = vunpack.c.h.b16 %v3623
        %v3961 = vunpack.c.l.b16 %v3624
        %v3962 = vunpack.c.h.b16 %v3624
        %v3963 = vunpack.c.l.b16 %v3625
        %v3964 = vunpack.c.h.b16 %v3625
        %v3965 = vunpack.c.l.b16 %v3626
        %v3966 = vunpack.c.h.b16 %v3626
        %v3967 = vunpack.c.l.b16 %v3627
        %v3968 = vunpack.c.h.b16 %v3627
        %v3969 = vunpack.c.l.b16 %v3628
        %v3970 = vunpack.c.h.b16 %v3628
        %v3971 = vunpack.c.l.b16 %v3629
        %v3972 = vunpack.c.h.b16 %v3629
        %v3973 = vunpack.c.l.b16 %v3630
        %v3974 = vunpack.c.h.b16 %v3630
        %v3975 = vunpack.c.l.b16 %v3631
        %v3976 = vunpack.c.h.b16 %v3631
        %v3977 = vunpack.c.l.b16 %v3632
        %v3978 = vunpack.c.h.b16 %v3632
        %v3979 = vunpack.c.l.b16 %v3633
        %v3980 = vunpack.c.h.b16 %v3633
        %v3981 = vunpack.c.l.b16 %v3634
        %v3982 = vunpack.c.h.b16 %v3634
        %v3983 = vunpack.c.l.b16 %v3635
        %v3984 = vunpack.c.h.b16 %v3635
        %v3985 = vunpack.c.l.b16 %v3636
        %v3986 = vunpack.c.h.b16 %v3636
        %v3987 = vunpack.c.l.b16 %v3637
        %v3988 = vunpack.c.h.b16 %v3637
        %v3989 = vunpack.c.l.b16 %v3638
        %v3990 = vunpack.c.h.b16 %v3638
        %v3991 = vunpack.c.l.b16 %v3639
        %v3992 = vunpack.c.h.b16 %v3639
        %v3993 = vunpack.c.l.b16 %v3640
        %v3994 = vunpack.c.h.b16 %v3640
        %v3995 = vunpack.c.l.b16 %v3641
        %v3996 = vunpack.c.h.b16 %v3641
        %v3997 = vunpack.c.l.b16 %v3642
        %v3998 = vunpack.c.h.b16 %v3642
        %v3999 = vunpack.c.l.b16 %v3643
        %v4000 = vunpack.c.h.b16 %v3643
        %v4001 = vunpack.c.l.b16 %v3644
        %v4002 = vunpack.c.h.b16 %v3644
        %v4003 = vunpack.c.l.b16 %v3645
        %v4004 = vunpack.c.h.b16 %v3645
        %v4005 = vunpack.c.l.b16 %v3646
        %v4006 = vunpack.c.h.b16 %v3646
        %v4007 = vunpack.c.l.b16 %v3647
        %v4008 = vunpack.c.h.b16 %v3647
        %v4009 = vunpack.c.l.b16 %v3648
        %v4010 = vunpack.c.h.b16 %v3648
        %v4011 = vunpack.c.l.b16 %v3649
        %v4012 = vunpack.c.h.b16 %v3649
        %v4013 = vunpack.c.l.b16 %v3650
        %v4014 = vunpack.c.h.b16 %v3650
        %v4015 = vunpack.c.l.b16 %v3651
        %v4016 = vunpack.c.h.b16 %v3651
        %v4017 = vunpack.c.l.b16 %v3652
        %v4018 = vunpack.c.h.b16 %v3652
        %v4019 = vunpack.c.l.b16 %v3653
        %v4020 = vunpack.c.h.b16 %v3653
        %v4021 = vunpack.c.l.b16 %v3654
        %v4022 = vunpack.c.h.b16 %v3654
        %v4023 = vunpack.c.l.b16 %v3655
        %v4024 = vunpack.c.h.b16 %v3655
        %v4025 = vunpack.c.l.b16 %v3656
        %v4026 = vunpack.c.h.b16 %v3656
        %v4027 = vunpack.c.l.b16 %v3657
        %v4028 = vunpack.c.h.b16 %v3657
        %v4029 = vunpack.c.l.b16 %v3658
        %v4030 = vunpack.c.h.b16 %v3658
        %v4031 = vunpack.c.l.b16 %v3659
        %v4032 = vunpack.c.h.b16 %v3659
        %v4033 = vunpack.c.l.b16 %v3660
        %v4034 = vunpack.c.h.b16 %v3660
        %v4035 = vunpack.c.l.b16 %v3661
        %v4036 = vunpack.c.h.b16 %v3661
        %v4037 = vunpack.c.l.b16 %v3662
        %v4038 = vunpack.c.h.b16 %v3662
        %v4039 = vunpack.c.l.b16 %v3663
        %v4040 = vunpack.c.h.b16 %v3663
        %v4041 = vunpack.c.l.b16 %v3664
        %v4042 = vunpack.c.h.b16 %v3664
        %v4043 = vunpack.c.l.b16 %v3665
        %v4044 = vunpack.c.h.b16 %v3665
        %v4045 = vunpack.c.l.b16 %v3666
        %v4046 = vunpack.c.h.b16 %v3666
        %v4047 = vunpack.c.l.b16 %v3667
        %v4048 = vunpack.c.h.b16 %v3667
        %v4049 = vunpack.c.l.b16 %v3668
        %v4050 = vunpack.c.h.b16 %v3668
        %v4051 = vunpack.c.l.b16 %v3669
        %v4052 = vunpack.c.h.b16 %v3669
        %v4053 = vunpack.c.l.b16 %v3670
        %v4054 = vunpack.c.h.b16 %v3670
        %v4055 = vunpack.c.l.b16 %v3671
        %v4056 = vunpack.c.h.b16 %v3671
        %v4057 = vunpack.c.l.b16 %v3672
        %v4058 = vunpack.c.h.b16 %v3672
        %v4059 = vunpack.c.l.b16 %v3673
        %v4060 = vunpack.c.h.b16 %v3673
        %v4061 = vunpack.c.l.b16 %v3674
        %v4062 = vunpack.c.h.b16 %v3674
        %v4063 = vunpack.c.l.b16 %v3675
        %v4064 = vunpack.c.h.b16 %v3675
        %v4065 = vunpack.c.l.b16 %v3676
        %v4066 = vunpack.c.h.b16 %v3676
        %v4067 = vunpack.c.l.b16 %v3677
        %v4068 = vunpack.c.h.b16 %v3677
        %v4069 = vunpack.c.l.b16 %v3678
        %v4070 = vunpack.c.h.b16 %v3678
        %v4071 = vunpack.c.l.b16 %v3679
        %v4072 = vunpack.c.h.b16 %v3679
        %v4073 = vunpack.c.l.b16 %v3680
        %v4074 = vunpack.c.h.b16 %v3680
        %v4075 = vunpack.c.l.b16 %v3681
        %v4076 = vunpack.c.h.b16 %v3681
        %v4077 = vunpack.c.l.b16 %v3682
        %v4078 = vunpack.c.h.b16 %v3682
        %v4079 = vpack.c.b16 %v3825, %v3823
        %v4080 = vpack.c.b16 %v3826, %v3824
        %v4081 = vpack.c.b16 %v3829, %v3827
        %v4082 = vpack.c.b16 %v3830, %v3828
        %v4083 = vpack.c.b16 %v3833, %v3831
        %v4084 = vpack.c.b16 %v3834, %v3832
        %v4085 = vpack.c.b16 %v3837, %v3835
        %v4086 = vpack.c.b16 %v3838, %v3836
        %v4087 = vpack.c.b16 %v3841, %v3839
        %v4088 = vpack.c.b16 %v3842, %v3840
        %v4089 = vpack.c.b16 %v3845, %v3843
        %v4090 = vpack.c.b16 %v3846, %v3844
        %v4091 = vpack.c.b16 %v3849, %v3847
        %v4092 = vpack.c.b16 %v3850, %v3848
        %v4093 = vpack.c.b16 %v3853, %v3851
        %v4094 = vpack.c.b16 %v3854, %v3852
        %v4095 = vpack.c.b16 %v3857, %v3855
        %v4096 = vpack.c.b16 %v3858, %v3856
        %v4097 = vpack.c.b16 %v3861, %v3859
        %v4098 = vpack.c.b16 %v3862, %v3860
        %v4099 = vpack.c.b16 %v3865, %v3863
        %v4100 = vpack.c.b16 %v3866, %v3864
        %v4101 = vpack.c.b16 %v3869, %v3867
        %v4102 = vpack.c.b16 %v3870, %v3868
        %v4103 = vpack.c.b16 %v3873, %v3871
        %v4104 = vpack.c.b16 %v3874, %v3872
        %v4105 = vpack.c.b16 %v3877, %v3875
        %v4106 = vpack.c.b16 %v3878, %v3876
        %v4107 = vpack.c.b16 %v3881, %v3879
        %v4108 = vpack.c.b16 %v3882, %v3880
        %v4109 = vpack.c.b16 %v3885, %v3883
        %v4110 = vpack.c.b16 %v3886, %v3884
        %v4111 = vpack.c.b16 %v3889, %v3887
        %v4112 = vpack.c.b16 %v3890, %v3888
        %v4113 = vpack.c.b16 %v3893, %v3891
        %v4114 = vpack.c.b16 %v3894, %v3892
        %v4115 = vpack.c.b16 %v3897, %v3895
        %v4116 = vpack.c.b16 %v3898, %v3896
        %v4117 = vpack.c.b16 %v3901, %v3899
        %v4118 = vpack.c.b16 %v3902, %v3900
        %v4119 = vpack.c.b16 %v3905, %v3903
        %v4120 = vpack.c.b16 %v3906, %v3904
        %v4121 = vpack.c.b16 %v3909, %v3907
        %v4122 = vpack.c.b16 %v3910, %v3908
        %v4123 = vpack.c.b16 %v3913, %v3911
        %v4124 = vpack.c.b16 %v3914, %v3912
        %v4125 = vpack.c.b16 %v3917, %v3915
        %v4126 = vpack.c.b16 %v3918, %v3916
        %v4127 = vpack.c.b16 %v3921, %v3919
        %v4128 = vpack.c.b16 %v3922, %v3920
        %v4129 = vpack.c.b16 %v3925, %v3923
        %v4130 = vpack.c.b16 %v3926, %v3924
        %v4131 = vpack.c.b16 %v3929, %v3927
        %v4132 = vpack.c.b16 %v3930, %v3928
        %v4133 = vpack.c.b16 %v3933, %v3931
        %v4134 = vpack.c.b16 %v3934, %v3932
        %v4135 = vpack.c.b16 %v3937, %v3935
        %v4136 = vpack.c.b16 %v3938, %v3936
        %v4137 = vpack.c.b16 %v3941, %v3939
        %v4138 = vpack.c.b16 %v3942, %v3940
        %v4139 = vpack.c.b16 %v3945, %v3943
        %v4140 = vpack.c.b16 %v3946, %v3944
        %v4141 = vpack.c.b16 %v3949, %v3947
        %v4142 = vpack.c.b16 %v3950, %v3948
        %v4143 = vpack.c.b16 %v3953, %v3951
        %v4144 = vpack.c.b16 %v3954, %v3952
        %v4145 = vpack.c.b16 %v3957, %v3955
        %v4146 = vpack.c.b16 %v3958, %v3956
        %v4147 = vpack.c.b16 %v3961, %v3959
        %v4148 = vpack.c.b16 %v3962, %v3960
        %v4149 = vpack.c.b16 %v3965, %v3963
        %v4150 = vpack.c.b16 %v3966, %v3964
        %v4151 = vpack.c.b16 %v3969, %v3967
        %v4152 = vpack.c.b16 %v3970, %v3968
        %v4153 = vpack.c.b16 %v3973, %v3971
        %v4154 = vpack.c.b16 %v3974, %v3972
        %v4155 = vpack.c.b16 %v3977, %v3975
        %v4156 = vpack.c.b16 %v3978, %v3976
        %v4157 = vpack.c.b16 %v3981, %v3979
        %v4158 = vpack.c.b16 %v3982, %v3980
        %v4159 = vpack.c.b16 %v3985, %v3983
        %v4160 = vpack.c.b16 %v3986, %v3984
        %v4161 = vpack.c.b16 %v3989, %v3987
        %v4162 = vpack.c.b16 %v3990, %v3988
        %v4163 = vpack.c.b16 %v3993, %v3991
        %v4164 = vpack.c.b16 %v3994, %v3992
        %v4165 = vpack.c.b16 %v3997, %v3995
        %v4166 = vpack.c.b16 %v3998, %v3996
        %v4167 = vpack.c.b16 %v4001, %v3999
        %v4168 = vpack.c.b16 %v4002, %v4000
        %v4169 = vpack.c.b16 %v4005, %v4003
        %v4170 = vpack.c.b16 %v4006, %v4004
        %v4171 = vpack.c.b16 %v4009, %v4007
        %v4172 = vpack.c.b16 %v4010, %v4008
        %v4173 = vpack.c.b16 %v4013, %v4011
        %v4174 = vpack.c.b16 %v4014, %v4012
        %v4175 = vpack.c.b16 %v4017, %v4015
        %v4176 = vpack.c.b16 %v4018, %v4016
        %v4177 = vpack.c.b16 %v4021, %v4019
        %v4178 = vpack.c.b16 %v4022, %v4020
        %v4179 = vpack.c.b16 %v4025, %v4023
        %v4180 = vpack.c.b16 %v4026, %v4024
        %v4181 = vpack.c.b16 %v4029, %v4027
        %v4182 = vpack.c.b16 %v4030, %v4028
        %v4183 = vpack.c.b16 %v4033, %v4031
        %v4184 = vpack.c.b16 %v4034, %v4032
        %v4185 = vpack.c.b16 %v4037, %v4035
        %v4186 = vpack.c.b16 %v4038, %v4036
        %v4187 = vpack.c.b16 %v4041, %v4039
        %v4188 = vpack.c.b16 %v4042, %v4040
        %v4189 = vpack.c.b16 %v4045, %v4043
        %v4190 = vpack.c.b16 %v4046, %v4044
        %v4191 = vpack.c.b16 %v4049, %v4047
        %v4192 = vpack.c.b16 %v4050, %v4048
        %v4193 = vpack.c.b16 %v4053, %v4051
        %v4194 = vpack.c.b16 %v4054, %v4052
        %v4195 = vpack.c.b16 %v4057, %v4055
        %v4196 = vpack.c.b16 %v4058, %v4056
        %v4197 = vpack.c.b16 %v4061, %v4059
        %v4198 = vpack.c.b16 %v4062, %v4060
        %v4199 = vpack.c.b16 %v4065, %v4063
        %v4200 = vpack.c.b16 %v4066, %v4064
        %v4201 = vpack.c.b16 %v4069, %v4067
        %v4202 = vpack.c.b16 %v4070, %v4068
        %v4203 = vpack.c.b16 %v4073, %v4071
        %v4204 = vpack.c.b16 %v4074, %v4072
        %v4205 = vpack.c.b16 %v4077, %v4075
        %v4206 = vpack.c.b16 %v4078, %v4076
        %4335 = vmatprep.subr.bf16.mxu0 %v4080
        %4336 = vmatpush1.bf16.msra.mxu0 %v4079
        %4337 = vmatprep.subr.bf16.mxu0 %v4082
        %4338 = vmatpush1.bf16.msra.mxu0 %v4081
        %4339 = vmatprep.subr.bf16.mxu0 %v4084
        %4340 = vmatpush1.bf16.msra.mxu0 %v4083
        %4341 = vmatprep.subr.bf16.mxu0 %v4086
        %4342 = vmatpush1.bf16.msra.mxu0 %v4085
        %4343 = vmatprep.subr.bf16.mxu0 %v4088
        %4344 = vmatpush1.bf16.msra.mxu0 %v4087
        %4345 = vmatprep.subr.bf16.mxu0 %v4090
        %4346 = vmatpush1.bf16.msra.mxu0 %v4089
        %4347 = vmatprep.subr.bf16.mxu0 %v4092
        %4348 = vmatpush1.bf16.msra.mxu0 %v4091
        %4349 = vmatprep.subr.bf16.mxu0 %v4094
        %4350 = vmatpush1.bf16.msra.mxu0 %v4093
        %4351 = vmatprep.subr.bf16.mxu0 %v4096
        %4352 = vmatpush1.bf16.msra.mxu0 %v4095
        %4353 = vmatprep.subr.bf16.mxu0 %v4098
        %4354 = vmatpush1.bf16.msra.mxu0 %v4097
        %4355 = vmatprep.subr.bf16.mxu0 %v4100
        %4356 = vmatpush1.bf16.msra.mxu0 %v4099
        %4357 = vmatprep.subr.bf16.mxu0 %v4102
        %4358 = vmatpush1.bf16.msra.mxu0 %v4101
        %4359 = vmatprep.subr.bf16.mxu0 %v4104
        %4360 = vmatpush1.bf16.msra.mxu0 %v4103
        %4361 = vmatprep.subr.bf16.mxu0 %v4106
        %4362 = vmatpush1.bf16.msra.mxu0 %v4105
        %4363 = vmatprep.subr.bf16.mxu0 %v4108
        %4364 = vmatpush1.bf16.msra.mxu0 %v4107
        %4365 = vmatprep.subr.bf16.mxu0 %v4110
        %4366 = vmatpush1.bf16.msra.mxu0 %v4109
        %4367 = vmatprep.mubr.bf16.mxu0 %v3548
        %4368 = vmatmul.mubr.bf16.gmra.mrb[0].mxu0 %v3547
        %v4369 = vpop.f32.mrb[0].mxu0
        %v4370 = vadd.f32 %v3688, %v4369
        %v4371 = vpop.f32.mrb[0].mxu0
        %v4372 = vadd.f32 %v3692, %v4371
        %v4373 = vpop.f32.mrb[0].mxu0
        %v4374 = vadd.f32 %v3688, %v4373
        %v4375 = vpop.f32.mrb[0].mxu0
        %v4376 = vadd.f32 %v3692, %v4375
        %4377 = vdwg.mxu0
        %4378 = vmatprep.subr.bf16.mxu0 %v4112
        %4379 = vmatpush1.bf16.msra.mxu0 %v4111
        %4380 = vmatprep.subr.bf16.mxu0 %v4114
        %4381 = vmatpush1.bf16.msra.mxu0 %v4113
        %4382 = vmatprep.subr.bf16.mxu0 %v4116
        %4383 = vmatpush1.bf16.msra.mxu0 %v4115
        %4384 = vmatprep.subr.bf16.mxu0 %v4118
        %4385 = vmatpush1.bf16.msra.mxu0 %v4117
        %4386 = vmatprep.subr.bf16.mxu0 %v4120
        %4387 = vmatpush1.bf16.msra.mxu0 %v4119
        %4388 = vmatprep.subr.bf16.mxu0 %v4122
        %4389 = vmatpush1.bf16.msra.mxu0 %v4121
        %4390 = vmatprep.subr.bf16.mxu0 %v4124
        %4391 = vmatpush1.bf16.msra.mxu0 %v4123
        %4392 = vmatprep.subr.bf16.mxu0 %v4126
        %4393 = vmatpush1.bf16.msra.mxu0 %v4125
        %4394 = vmatprep.subr.bf16.mxu0 %v4128
        %4395 = vmatpush1.bf16.msra.mxu0 %v4127
        %4396 = vmatprep.subr.bf16.mxu0 %v4130
        %4397 = vmatpush1.bf16.msra.mxu0 %v4129
        %4398 = vmatprep.subr.bf16.mxu0 %v4132
        %4399 = vmatpush1.bf16.msra.mxu0 %v4131
        %4400 = vmatprep.subr.bf16.mxu0 %v4134
        %4401 = vmatpush1.bf16.msra.mxu0 %v4133
        %4402 = vmatprep.subr.bf16.mxu0 %v4136
        %4403 = vmatpush1.bf16.msra.mxu0 %v4135
        %4404 = vmatprep.subr.bf16.mxu0 %v4138
        %4405 = vmatpush1.bf16.msra.mxu0 %v4137
        %4406 = vmatprep.subr.bf16.mxu0 %v4140
        %4407 = vmatpush1.bf16.msra.mxu0 %v4139
        %4408 = vmatprep.subr.bf16.mxu0 %v4142
        %4409 = vmatpush1.bf16.msra.mxu0 %v4141
        %4410 = vmatprep.mubr.bf16.mxu0 %v3550
        %4411 = vmatmul.mubr.bf16.gmra.mrb[0].mxu0 %v3549
        %v4412 = vpop.f32.mrb[0].mxu0
        %v4413 = vadd.f32 %v4370, %v4412
        %v4414 = vpop.f32.mrb[0].mxu0
        %v4415 = vadd.f32 %v4372, %v4414
        %v4416 = vpop.f32.mrb[0].mxu0
        %v4417 = vadd.f32 %v4374, %v4416
        %v4418 = vpop.f32.mrb[0].mxu0
        %v4419 = vadd.f32 %v4376, %v4418
        %4420 = vdwg.mxu0
        %4421 = vmatprep.subr.bf16.mxu0 %v4144
        %4422 = vmatpush1.bf16.msra.mxu0 %v4143
        %4423 = vmatprep.subr.bf16.mxu0 %v4146
        %4424 = vmatpush1.bf16.msra.mxu0 %v4145
        %4425 = vmatprep.subr.bf16.mxu0 %v4148
        %4426 = vmatpush1.bf16.msra.mxu0 %v4147
        %4427 = vmatprep.subr.bf16.mxu0 %v4150
        %4428 = vmatpush1.bf16.msra.mxu0 %v4149
        %4429 = vmatprep.subr.bf16.mxu0 %v4152
        %4430 = vmatpush1.bf16.msra.mxu0 %v4151
        %4431 = vmatprep.subr.bf16.mxu0 %v4154
        %4432 = vmatpush1.bf16.msra.mxu0 %v4153
        %4433 = vmatprep.subr.bf16.mxu0 %v4156
        %4434 = vmatpush1.bf16.msra.mxu0 %v4155
        %4435 = vmatprep.subr.bf16.mxu0 %v4158
        %4436 = vmatpush1.bf16.msra.mxu0 %v4157
        %4437 = vmatprep.subr.bf16.mxu0 %v4160
        %4438 = vmatpush1.bf16.msra.mxu0 %v4159
        %4439 = vmatprep.subr.bf16.mxu0 %v4162
        %4440 = vmatpush1.bf16.msra.mxu0 %v4161
        %4441 = vmatprep.subr.bf16.mxu0 %v4164
        %4442 = vmatpush1.bf16.msra.mxu0 %v4163
        %4443 = vmatprep.subr.bf16.mxu0 %v4166
        %4444 = vmatpush1.bf16.msra.mxu0 %v4165
        %4445 = vmatprep.subr.bf16.mxu0 %v4168
        %4446 = vmatpush1.bf16.msra.mxu0 %v4167
        %4447 = vmatprep.subr.bf16.mxu0 %v4170
        %4448 = vmatpush1.bf16.msra.mxu0 %v4169
        %4449 = vmatprep.subr.bf16.mxu0 %v4172
        %4450 = vmatpush1.bf16.msra.mxu0 %v4171
        %4451 = vmatprep.subr.bf16.mxu0 %v4174
        %4452 = vmatpush1.bf16.msra.mxu0 %v4173
        %4453 = vmatprep.mubr.bf16.mxu0 %v3552
        %4454 = vmatmul.mubr.bf16.gmra.mrb[0].mxu0 %v3551
        %v4455 = vpop.f32.mrb[0].mxu0
        %v4456 = vadd.f32 %v4413, %v4455
        %v4457 = vpop.f32.mrb[0].mxu0
        %v4458 = vadd.f32 %v4415, %v4457
        %v4459 = vpop.f32.mrb[0].mxu0
        %v4460 = vadd.f32 %v4417, %v4459
        %v4461 = vpop.f32.mrb[0].mxu0
        %v4462 = vadd.f32 %v4419, %v4461
        %4463 = vdwg.mxu0
        %4464 = vmatprep.subr.bf16.mxu0 %v4176
        %4465 = vmatpush1.bf16.msra.mxu0 %v4175
        %4466 = vmatprep.subr.bf16.mxu0 %v4178
        %4467 = vmatpush1.bf16.msra.mxu0 %v4177
        %4468 = vmatprep.subr.bf16.mxu0 %v4180
        %4469 = vmatpush1.bf16.msra.mxu0 %v4179
        %4470 = vmatprep.subr.bf16.mxu0 %v4182
        %4471 = vmatpush1.bf16.msra.mxu0 %v4181
        %4472 = vmatprep.subr.bf16.mxu0 %v4184
        %4473 = vmatpush1.bf16.msra.mxu0 %v4183
        %4474 = vmatprep.subr.bf16.mxu0 %v4186
        %4475 = vmatpush1.bf16.msra.mxu0 %v4185
        %4476 = vmatprep.subr.bf16.mxu0 %v4188
        %4477 = vmatpush1.bf16.msra.mxu0 %v4187
        %4478 = vmatprep.subr.bf16.mxu0 %v4190
        %4479 = vmatpush1.bf16.msra.mxu0 %v4189
        %4480 = vmatprep.subr.bf16.mxu0 %v4192
        %4481 = vmatpush1.bf16.msra.mxu0 %v4191
        %4482 = vmatprep.subr.bf16.mxu0 %v4194
        %4483 = vmatpush1.bf16.msra.mxu0 %v4193
        %4484 = vmatprep.subr.bf16.mxu0 %v4196
        %4485 = vmatpush1.bf16.msra.mxu0 %v4195
        %4486 = vmatprep.subr.bf16.mxu0 %v4198
        %4487 = vmatpush1.bf16.msra.mxu0 %v4197
        %4488 = vmatprep.subr.bf16.mxu0 %v4200
        %4489 = vmatpush1.bf16.msra.mxu0 %v4199
        %4490 = vmatprep.subr.bf16.mxu0 %v4202
        %4491 = vmatpush1.bf16.msra.mxu0 %v4201
        %4492 = vmatprep.subr.bf16.mxu0 %v4204
        %4493 = vmatpush1.bf16.msra.mxu0 %v4203
        %4494 = vmatprep.subr.bf16.mxu0 %v4206
        %4495 = vmatpush1.bf16.msra.mxu0 %v4205
        %4496 = vmatprep.mubr.bf16.mxu0 %v3554
        %4497 = vmatmul.mubr.bf16.gmra.mrb[0].mxu0 %v3553
        %v4498 = vpop.f32.mrb[0].mxu0
        %v4499 = vadd.f32 %v4456, %v4498
        %v4500 = vpop.f32.mrb[0].mxu0
        %v4501 = vadd.f32 %v4458, %v4500
        %v4502 = vpop.f32.mrb[0].mxu0
        %v4503 = vadd.f32 %v4460, %v4502
        %v4504 = vpop.f32.mrb[0].mxu0
        %v4505 = vadd.f32 %v4462, %v4504
        %4506 = vdwg.mxu0
        %v4507 = vadd.f32 %v2543, %v4499
        %v4508 = vadd.f32 %v2544, %v4501
        %v4509 = vadd.f32 %v2545, %v4503
        %v4510 = vadd.f32 %v2546, %v4505
        %v4511 = vld [vmem:[%s11] sm:$0x3]
        %v4512 = vld [vmem:[%s12] sm:$0x3]
        %v4513 = vadd.f32 %v4507, %v4508
        %4514 = vadd.xlane.f32.xlu0 %v4513
        %v4515 = vpop.xlane.xlu0 %4514
        %v4516 = vadd.f32 %v4509, %v4510
        %4517 = vadd.xlane.f32.xlu0 %v4516
        %v4518 = vpop.xlane.xlu0 %4517
        %v4519 = vmul.f32 %v4515, %v2490
        %v4520 = vmul.f32 %v4518, %v2490
        %v4521 = vsub.f32 %v4507, %v4519
        %v4522 = vsub.f32 %v4508, %v4519
        %v4523 = vsub.f32 %v4509, %v4520
        %v4524 = vsub.f32 %v4510, %v4520
        %v4525 = vmul.f32 %v4521, %v4521
        %v4526 = vmul.f32 %v4522, %v4522
        %v4527 = vmul.f32 %v4523, %v4523
        %v4528 = vmul.f32 %v4524, %v4524
        %v4529 = vadd.f32 %v4525, %v4526
        %4530 = vadd.xlane.f32.xlu0 %v4529
        %v4531 = vpop.xlane.xlu0 %4530
        %v4532 = vadd.f32 %v4527, %v4528
        %4533 = vadd.xlane.f32.xlu0 %v4532
        %v4534 = vpop.xlane.xlu0 %4533
        %v4535 = vmul.f32 %v4531, %v2490
        %v4536 = vmul.f32 %v4534, %v2490
        %v4537 = vadd.f32 %v4535, 1e-05
        %v4538 = vadd.f32 %v4536, 1e-05
        %v4539 = vrsqrt.pop %v4537
        %v4540 = vrsqrt.pop %v4538
        %v4541 = vmul.f32 %v4521, %v4539
        %v4542 = vmul.f32 %v4522, %v4539
        %v4543 = vmul.f32 %v4523, %v4540
        %v4544 = vmul.f32 %v4524, %v4540
        %v4546 = vlaneseq
        %v4547 = vshrl.u32 %v4546, 7
        %v4548 = vsub.s32 0, %v4547
        %v4549 = vrot.slane %v4511, %v4548
        %v4550 = vlaneseq
        %v4551 = vshrl.u32 %v4550, 7
        %v4552 = vsub.s32 1, %v4551
        %v4553 = vrot.slane %v4511, %v4552
        %v4556 = vmul.f32 %v4541, %v4549
        %v4557 = vmul.f32 %v4542, %v4553
        %v4558 = vmul.f32 %v4543, %v4549
        %v4559 = vmul.f32 %v4544, %v4553
        %v4561 = vlaneseq
        %v4562 = vshrl.u32 %v4561, 7
        %v4563 = vsub.s32 0, %v4562
        %v4564 = vrot.slane %v4512, %v4563
        %v4565 = vlaneseq
        %v4566 = vshrl.u32 %v4565, 7
        %v4567 = vsub.s32 1, %v4566
        %v4568 = vrot.slane %v4512, %v4567
        %v4571 = vadd.f32 %v4556, %v4564
        %v4572 = vadd.f32 %v4557, %v4568
        %v4573 = vadd.f32 %v4558, %v4564
        %v4574 = vadd.f32 %v4559, %v4568
        %4575 = vst [vmem:[%s433] sm:$0xff] %v4571
        %4576 = vst [vmem:[%s433 + $0x8] sm:$0xff] %v4572
        %4577 = vst [vmem:[%s433 + $0x10] sm:$0xff] %v4573
        %4578 = vst [vmem:[%s433 + $0x18] sm:$0xff] %v4574
        %s4579 = sand.u32 %s313, 1
        %s4580 = scalar_lea.sflag [#allocation3], %s4579
        %s4581 = sand.u32 %s313, 1
        %s4582 = smul.addr %s4581, 32
        %s4583 = scalar_lea.vmem [#allocation2], %s4582
        // Predicated region
        $region73: #{transformer_block.1} parent=71 // pred_check
          %p4584 = pneg %p323
        $region74: #{transformer_block.1} parent=71 // pred_check_branch
          %4586 = sbr.rel (%p4584) target = $region76
        $region75: #{transformer_block.1} parent=71 // pred_region
          %s4588 = ssub.s32 512, 512
          %4589 = vsyncadd %s4580, %s4588
          %s4590 = smul.addr %s27, 4
          %s4591 = smul.addr %s4590, 128
          %s4592 = scalar_lea.hbm %s13, %s4591
          %s4593 = sshll.u32 %s4583, 4
          %s4594 = int_to_ptr.vmem [resolvable:$true] %s4593
          %4599 = dma.vmem_to_hbm [thread:$0]  %s4594, 512, %s4592, %s4580, 256, 256, 16
        $region76: #{transformer_block.1} parent=71 // pred_fallthru
          _
      $region72: #{transformer_block.1} parent=5 // pred_fallthru
        _
      %p4600 = scmp.le.s32.totalorder 2, %s22
      // Predicated region
      $region77: #{transformer_block.1} parent=5 // pred_check
        %p4601 = pneg %p4600
      $region78: #{transformer_block.1} parent=5 // pred_check_branch
        %4603 = sbr.rel (%p4601) target = $region80
      $region79: #{transformer_block.1} parent=5 // pred_region
        %s4604 = ssub.s32 %s22, 2
        // Predicated region
        $region81: #{transformer_block.1} parent=79 // pred_check
          %p4605 = pneg %p329
        $region82: #{transformer_block.1} parent=79 // pred_check_branch
          %4607 = sbr.rel (%p4605) target = $region84
        $region83: #{transformer_block.1} parent=79 // pred_region
          %s4608 = sand.u32 %s314, 1
          %s4609 = scalar_lea.sflag [#allocation3], %s4608
          %s4610 = sand.u32 %s314, 1
          %s4611 = smul.addr %s4610, 32
          %s4612 = scalar_lea.vmem [#allocation2], %s4611
          %4613 = dma.done %s4609, 512
        $region84: #{transformer_block.1} parent=79 // pred_fallthru
          _
      $region80: #{transformer_block.1} parent=5 // pred_fallthru
        _
    $region6: #{transformer_block.1} parent=1 // loop_footer
      %s26 = sadd.s32 1, %s22
    $region7: #{transformer_block.1} parent=1 // loop_footer_branch
      %21 = sbr.rel target = $region3
    $region8: #{transformer_block.1} parent=1 // loop_exit
      _
    %4614 = vsyncpa [#allocation3], 1
    %s4615 = scalar_lea.sflag [#allocation3], 1
    %4616 = vsyncpa %s4615, 1

</llo_original>
